<compile_context>
chip_gen: v7x
topology: tpu7x:2x2x1
jax: 0.10.0
libtpu: 0.0.40
codegen_flags: <defaults>
</compile_context>

<pallas_src>
import jax
import jax.numpy as jnp
from jax import lax
from jax.experimental import pallas as pl
from jax.experimental.pallas import tpu as pltpu  # noqa: F401  (TPU backend)

# ----------------------------- model config (small, synthetic) ----------------
VOCAB = 100
MAX_POS = 64
HIDDEN = 32
N_HEADS = 4
N_LAYERS = 2
FFN_DIM = 4 * HIDDEN          # 128
MLP_HIDDEN = 128
N_LABELS = 5
HEAD_PAD = 128                # lane-dense padded label dim (sliced to 5 outside)
LN_EPS = 1e-12


# ----------------------------- fused kernel ------------------------------------
def fused_forward_kernel(word_ref, pos_ref, mask_ref,
                         eg_ref, eb_ref,
                         wqkv_ref, bqkv_ref, wo_ref, bo_ref,
                         ln1g_ref, ln1b_ref,
                         wff1_ref, bff1_ref, wff2_ref, bff2_ref,
                         ln2g_ref, ln2b_ref,
                         w1_ref, b1_ref, w2_ref, b2_ref,
                         o_ref):
    """Entire BertMultiLabelCls forward for one (small) batch, VMEM-resident."""
    B = mask_ref.shape[0]
    S = mask_ref.shape[2]
    H = word_ref.shape[1]
    NH = N_HEADS
    dh = H // NH
    scale = 1.0 / jnp.sqrt(jnp.float32(dh))

    def layer_norm(x, g, b):                       # stats kept in f32
        mu = jnp.mean(x, axis=-1, keepdims=True)
        var = jnp.mean((x - mu) ** 2, axis=-1, keepdims=True)
        return (x - mu) * lax.rsqrt(var + LN_EPS) * g + b

    def heads_to_batch(t):                         # (B*S, H) -> (NH*B, S, dh), head-major
        return jnp.concatenate(
            [t[:, h * dh:(h + 1) * dh].reshape(B, S, dh) for h in range(NH)],
            axis=0)

    # ---- embeddings: word + position, then LayerNorm --------------------------
    x = word_ref[...].astype(jnp.float32) + pos_ref[...].astype(jnp.float32)  # (B*S, H)
    x = layer_norm(x, eg_ref[...], eb_ref[...])

    # additive padding bias, shared across heads / query positions
    bias = (1.0 - mask_ref[...].astype(jnp.float32)) * -1e9                   # (B, 1, S)
    bias = jnp.concatenate([bias] * NH, axis=0)                               # (NH*B, 1, S)

    for l in range(N_LAYERS):          # static unroll; weights already in VMEM
        # ---- multi-head self-attention (fused QKV, heads collapsed) -----------
        qkv = jnp.dot(x, wqkv_ref[l], preferred_element_type=jnp.float32) + bqkv_ref[l]
        q, k, v = qkv[:, :H], qkv[:, H:2 * H], qkv[:, 2 * H:]

        qh, kh, vh = heads_to_batch(q), heads_to_batch(k), heads_to_batch(v)
        s = jnp.einsum("bqd,bkd->bqk", qh, kh,
                       preferred_element_type=jnp.float32) * scale + bias     # (NH*B,S,S)
        p = jax.nn.softmax(s, axis=-1)
        ctx = jnp.einsum("bqk,bkd->bqd", p, vh,
                         preferred_element_type=jnp.float32)                  # (NH*B,S,dh)
        ctx = jnp.concatenate(
            [ctx[h * B:(h + 1) * B].reshape(B * S, dh) for h in range(NH)],
            axis=-1)                                                          # (B*S, H)
        attn = jnp.dot(ctx, wo_ref[l], preferred_element_type=jnp.float32) + bo_ref[l]
        x = layer_norm(attn + x, ln1g_ref[l], ln1b_ref[l])

        # ---- feed-forward (fused with residual + LN) ---------------------------
        h1 = jnp.dot(x, wff1_ref[l], preferred_element_type=jnp.float32) + bff1_ref[l]
        # TODO(synk): DistilBERT uses exact erf-GELU; tanh approximation kept here for
        # robust Mosaic lowering (difference ~1e-3 on these magnitudes).
        h1 = jax.nn.gelu(h1)
        h2 = jnp.dot(h1, wff2_ref[l], preferred_element_type=jnp.float32) + bff2_ref[l]
        x = layer_norm(h2 + x, ln2g_ref[l], ln2b_ref[l])

    # ---- mean-pool over sequence (all positions, as torch.mean) + MLP head ----
    # TODO(synk): nn.Dropout is identity in eval mode; no kernel emitted for it.
    pooled = jnp.mean(x.reshape(B, S, H), axis=1)                             # (B, H)
    z = jnp.dot(pooled, w1_ref[...], preferred_element_type=jnp.float32) + b1_ref[...]
    z = jnp.maximum(z, 0.0)
    z = jnp.dot(z, w2_ref[...], preferred_element_type=jnp.float32) + b2_ref[...]
    o_ref[...] = jnp.maximum(z, 0.0).astype(o_ref.dtype)      # lane-dense (B, 128)


# ----------------------------- forward wrapper ----------------------------------
def bert_multilabel_cls_forward(params, input_ids, attention_mask):
    B, S = input_ids.shape
    H = HIDDEN

    # Embedding gather + position broadcast are cheap glue in plain JAX.
    word_e = params["word_emb"][input_ids].reshape(B * S, H)
    pos_e = jnp.broadcast_to(params["pos_emb"][:S][None], (B, S, H)).reshape(B * S, H)
    mask = attention_mask.astype(jnp.float32).reshape(B, 1, S)

    out_padded = pl.pallas_call(
        fused_forward_kernel,
        out_shape=jax.ShapeDtypeStruct((B, HEAD_PAD), jnp.float32),
    )(word_e, pos_e, mask,
      params["emb_ln_g"], params["emb_ln_b"],
      params["wqkv"], params["bqkv"], params["wo"], params["bo"],
      params["ln1_g"], params["ln1_b"],
      params["w_ff1"], params["b_ff1"], params["w_ff2"], params["b_ff2"],
      params["ln2_g"], params["ln2_b"],
      params["mlp_w1"], params["mlp_b1"], params["mlp_w2p"], params["mlp_b2p"])

    return out_padded[:, :N_LABELS]


# ----------------------------- parameters ---------------------------------------
def init_params(key):
    keys = iter(jax.random.split(key, 64))

    def normal(shape, std=0.02):
        return (std * jax.random.normal(next(keys), shape)).astype(jnp.float32)

    L, H, F = N_LAYERS, HIDDEN, FFN_DIM
    w2 = normal((MLP_HIDDEN, N_LABELS), std=0.01)       # classifier, std=0.01 as in spec

    return {
        "word_emb": normal((VOCAB, H)),
        "pos_emb": normal((MAX_POS, H)),
        "emb_ln_g": jnp.ones((1, H), jnp.float32),
        "emb_ln_b": jnp.zeros((1, H), jnp.float32),
        # encoder layers stacked along a leading layer axis (indexed statically in-kernel)
        "wqkv": normal((L, H, 3 * H)),                   # fused Q|K|V projection
        "bqkv": jnp.zeros((L, 1, 3 * H), jnp.float32),
        "wo": normal((L, H, H)),
        "bo": jnp.zeros((L, 1, H), jnp.float32),
        "ln1_g": jnp.ones((L, 1, H), jnp.float32),
        "ln1_b": jnp.zeros((L, 1, H), jnp.float32),
        "w_ff1": normal((L, H, F)),
        "b_ff1": jnp.zeros((L, 1, F), jnp.float32),
        "w_ff2": normal((L, F, H)),
        "b_ff2": jnp.zeros((L, 1, H), jnp.float32),
        "ln2_g": jnp.ones((L, 1, H), jnp.float32),
        "ln2_b": jnp.zeros((L, 1, H), jnp.float32),
        # MLP head (init.normal_(std=0.01)); classifier padded 5 -> 128 so the final
        # store is lane-dense; sliced back to 5 labels in the wrapper.
        "mlp_w1": normal((H, MLP_HIDDEN), std=0.01),
        "mlp_b1": jnp.zeros((1, MLP_HIDDEN), jnp.float32),
        "mlp_w2p": jnp.pad(w2, ((0, 0), (0, HEAD_PAD - N_LABELS))),
        "mlp_b2p": jnp.zeros((1, HEAD_PAD), jnp.float32),
    }


# ----------------------------- main ----------------------------------------------
if __name__ == "__main__":
    key = jax.random.PRNGKey(0)
    pkey, dkey = jax.random.split(key)
    params = init_params(pkey)

    B, S = 2, 8
    input_ids = jax.random.randint(dkey, (B, S), 0, VOCAB, dtype=jnp.int32)
    attention_mask = jnp.array([[1, 1, 1, 1, 1, 1, 1, 1],
                                [1, 1, 1, 1, 1, 0, 0, 0]], dtype=jnp.int32)

    fwd = jax.jit(bert_multilabel_cls_forward)
    out = fwd(params, input_ids, attention_mask)
    out = jax.block_until_ready(out)

    assert out.shape == (B, N_LABELS)
    assert out.dtype == jnp.float32
    assert bool(jnp.all(out >= 0.0))          # final F.relu
    print("KERNEL_OK")
</pallas_src>

<mosaic_0001>
module attributes {stable_mosaic.version = 11 : i64} {
  func.func @fused_forward_kernel(%arg0: memref<16x32xf32, #tpu.memory_space<vmem>>, %arg1: memref<16x32xf32, #tpu.memory_space<vmem>>, %arg2: memref<2x1x8xf32, #tpu.memory_space<vmem>>, %arg3: memref<1x32xf32, #tpu.memory_space<vmem>>, %arg4: memref<1x32xf32, #tpu.memory_space<vmem>>, %arg5: memref<2x32x96xf32, #tpu.memory_space<vmem>>, %arg6: memref<2x1x96xf32, #tpu.memory_space<vmem>>, %arg7: memref<2x32x32xf32, #tpu.memory_space<vmem>>, %arg8: memref<2x1x32xf32, #tpu.memory_space<vmem>>, %arg9: memref<2x1x32xf32, #tpu.memory_space<vmem>>, %arg10: memref<2x1x32xf32, #tpu.memory_space<vmem>>, %arg11: memref<2x32x128xf32, #tpu.memory_space<vmem>>, %arg12: memref<2x1x128xf32, #tpu.memory_space<vmem>>, %arg13: memref<2x128x32xf32, #tpu.memory_space<vmem>>, %arg14: memref<2x1x32xf32, #tpu.memory_space<vmem>>, %arg15: memref<2x1x32xf32, #tpu.memory_space<vmem>>, %arg16: memref<2x1x32xf32, #tpu.memory_space<vmem>>, %arg17: memref<32x128xf32, #tpu.memory_space<vmem>>, %arg18: memref<1x128xf32, #tpu.memory_space<vmem>>, %arg19: memref<128x128xf32, #tpu.memory_space<vmem>>, %arg20: memref<1x128xf32, #tpu.memory_space<vmem>>, %arg21: memref<2x128xf32, #tpu.memory_space<vmem>>) attributes {dimension_semantics = [], scalar_prefetch = 0 : i64, scratch_operands = 0 : i64, tpu.core_type = #tpu.core_type<tc>} {
    %cst = arith.constant 8.000000e+00 : f32
    %0 = math.sqrt %cst : f32
    %cst_0 = arith.constant 1.000000e+00 : f32
    %1 = arith.divf %cst_0, %0 : f32
    %c0 = arith.constant 0 : index
    %c0_1 = arith.constant 0 : index
    %2 = vector.load %arg0[%c0, %c0_1] : memref<16x32xf32, #tpu.memory_space<vmem>>, vector<16x32xf32>
    %c0_2 = arith.constant 0 : index
    %c0_3 = arith.constant 0 : index
    %3 = vector.load %arg1[%c0_2, %c0_3] : memref<16x32xf32, #tpu.memory_space<vmem>>, vector<16x32xf32>
    %4 = arith.addf %2, %3 : vector<16x32xf32>
    %c0_4 = arith.constant 0 : index
    %c0_5 = arith.constant 0 : index
    %5 = vector.load %arg3[%c0_4, %c0_5] : memref<1x32xf32, #tpu.memory_space<vmem>>, vector<1x32xf32>
    %c0_6 = arith.constant 0 : index
    %c0_7 = arith.constant 0 : index
    %6 = vector.load %arg4[%c0_6, %c0_7] : memref<1x32xf32, #tpu.memory_space<vmem>>, vector<1x32xf32>
    %cst_8 = arith.constant dense<0.000000e+00> : vector<16xf32>
    %7 = vector.multi_reduction <add>, %4, %cst_8 [1] : vector<16x32xf32> to vector<16xf32>
    %8 = vector.shape_cast %7 : vector<16xf32> to vector<16x1xf32>
    %cst_9 = arith.constant 3.200000e+01 : f32
    %9 = vector.broadcast %cst_9 : f32 to vector<16x1xf32>
    %10 = arith.divf %8, %9 : vector<16x1xf32>
    %11 = vector.broadcast %10 : vector<16x1xf32> to vector<16x32xf32>
    %12 = arith.subf %4, %11 : vector<16x32xf32>
    %13 = arith.mulf %12, %12 : vector<16x32xf32>
    %cst_10 = arith.constant dense<0.000000e+00> : vector<16xf32>
    %14 = vector.multi_reduction <add>, %13, %cst_10 [1] : vector<16x32xf32> to vector<16xf32>
    %15 = vector.shape_cast %14 : vector<16xf32> to vector<16x1xf32>
    %cst_11 = arith.constant 3.200000e+01 : f32
    %16 = vector.broadcast %cst_11 : f32 to vector<16x1xf32>
    %17 = arith.divf %15, %16 : vector<16x1xf32>
    %18 = vector.broadcast %10 : vector<16x1xf32> to vector<16x32xf32>
    %19 = arith.subf %4, %18 : vector<16x32xf32>
    %cst_12 = arith.constant 9.99999996E-13 : f32
    %20 = vector.broadcast %cst_12 : f32 to vector<16x1xf32>
    %21 = arith.addf %17, %20 : vector<16x1xf32>
    %22 = math.rsqrt %21 : vector<16x1xf32>
    %23 = vector.broadcast %22 : vector<16x1xf32> to vector<16x32xf32>
    %24 = arith.mulf %19, %23 : vector<16x32xf32>
    %25 = vector.broadcast %5 : vector<1x32xf32> to vector<16x32xf32>
    %26 = arith.mulf %24, %25 : vector<16x32xf32>
    %27 = vector.broadcast %6 : vector<1x32xf32> to vector<16x32xf32>
    %28 = arith.addf %26, %27 : vector<16x32xf32>
    %c0_13 = arith.constant 0 : index
    %c0_14 = arith.constant 0 : index
    %c0_15 = arith.constant 0 : index
    %29 = vector.load %arg2[%c0_13, %c0_14, %c0_15] : memref<2x1x8xf32, #tpu.memory_space<vmem>>, vector<2x1x8xf32>
    %cst_16 = arith.constant 1.000000e+00 : f32
    %30 = vector.broadcast %cst_16 : f32 to vector<2x1x8xf32>
    %31 = arith.subf %30, %29 : vector<2x1x8xf32>
    %cst_17 = arith.constant -1.000000e+09 : f32
    %32 = vector.broadcast %cst_17 : f32 to vector<2x1x8xf32>
    %33 = arith.mulf %31, %32 : vector<2x1x8xf32>
    %34 = tpu.concatenate %33, %33, %33, %33 in 0 : vector<2x1x8xf32>, vector<2x1x8xf32>, vector<2x1x8xf32>, vector<2x1x8xf32> -> vector<8x1x8xf32>
    %c0_18 = arith.constant 0 : index
    %c0_19 = arith.constant 0 : index
    %c0_20 = arith.constant 0 : index
    %35 = vector.load %arg5[%c0_18, %c0_19, %c0_20] : memref<2x32x96xf32, #tpu.memory_space<vmem>>, vector<1x32x96xf32>
    %36 = vector.shape_cast %35 : vector<1x32x96xf32> to vector<32x96xf32>
    %cst_21 = arith.constant dense<0.000000e+00> : vector<16x96xf32>
    %37 = tpu.matmul %28, %36, %cst_21 {dimension_numbers = #tpu.dot_dimension_numbers<[1], [0], [0], [1], [0, 0, 1, 1], [], []>} : vector<16x32xf32>, vector<32x96xf32>, vector<16x96xf32> -> vector<16x96xf32>
    %c0_22 = arith.constant 0 : index
    %c0_23 = arith.constant 0 : index
    %c0_24 = arith.constant 0 : index
    %38 = vector.load %arg6[%c0_22, %c0_23, %c0_24] : memref<2x1x96xf32, #tpu.memory_space<vmem>>, vector<1x1x96xf32>
    %39 = vector.shape_cast %38 : vector<1x1x96xf32> to vector<1x96xf32>
    %40 = vector.broadcast %39 : vector<1x96xf32> to vector<16x96xf32>
    %41 = arith.addf %37, %40 : vector<16x96xf32>
    %42 = vector.extract_strided_slice %41 {offsets = [0, 0], sizes = [16, 32], strides = [1, 1]} : vector<16x96xf32> to vector<16x32xf32>
    %43 = vector.extract_strided_slice %41 {offsets = [0, 32], sizes = [16, 32], strides = [1, 1]} : vector<16x96xf32> to vector<16x32xf32>
    %44 = vector.extract_strided_slice %41 {offsets = [0, 64], sizes = [16, 32], strides = [1, 1]} : vector<16x96xf32> to vector<16x32xf32>
    %45 = vector.extract_strided_slice %42 {offsets = [0, 0], sizes = [16, 8], strides = [1, 1]} : vector<16x32xf32> to vector<16x8xf32>
    %46 = vector.shape_cast %45 : vector<16x8xf32> to vector<2x8x8xf32>
    %47 = vector.extract_strided_slice %42 {offsets = [0, 8], sizes = [16, 8], strides = [1, 1]} : vector<16x32xf32> to vector<16x8xf32>
    %48 = vector.shape_cast %47 : vector<16x8xf32> to vector<2x8x8xf32>
    %49 = vector.extract_strided_slice %42 {offsets = [0, 16], sizes = [16, 8], strides = [1, 1]} : vector<16x32xf32> to vector<16x8xf32>
    %50 = vector.shape_cast %49 : vector<16x8xf32> to vector<2x8x8xf32>
    %51 = vector.extract_strided_slice %42 {offsets = [0, 24], sizes = [16, 8], strides = [1, 1]} : vector<16x32xf32> to vector<16x8xf32>
    %52 = vector.shape_cast %51 : vector<16x8xf32> to vector<2x8x8xf32>
    %53 = tpu.concatenate %46, %48, %50, %52 in 0 : vector<2x8x8xf32>, vector<2x8x8xf32>, vector<2x8x8xf32>, vector<2x8x8xf32> -> vector<8x8x8xf32>
    %54 = vector.extract_strided_slice %43 {offsets = [0, 0], sizes = [16, 8], strides = [1, 1]} : vector<16x32xf32> to vector<16x8xf32>
    %55 = vector.shape_cast %54 : vector<16x8xf32> to vector<2x8x8xf32>
    %56 = vector.extract_strided_slice %43 {offsets = [0, 8], sizes = [16, 8], strides = [1, 1]} : vector<16x32xf32> to vector<16x8xf32>
    %57 = vector.shape_cast %56 : vector<16x8xf32> to vector<2x8x8xf32>
    %58 = vector.extract_strided_slice %43 {offsets = [0, 16], sizes = [16, 8], strides = [1, 1]} : vector<16x32xf32> to vector<16x8xf32>
    %59 = vector.shape_cast %58 : vector<16x8xf32> to vector<2x8x8xf32>
    %60 = vector.extract_strided_slice %43 {offsets = [0, 24], sizes = [16, 8], strides = [1, 1]} : vector<16x32xf32> to vector<16x8xf32>
    %61 = vector.shape_cast %60 : vector<16x8xf32> to vector<2x8x8xf32>
    %62 = tpu.concatenate %55, %57, %59, %61 in 0 : vector<2x8x8xf32>, vector<2x8x8xf32>, vector<2x8x8xf32>, vector<2x8x8xf32> -> vector<8x8x8xf32>
    %63 = vector.extract_strided_slice %44 {offsets = [0, 0], sizes = [16, 8], strides = [1, 1]} : vector<16x32xf32> to vector<16x8xf32>
    %64 = vector.shape_cast %63 : vector<16x8xf32> to vector<2x8x8xf32>
    %65 = vector.extract_strided_slice %44 {offsets = [0, 8], sizes = [16, 8], strides = [1, 1]} : vector<16x32xf32> to vector<16x8xf32>
    %66 = vector.shape_cast %65 : vector<16x8xf32> to vector<2x8x8xf32>
    %67 = vector.extract_strided_slice %44 {offsets = [0, 16], sizes = [16, 8], strides = [1, 1]} : vector<16x32xf32> to vector<16x8xf32>
    %68 = vector.shape_cast %67 : vector<16x8xf32> to vector<2x8x8xf32>
    %69 = vector.extract_strided_slice %44 {offsets = [0, 24], sizes = [16, 8], strides = [1, 1]} : vector<16x32xf32> to vector<16x8xf32>
    %70 = vector.shape_cast %69 : vector<16x8xf32> to vector<2x8x8xf32>
    %71 = tpu.concatenate %64, %66, %68, %70 in 0 : vector<2x8x8xf32>, vector<2x8x8xf32>, vector<2x8x8xf32>, vector<2x8x8xf32> -> vector<8x8x8xf32>
    "tpu.trace_start"() <{level = 10 : i32, message = "bqd,bkd->bqk"}> : () -> ()
    %cst_25 = arith.constant dense<0.000000e+00> : vector<8x8x8xf32>
    %72 = tpu.matmul %53, %62, %cst_25 {dimension_numbers = #tpu.dot_dimension_numbers<[2], [2], [1], [1], [0, 0, 0, 1, 1, 1], [0], [0]>} : vector<8x8x8xf32>, vector<8x8x8xf32>, vector<8x8x8xf32> -> vector<8x8x8xf32>
    "tpu.trace_stop"() : () -> ()
    %73 = vector.broadcast %1 : f32 to vector<8x8x8xf32>
    %74 = arith.mulf %72, %73 : vector<8x8x8xf32>
    %75 = vector.broadcast %34 : vector<8x1x8xf32> to vector<8x8x8xf32>
    %76 = arith.addf %74, %75 : vector<8x8x8xf32>
    %cst_26 = arith.constant dense<0xFF800000> : vector<8x8xf32>
    %77 = vector.multi_reduction <maximumf>, %76, %cst_26 [2] : vector<8x8x8xf32> to vector<8x8xf32>
    %cst_27 = arith.constant 0xFF800000 : f32
    %78 = vector.broadcast %cst_27 : f32 to vector<8x8xf32>
    %79 = arith.maximumf %78, %77 : vector<8x8xf32>
    %80 = vector.shape_cast %79 : vector<8x8xf32> to vector<8x8x1xf32>
    %81 = vector.broadcast %80 : vector<8x8x1xf32> to vector<8x8x8xf32>
    %82 = arith.subf %76, %81 : vector<8x8x8xf32>
    %83 = math.exp %82 : vector<8x8x8xf32>
    %cst_28 = arith.constant dense<0.000000e+00> : vector<8x8xf32>
    %84 = vector.multi_reduction <add>, %83, %cst_28 [2] : vector<8x8x8xf32> to vector<8x8xf32>
    %85 = vector.shape_cast %84 : vector<8x8xf32> to vector<8x8x1xf32>
    %86 = vector.broadcast %85 : vector<8x8x1xf32> to vector<8x8x8xf32>
    %87 = arith.divf %83, %86 : vector<8x8x8xf32>
    "tpu.trace_start"() <{level = 10 : i32, message = "bqk,bkd->bqd"}> : () -> ()
    %cst_29 = arith.constant dense<0.000000e+00> : vector<8x8x8xf32>
    %88 = tpu.matmul %87, %71, %cst_29 {dimension_numbers = #tpu.dot_dimension_numbers<[2], [1], [1], [2], [0, 0, 0, 1, 1, 2], [0], [0]>} : vector<8x8x8xf32>, vector<8x8x8xf32>, vector<8x8x8xf32> -> vector<8x8x8xf32>
    "tpu.trace_stop"() : () -> ()
    %89 = vector.extract_strided_slice %88 {offsets = [0, 0, 0], sizes = [2, 8, 8], strides = [1, 1, 1]} : vector<8x8x8xf32> to vector<2x8x8xf32>
    %90 = vector.shape_cast %89 : vector<2x8x8xf32> to vector<16x8xf32>
    %91 = vector.extract_strided_slice %88 {offsets = [2, 0, 0], sizes = [2, 8, 8], strides = [1, 1, 1]} : vector<8x8x8xf32> to vector<2x8x8xf32>
    %92 = vector.shape_cast %91 : vector<2x8x8xf32> to vector<16x8xf32>
    %93 = vector.extract_strided_slice %88 {offsets = [4, 0, 0], sizes = [2, 8, 8], strides = [1, 1, 1]} : vector<8x8x8xf32> to vector<2x8x8xf32>
    %94 = vector.shape_cast %93 : vector<2x8x8xf32> to vector<16x8xf32>
    %95 = vector.extract_strided_slice %88 {offsets = [6, 0, 0], sizes = [2, 8, 8], strides = [1, 1, 1]} : vector<8x8x8xf32> to vector<2x8x8xf32>
    %96 = vector.shape_cast %95 : vector<2x8x8xf32> to vector<16x8xf32>
    %97 = tpu.concatenate %90, %92, %94, %96 in 1 : vector<16x8xf32>, vector<16x8xf32>, vector<16x8xf32>, vector<16x8xf32> -> vector<16x32xf32>
    %c0_30 = arith.constant 0 : index
    %c0_31 = arith.constant 0 : index
    %c0_32 = arith.constant 0 : index
    %98 = vector.load %arg7[%c0_30, %c0_31, %c0_32] : memref<2x32x32xf32, #tpu.memory_space<vmem>>, vector<1x32x32xf32>
    %99 = vector.shape_cast %98 : vector<1x32x32xf32> to vector<32x32xf32>
    %cst_33 = arith.constant dense<0.000000e+00> : vector<16x32xf32>
    %100 = tpu.matmul %97, %99, %cst_33 {dimension_numbers = #tpu.dot_dimension_numbers<[1], [0], [0], [1], [0, 0, 1, 1], [], []>} : vector<16x32xf32>, vector<32x32xf32>, vector<16x32xf32> -> vector<16x32xf32>
    %c0_34 = arith.constant 0 : index
    %c0_35 = arith.constant 0 : index
    %c0_36 = arith.constant 0 : index
    %101 = vector.load %arg8[%c0_34, %c0_35, %c0_36] : memref<2x1x32xf32, #tpu.memory_space<vmem>>, vector<1x1x32xf32>
    %102 = vector.shape_cast %101 : vector<1x1x32xf32> to vector<1x32xf32>
    %103 = vector.broadcast %102 : vector<1x32xf32> to vector<16x32xf32>
    %104 = arith.addf %100, %103 : vector<16x32xf32>
    %105 = arith.addf %104, %28 : vector<16x32xf32>
    %c0_37 = arith.constant 0 : index
    %c0_38 = arith.constant 0 : index
    %c0_39 = arith.constant 0 : index
    %106 = vector.load %arg9[%c0_37, %c0_38, %c0_39] : memref<2x1x32xf32, #tpu.memory_space<vmem>>, vector<1x1x32xf32>
    %107 = vector.shape_cast %106 : vector<1x1x32xf32> to vector<1x32xf32>
    %c0_40 = arith.constant 0 : index
    %c0_41 = arith.constant 0 : index
    %c0_42 = arith.constant 0 : index
    %108 = vector.load %arg10[%c0_40, %c0_41, %c0_42] : memref<2x1x32xf32, #tpu.memory_space<vmem>>, vector<1x1x32xf32>
    %109 = vector.shape_cast %108 : vector<1x1x32xf32> to vector<1x32xf32>
    %cst_43 = arith.constant dense<0.000000e+00> : vector<16xf32>
    %110 = vector.multi_reduction <add>, %105, %cst_43 [1] : vector<16x32xf32> to vector<16xf32>
    %111 = vector.shape_cast %110 : vector<16xf32> to vector<16x1xf32>
    %cst_44 = arith.constant 3.200000e+01 : f32
    %112 = vector.broadcast %cst_44 : f32 to vector<16x1xf32>
    %113 = arith.divf %111, %112 : vector<16x1xf32>
    %114 = vector.broadcast %113 : vector<16x1xf32> to vector<16x32xf32>
    %115 = arith.subf %105, %114 : vector<16x32xf32>
    %116 = arith.mulf %115, %115 : vector<16x32xf32>
    %cst_45 = arith.constant dense<0.000000e+00> : vector<16xf32>
    %117 = vector.multi_reduction <add>, %116, %cst_45 [1] : vector<16x32xf32> to vector<16xf32>
    %118 = vector.shape_cast %117 : vector<16xf32> to vector<16x1xf32>
    %cst_46 = arith.constant 3.200000e+01 : f32
    %119 = vector.broadcast %cst_46 : f32 to vector<16x1xf32>
    %120 = arith.divf %118, %119 : vector<16x1xf32>
    %121 = vector.broadcast %113 : vector<16x1xf32> to vector<16x32xf32>
    %122 = arith.subf %105, %121 : vector<16x32xf32>
    %cst_47 = arith.constant 9.99999996E-13 : f32
    %123 = vector.broadcast %cst_47 : f32 to vector<16x1xf32>
    %124 = arith.addf %120, %123 : vector<16x1xf32>
    %125 = math.rsqrt %124 : vector<16x1xf32>
    %126 = vector.broadcast %125 : vector<16x1xf32> to vector<16x32xf32>
    %127 = arith.mulf %122, %126 : vector<16x32xf32>
    %128 = vector.broadcast %107 : vector<1x32xf32> to vector<16x32xf32>
    %129 = arith.mulf %127, %128 : vector<16x32xf32>
    %130 = vector.broadcast %109 : vector<1x32xf32> to vector<16x32xf32>
    %131 = arith.addf %129, %130 : vector<16x32xf32>
    %c0_48 = arith.constant 0 : index
    %c0_49 = arith.constant 0 : index
    %c0_50 = arith.constant 0 : index
    %132 = vector.load %arg11[%c0_48, %c0_49, %c0_50] : memref<2x32x128xf32, #tpu.memory_space<vmem>>, vector<1x32x128xf32>
    %133 = vector.shape_cast %132 : vector<1x32x128xf32> to vector<32x128xf32>
    %cst_51 = arith.constant dense<0.000000e+00> : vector<16x128xf32>
    %134 = tpu.matmul %131, %133, %cst_51 {dimension_numbers = #tpu.dot_dimension_numbers<[1], [0], [0], [1], [0, 0, 1, 1], [], []>} : vector<16x32xf32>, vector<32x128xf32>, vector<16x128xf32> -> vector<16x128xf32>
    %c0_52 = arith.constant 0 : index
    %c0_53 = arith.constant 0 : index
    %c0_54 = arith.constant 0 : index
    %135 = vector.load %arg12[%c0_52, %c0_53, %c0_54] : memref<2x1x128xf32, #tpu.memory_space<vmem>>, vector<1x1x128xf32>
    %136 = vector.shape_cast %135 : vector<1x1x128xf32> to vector<1x128xf32>
    %137 = vector.broadcast %136 : vector<1x128xf32> to vector<16x128xf32>
    %138 = arith.addf %134, %137 : vector<16x128xf32>
    %139 = arith.mulf %138, %138 : vector<16x128xf32>
    %140 = arith.mulf %138, %139 : vector<16x128xf32>
    %cst_55 = arith.constant 4.471500e-02 : f32
    %141 = vector.broadcast %cst_55 : f32 to vector<16x128xf32>
    %142 = arith.mulf %141, %140 : vector<16x128xf32>
    %143 = arith.addf %138, %142 : vector<16x128xf32>
    %cst_56 = arith.constant 0.797884583 : f32
    %144 = vector.broadcast %cst_56 : f32 to vector<16x128xf32>
    %145 = arith.mulf %144, %143 : vector<16x128xf32>
    %146 = math.tanh %145 : vector<16x128xf32>
    %cst_57 = arith.constant 1.000000e+00 : f32
    %147 = vector.broadcast %cst_57 : f32 to vector<16x128xf32>
    %148 = arith.addf %147, %146 : vector<16x128xf32>
    %cst_58 = arith.constant 5.000000e-01 : f32
    %149 = vector.broadcast %cst_58 : f32 to vector<16x128xf32>
    %150 = arith.mulf %149, %148 : vector<16x128xf32>
    %151 = arith.mulf %138, %150 : vector<16x128xf32>
    %c0_59 = arith.constant 0 : index
    %c0_60 = arith.constant 0 : index
    %c0_61 = arith.constant 0 : index
    %152 = vector.load %arg13[%c0_59, %c0_60, %c0_61] : memref<2x128x32xf32, #tpu.memory_space<vmem>>, vector<1x128x32xf32>
    %153 = vector.shape_cast %152 : vector<1x128x32xf32> to vector<128x32xf32>
    %cst_62 = arith.constant dense<0.000000e+00> : vector<16x32xf32>
    %154 = tpu.matmul %151, %153, %cst_62 {dimension_numbers = #tpu.dot_dimension_numbers<[1], [0], [0], [1], [0, 0, 1, 1], [], []>} : vector<16x128xf32>, vector<128x32xf32>, vector<16x32xf32> -> vector<16x32xf32>
    %c0_63 = arith.constant 0 : index
    %c0_64 = arith.constant 0 : index
    %c0_65 = arith.constant 0 : index
    %155 = vector.load %arg14[%c0_63, %c0_64, %c0_65] : memref<2x1x32xf32, #tpu.memory_space<vmem>>, vector<1x1x32xf32>
    %156 = vector.shape_cast %155 : vector<1x1x32xf32> to vector<1x32xf32>
    %157 = vector.broadcast %156 : vector<1x32xf32> to vector<16x32xf32>
    %158 = arith.addf %154, %157 : vector<16x32xf32>
    %159 = arith.addf %158, %131 : vector<16x32xf32>
    %c0_66 = arith.constant 0 : index
    %c0_67 = arith.constant 0 : index
    %c0_68 = arith.constant 0 : index
    %160 = vector.load %arg15[%c0_66, %c0_67, %c0_68] : memref<2x1x32xf32, #tpu.memory_space<vmem>>, vector<1x1x32xf32>
    %161 = vector.shape_cast %160 : vector<1x1x32xf32> to vector<1x32xf32>
    %c0_69 = arith.constant 0 : index
    %c0_70 = arith.constant 0 : index
    %c0_71 = arith.constant 0 : index
    %162 = vector.load %arg16[%c0_69, %c0_70, %c0_71] : memref<2x1x32xf32, #tpu.memory_space<vmem>>, vector<1x1x32xf32>
    %163 = vector.shape_cast %162 : vector<1x1x32xf32> to vector<1x32xf32>
    %cst_72 = arith.constant dense<0.000000e+00> : vector<16xf32>
    %164 = vector.multi_reduction <add>, %159, %cst_72 [1] : vector<16x32xf32> to vector<16xf32>
    %165 = vector.shape_cast %164 : vector<16xf32> to vector<16x1xf32>
    %cst_73 = arith.constant 3.200000e+01 : f32
    %166 = vector.broadcast %cst_73 : f32 to vector<16x1xf32>
    %167 = arith.divf %165, %166 : vector<16x1xf32>
    %168 = vector.broadcast %167 : vector<16x1xf32> to vector<16x32xf32>
    %169 = arith.subf %159, %168 : vector<16x32xf32>
    %170 = arith.mulf %169, %169 : vector<16x32xf32>
    %cst_74 = arith.constant dense<0.000000e+00> : vector<16xf32>
    %171 = vector.multi_reduction <add>, %170, %cst_74 [1] : vector<16x32xf32> to vector<16xf32>
    %172 = vector.shape_cast %171 : vector<16xf32> to vector<16x1xf32>
    %cst_75 = arith.constant 3.200000e+01 : f32
    %173 = vector.broadcast %cst_75 : f32 to vector<16x1xf32>
    %174 = arith.divf %172, %173 : vector<16x1xf32>
    %175 = vector.broadcast %167 : vector<16x1xf32> to vector<16x32xf32>
    %176 = arith.subf %159, %175 : vector<16x32xf32>
    %cst_76 = arith.constant 9.99999996E-13 : f32
    %177 = vector.broadcast %cst_76 : f32 to vector<16x1xf32>
    %178 = arith.addf %174, %177 : vector<16x1xf32>
    %179 = math.rsqrt %178 : vector<16x1xf32>
    %180 = vector.broadcast %179 : vector<16x1xf32> to vector<16x32xf32>
    %181 = arith.mulf %176, %180 : vector<16x32xf32>
    %182 = vector.broadcast %161 : vector<1x32xf32> to vector<16x32xf32>
    %183 = arith.mulf %181, %182 : vector<16x32xf32>
    %184 = vector.broadcast %163 : vector<1x32xf32> to vector<16x32xf32>
    %185 = arith.addf %183, %184 : vector<16x32xf32>
    %c1 = arith.constant 1 : index
    %c0_77 = arith.constant 0 : index
    %c0_78 = arith.constant 0 : index
    %186 = vector.load %arg5[%c1, %c0_77, %c0_78] : memref<2x32x96xf32, #tpu.memory_space<vmem>>, vector<1x32x96xf32>
    %187 = vector.shape_cast %186 : vector<1x32x96xf32> to vector<32x96xf32>
    %cst_79 = arith.constant dense<0.000000e+00> : vector<16x96xf32>
    %188 = tpu.matmul %185, %187, %cst_79 {dimension_numbers = #tpu.dot_dimension_numbers<[1], [0], [0], [1], [0, 0, 1, 1], [], []>} : vector<16x32xf32>, vector<32x96xf32>, vector<16x96xf32> -> vector<16x96xf32>
    %c1_80 = arith.constant 1 : index
    %c0_81 = arith.constant 0 : index
    %c0_82 = arith.constant 0 : index
    %189 = vector.load %arg6[%c1_80, %c0_81, %c0_82] : memref<2x1x96xf32, #tpu.memory_space<vmem>>, vector<1x1x96xf32>
    %190 = vector.shape_cast %189 : vector<1x1x96xf32> to vector<1x96xf32>
    %191 = vector.broadcast %190 : vector<1x96xf32> to vector<16x96xf32>
    %192 = arith.addf %188, %191 : vector<16x96xf32>
    %193 = vector.extract_strided_slice %192 {offsets = [0, 0], sizes = [16, 32], strides = [1, 1]} : vector<16x96xf32> to vector<16x32xf32>
    %194 = vector.extract_strided_slice %192 {offsets = [0, 32], sizes = [16, 32], strides = [1, 1]} : vector<16x96xf32> to vector<16x32xf32>
    %195 = vector.extract_strided_slice %192 {offsets = [0, 64], sizes = [16, 32], strides = [1, 1]} : vector<16x96xf32> to vector<16x32xf32>
    %196 = vector.extract_strided_slice %193 {offsets = [0, 0], sizes = [16, 8], strides = [1, 1]} : vector<16x32xf32> to vector<16x8xf32>
    %197 = vector.shape_cast %196 : vector<16x8xf32> to vector<2x8x8xf32>
    %198 = vector.extract_strided_slice %193 {offsets = [0, 8], sizes = [16, 8], strides = [1, 1]} : vector<16x32xf32> to vector<16x8xf32>
    %199 = vector.shape_cast %198 : vector<16x8xf32> to vector<2x8x8xf32>
    %200 = vector.extract_strided_slice %193 {offsets = [0, 16], sizes = [16, 8], strides = [1, 1]} : vector<16x32xf32> to vector<16x8xf32>
    %201 = vector.shape_cast %200 : vector<16x8xf32> to vector<2x8x8xf32>
    %202 = vector.extract_strided_slice %193 {offsets = [0, 24], sizes = [16, 8], strides = [1, 1]} : vector<16x32xf32> to vector<16x8xf32>
    %203 = vector.shape_cast %202 : vector<16x8xf32> to vector<2x8x8xf32>
    %204 = tpu.concatenate %197, %199, %201, %203 in 0 : vector<2x8x8xf32>, vector<2x8x8xf32>, vector<2x8x8xf32>, vector<2x8x8xf32> -> vector<8x8x8xf32>
    %205 = vector.extract_strided_slice %194 {offsets = [0, 0], sizes = [16, 8], strides = [1, 1]} : vector<16x32xf32> to vector<16x8xf32>
    %206 = vector.shape_cast %205 : vector<16x8xf32> to vector<2x8x8xf32>
    %207 = vector.extract_strided_slice %194 {offsets = [0, 8], sizes = [16, 8], strides = [1, 1]} : vector<16x32xf32> to vector<16x8xf32>
    %208 = vector.shape_cast %207 : vector<16x8xf32> to vector<2x8x8xf32>
    %209 = vector.extract_strided_slice %194 {offsets = [0, 16], sizes = [16, 8], strides = [1, 1]} : vector<16x32xf32> to vector<16x8xf32>
    %210 = vector.shape_cast %209 : vector<16x8xf32> to vector<2x8x8xf32>
    %211 = vector.extract_strided_slice %194 {offsets = [0, 24], sizes = [16, 8], strides = [1, 1]} : vector<16x32xf32> to vector<16x8xf32>
    %212 = vector.shape_cast %211 : vector<16x8xf32> to vector<2x8x8xf32>
    %213 = tpu.concatenate %206, %208, %210, %212 in 0 : vector<2x8x8xf32>, vector<2x8x8xf32>, vector<2x8x8xf32>, vector<2x8x8xf32> -> vector<8x8x8xf32>
    %214 = vector.extract_strided_slice %195 {offsets = [0, 0], sizes = [16, 8], strides = [1, 1]} : vector<16x32xf32> to vector<16x8xf32>
    %215 = vector.shape_cast %214 : vector<16x8xf32> to vector<2x8x8xf32>
    %216 = vector.extract_strided_slice %195 {offsets = [0, 8], sizes = [16, 8], strides = [1, 1]} : vector<16x32xf32> to vector<16x8xf32>
    %217 = vector.shape_cast %216 : vector<16x8xf32> to vector<2x8x8xf32>
    %218 = vector.extract_strided_slice %195 {offsets = [0, 16], sizes = [16, 8], strides = [1, 1]} : vector<16x32xf32> to vector<16x8xf32>
    %219 = vector.shape_cast %218 : vector<16x8xf32> to vector<2x8x8xf32>
    %220 = vector.extract_strided_slice %195 {offsets = [0, 24], sizes = [16, 8], strides = [1, 1]} : vector<16x32xf32> to vector<16x8xf32>
    %221 = vector.shape_cast %220 : vector<16x8xf32> to vector<2x8x8xf32>
    %222 = tpu.concatenate %215, %217, %219, %221 in 0 : vector<2x8x8xf32>, vector<2x8x8xf32>, vector<2x8x8xf32>, vector<2x8x8xf32> -> vector<8x8x8xf32>
    "tpu.trace_start"() <{level = 10 : i32, message = "bqd,bkd->bqk"}> : () -> ()
    %cst_83 = arith.constant dense<0.000000e+00> : vector<8x8x8xf32>
    %223 = tpu.matmul %204, %213, %cst_83 {dimension_numbers = #tpu.dot_dimension_numbers<[2], [2], [1], [1], [0, 0, 0, 1, 1, 1], [0], [0]>} : vector<8x8x8xf32>, vector<8x8x8xf32>, vector<8x8x8xf32> -> vector<8x8x8xf32>
    "tpu.trace_stop"() : () -> ()
    %224 = vector.broadcast %1 : f32 to vector<8x8x8xf32>
    %225 = arith.mulf %223, %224 : vector<8x8x8xf32>
    %226 = vector.broadcast %34 : vector<8x1x8xf32> to vector<8x8x8xf32>
    %227 = arith.addf %225, %226 : vector<8x8x8xf32>
    %cst_84 = arith.constant dense<0xFF800000> : vector<8x8xf32>
    %228 = vector.multi_reduction <maximumf>, %227, %cst_84 [2] : vector<8x8x8xf32> to vector<8x8xf32>
    %cst_85 = arith.constant 0xFF800000 : f32
    %229 = vector.broadcast %cst_85 : f32 to vector<8x8xf32>
    %230 = arith.maximumf %229, %228 : vector<8x8xf32>
    %231 = vector.shape_cast %230 : vector<8x8xf32> to vector<8x8x1xf32>
    %232 = vector.broadcast %231 : vector<8x8x1xf32> to vector<8x8x8xf32>
    %233 = arith.subf %227, %232 : vector<8x8x8xf32>
    %234 = math.exp %233 : vector<8x8x8xf32>
    %cst_86 = arith.constant dense<0.000000e+00> : vector<8x8xf32>
    %235 = vector.multi_reduction <add>, %234, %cst_86 [2] : vector<8x8x8xf32> to vector<8x8xf32>
    %236 = vector.shape_cast %235 : vector<8x8xf32> to vector<8x8x1xf32>
    %237 = vector.broadcast %236 : vector<8x8x1xf32> to vector<8x8x8xf32>
    %238 = arith.divf %234, %237 : vector<8x8x8xf32>
    "tpu.trace_start"() <{level = 10 : i32, message = "bqk,bkd->bqd"}> : () -> ()
    %cst_87 = arith.constant dense<0.000000e+00> : vector<8x8x8xf32>
    %239 = tpu.matmul %238, %222, %cst_87 {dimension_numbers = #tpu.dot_dimension_numbers<[2], [1], [1], [2], [0, 0, 0, 1, 1, 2], [0], [0]>} : vector<8x8x8xf32>, vector<8x8x8xf32>, vector<8x8x8xf32> -> vector<8x8x8xf32>
    "tpu.trace_stop"() : () -> ()
    %240 = vector.extract_strided_slice %239 {offsets = [0, 0, 0], sizes = [2, 8, 8], strides = [1, 1, 1]} : vector<8x8x8xf32> to vector<2x8x8xf32>
    %241 = vector.shape_cast %240 : vector<2x8x8xf32> to vector<16x8xf32>
    %242 = vector.extract_strided_slice %239 {offsets = [2, 0, 0], sizes = [2, 8, 8], strides = [1, 1, 1]} : vector<8x8x8xf32> to vector<2x8x8xf32>
    %243 = vector.shape_cast %242 : vector<2x8x8xf32> to vector<16x8xf32>
    %244 = vector.extract_strided_slice %239 {offsets = [4, 0, 0], sizes = [2, 8, 8], strides = [1, 1, 1]} : vector<8x8x8xf32> to vector<2x8x8xf32>
    %245 = vector.shape_cast %244 : vector<2x8x8xf32> to vector<16x8xf32>
    %246 = vector.extract_strided_slice %239 {offsets = [6, 0, 0], sizes = [2, 8, 8], strides = [1, 1, 1]} : vector<8x8x8xf32> to vector<2x8x8xf32>
    %247 = vector.shape_cast %246 : vector<2x8x8xf32> to vector<16x8xf32>
    %248 = tpu.concatenate %241, %243, %245, %247 in 1 : vector<16x8xf32>, vector<16x8xf32>, vector<16x8xf32>, vector<16x8xf32> -> vector<16x32xf32>
    %c1_88 = arith.constant 1 : index
    %c0_89 = arith.constant 0 : index
    %c0_90 = arith.constant 0 : index
    %249 = vector.load %arg7[%c1_88, %c0_89, %c0_90] : memref<2x32x32xf32, #tpu.memory_space<vmem>>, vector<1x32x32xf32>
    %250 = vector.shape_cast %249 : vector<1x32x32xf32> to vector<32x32xf32>
    %cst_91 = arith.constant dense<0.000000e+00> : vector<16x32xf32>
    %251 = tpu.matmul %248, %250, %cst_91 {dimension_numbers = #tpu.dot_dimension_numbers<[1], [0], [0], [1], [0, 0, 1, 1], [], []>} : vector<16x32xf32>, vector<32x32xf32>, vector<16x32xf32> -> vector<16x32xf32>
    %c1_92 = arith.constant 1 : index
    %c0_93 = arith.constant 0 : index
    %c0_94 = arith.constant 0 : index
    %252 = vector.load %arg8[%c1_92, %c0_93, %c0_94] : memref<2x1x32xf32, #tpu.memory_space<vmem>>, vector<1x1x32xf32>
    %253 = vector.shape_cast %252 : vector<1x1x32xf32> to vector<1x32xf32>
    %254 = vector.broadcast %253 : vector<1x32xf32> to vector<16x32xf32>
    %255 = arith.addf %251, %254 : vector<16x32xf32>
    %256 = arith.addf %255, %185 : vector<16x32xf32>
    %c1_95 = arith.constant 1 : index
    %c0_96 = arith.constant 0 : index
    %c0_97 = arith.constant 0 : index
    %257 = vector.load %arg9[%c1_95, %c0_96, %c0_97] : memref<2x1x32xf32, #tpu.memory_space<vmem>>, vector<1x1x32xf32>
    %258 = vector.shape_cast %257 : vector<1x1x32xf32> to vector<1x32xf32>
    %c1_98 = arith.constant 1 : index
    %c0_99 = arith.constant 0 : index
    %c0_100 = arith.constant 0 : index
    %259 = vector.load %arg10[%c1_98, %c0_99, %c0_100] : memref<2x1x32xf32, #tpu.memory_space<vmem>>, vector<1x1x32xf32>
    %260 = vector.shape_cast %259 : vector<1x1x32xf32> to vector<1x32xf32>
    %cst_101 = arith.constant dense<0.000000e+00> : vector<16xf32>
    %261 = vector.multi_reduction <add>, %256, %cst_101 [1] : vector<16x32xf32> to vector<16xf32>
    %262 = vector.shape_cast %261 : vector<16xf32> to vector<16x1xf32>
    %cst_102 = arith.constant 3.200000e+01 : f32
    %263 = vector.broadcast %cst_102 : f32 to vector<16x1xf32>
    %264 = arith.divf %262, %263 : vector<16x1xf32>
    %265 = vector.broadcast %264 : vector<16x1xf32> to vector<16x32xf32>
    %266 = arith.subf %256, %265 : vector<16x32xf32>
    %267 = arith.mulf %266, %266 : vector<16x32xf32>
    %cst_103 = arith.constant dense<0.000000e+00> : vector<16xf32>
    %268 = vector.multi_reduction <add>, %267, %cst_103 [1] : vector<16x32xf32> to vector<16xf32>
    %269 = vector.shape_cast %268 : vector<16xf32> to vector<16x1xf32>
    %cst_104 = arith.constant 3.200000e+01 : f32
    %270 = vector.broadcast %cst_104 : f32 to vector<16x1xf32>
    %271 = arith.divf %269, %270 : vector<16x1xf32>
    %272 = vector.broadcast %264 : vector<16x1xf32> to vector<16x32xf32>
    %273 = arith.subf %256, %272 : vector<16x32xf32>
    %cst_105 = arith.constant 9.99999996E-13 : f32
    %274 = vector.broadcast %cst_105 : f32 to vector<16x1xf32>
    %275 = arith.addf %271, %274 : vector<16x1xf32>
    %276 = math.rsqrt %275 : vector<16x1xf32>
    %277 = vector.broadcast %276 : vector<16x1xf32> to vector<16x32xf32>
    %278 = arith.mulf %273, %277 : vector<16x32xf32>
    %279 = vector.broadcast %258 : vector<1x32xf32> to vector<16x32xf32>
    %280 = arith.mulf %278, %279 : vector<16x32xf32>
    %281 = vector.broadcast %260 : vector<1x32xf32> to vector<16x32xf32>
    %282 = arith.addf %280, %281 : vector<16x32xf32>
    %c1_106 = arith.constant 1 : index
    %c0_107 = arith.constant 0 : index
    %c0_108 = arith.constant 0 : index
    %283 = vector.load %arg11[%c1_106, %c0_107, %c0_108] : memref<2x32x128xf32, #tpu.memory_space<vmem>>, vector<1x32x128xf32>
    %284 = vector.shape_cast %283 : vector<1x32x128xf32> to vector<32x128xf32>
    %cst_109 = arith.constant dense<0.000000e+00> : vector<16x128xf32>
    %285 = tpu.matmul %282, %284, %cst_109 {dimension_numbers = #tpu.dot_dimension_numbers<[1], [0], [0], [1], [0, 0, 1, 1], [], []>} : vector<16x32xf32>, vector<32x128xf32>, vector<16x128xf32> -> vector<16x128xf32>
    %c1_110 = arith.constant 1 : index
    %c0_111 = arith.constant 0 : index
    %c0_112 = arith.constant 0 : index
    %286 = vector.load %arg12[%c1_110, %c0_111, %c0_112] : memref<2x1x128xf32, #tpu.memory_space<vmem>>, vector<1x1x128xf32>
    %287 = vector.shape_cast %286 : vector<1x1x128xf32> to vector<1x128xf32>
    %288 = vector.broadcast %287 : vector<1x128xf32> to vector<16x128xf32>
    %289 = arith.addf %285, %288 : vector<16x128xf32>
    %290 = arith.mulf %289, %289 : vector<16x128xf32>
    %291 = arith.mulf %289, %290 : vector<16x128xf32>
    %cst_113 = arith.constant 4.471500e-02 : f32
    %292 = vector.broadcast %cst_113 : f32 to vector<16x128xf32>
    %293 = arith.mulf %292, %291 : vector<16x128xf32>
    %294 = arith.addf %289, %293 : vector<16x128xf32>
    %cst_114 = arith.constant 0.797884583 : f32
    %295 = vector.broadcast %cst_114 : f32 to vector<16x128xf32>
    %296 = arith.mulf %295, %294 : vector<16x128xf32>
    %297 = math.tanh %296 : vector<16x128xf32>
    %cst_115 = arith.constant 1.000000e+00 : f32
    %298 = vector.broadcast %cst_115 : f32 to vector<16x128xf32>
    %299 = arith.addf %298, %297 : vector<16x128xf32>
    %cst_116 = arith.constant 5.000000e-01 : f32
    %300 = vector.broadcast %cst_116 : f32 to vector<16x128xf32>
    %301 = arith.mulf %300, %299 : vector<16x128xf32>
    %302 = arith.mulf %289, %301 : vector<16x128xf32>
    %c1_117 = arith.constant 1 : index
    %c0_118 = arith.constant 0 : index
    %c0_119 = arith.constant 0 : index
    %303 = vector.load %arg13[%c1_117, %c0_118, %c0_119] : memref<2x128x32xf32, #tpu.memory_space<vmem>>, vector<1x128x32xf32>
    %304 = vector.shape_cast %303 : vector<1x128x32xf32> to vector<128x32xf32>
    %cst_120 = arith.constant dense<0.000000e+00> : vector<16x32xf32>
    %305 = tpu.matmul %302, %304, %cst_120 {dimension_numbers = #tpu.dot_dimension_numbers<[1], [0], [0], [1], [0, 0, 1, 1], [], []>} : vector<16x128xf32>, vector<128x32xf32>, vector<16x32xf32> -> vector<16x32xf32>
    %c1_121 = arith.constant 1 : index
    %c0_122 = arith.constant 0 : index
    %c0_123 = arith.constant 0 : index
    %306 = vector.load %arg14[%c1_121, %c0_122, %c0_123] : memref<2x1x32xf32, #tpu.memory_space<vmem>>, vector<1x1x32xf32>
    %307 = vector.shape_cast %306 : vector<1x1x32xf32> to vector<1x32xf32>
    %308 = vector.broadcast %307 : vector<1x32xf32> to vector<16x32xf32>
    %309 = arith.addf %305, %308 : vector<16x32xf32>
    %310 = arith.addf %309, %282 : vector<16x32xf32>
    %c1_124 = arith.constant 1 : index
    %c0_125 = arith.constant 0 : index
    %c0_126 = arith.constant 0 : index
    %311 = vector.load %arg15[%c1_124, %c0_125, %c0_126] : memref<2x1x32xf32, #tpu.memory_space<vmem>>, vector<1x1x32xf32>
    %312 = vector.shape_cast %311 : vector<1x1x32xf32> to vector<1x32xf32>
    %c1_127 = arith.constant 1 : index
    %c0_128 = arith.constant 0 : index
    %c0_129 = arith.constant 0 : index
    %313 = vector.load %arg16[%c1_127, %c0_128, %c0_129] : memref<2x1x32xf32, #tpu.memory_space<vmem>>, vector<1x1x32xf32>
    %314 = vector.shape_cast %313 : vector<1x1x32xf32> to vector<1x32xf32>
    %cst_130 = arith.constant dense<0.000000e+00> : vector<16xf32>
    %315 = vector.multi_reduction <add>, %310, %cst_130 [1] : vector<16x32xf32> to vector<16xf32>
    %316 = vector.shape_cast %315 : vector<16xf32> to vector<16x1xf32>
    %cst_131 = arith.constant 3.200000e+01 : f32
    %317 = vector.broadcast %cst_131 : f32 to vector<16x1xf32>
    %318 = arith.divf %316, %317 : vector<16x1xf32>
    %319 = vector.broadcast %318 : vector<16x1xf32> to vector<16x32xf32>
    %320 = arith.subf %310, %319 : vector<16x32xf32>
    %321 = arith.mulf %320, %320 : vector<16x32xf32>
    %cst_132 = arith.constant dense<0.000000e+00> : vector<16xf32>
    %322 = vector.multi_reduction <add>, %321, %cst_132 [1] : vector<16x32xf32> to vector<16xf32>
    %323 = vector.shape_cast %322 : vector<16xf32> to vector<16x1xf32>
    %cst_133 = arith.constant 3.200000e+01 : f32
    %324 = vector.broadcast %cst_133 : f32 to vector<16x1xf32>
    %325 = arith.divf %323, %324 : vector<16x1xf32>
    %326 = vector.broadcast %318 : vector<16x1xf32> to vector<16x32xf32>
    %327 = arith.subf %310, %326 : vector<16x32xf32>
    %cst_134 = arith.constant 9.99999996E-13 : f32
    %328 = vector.broadcast %cst_134 : f32 to vector<16x1xf32>
    %329 = arith.addf %325, %328 : vector<16x1xf32>
    %330 = math.rsqrt %329 : vector<16x1xf32>
    %331 = vector.broadcast %330 : vector<16x1xf32> to vector<16x32xf32>
    %332 = arith.mulf %327, %331 : vector<16x32xf32>
    %333 = vector.broadcast %312 : vector<1x32xf32> to vector<16x32xf32>
    %334 = arith.mulf %332, %333 : vector<16x32xf32>
    %335 = vector.broadcast %314 : vector<1x32xf32> to vector<16x32xf32>
    %336 = arith.addf %334, %335 : vector<16x32xf32>
    %337 = vector.shape_cast %336 : vector<16x32xf32> to vector<2x8x32xf32>
    %cst_135 = arith.constant dense<0.000000e+00> : vector<2x32xf32>
    %338 = vector.multi_reduction <add>, %337, %cst_135 [1] : vector<2x8x32xf32> to vector<2x32xf32>
    %cst_136 = arith.constant 8.000000e+00 : f32
    %339 = vector.broadcast %cst_136 : f32 to vector<2x32xf32>
    %340 = arith.divf %338, %339 : vector<2x32xf32>
    %c0_137 = arith.constant 0 : index
    %c0_138 = arith.constant 0 : index
    %341 = vector.load %arg17[%c0_137, %c0_138] : memref<32x128xf32, #tpu.memory_space<vmem>>, vector<32x128xf32>
    %cst_139 = arith.constant dense<0.000000e+00> : vector<2x128xf32>
    %342 = tpu.matmul %340, %341, %cst_139 {dimension_numbers = #tpu.dot_dimension_numbers<[1], [0], [0], [1], [0, 0, 1, 1], [], []>} : vector<2x32xf32>, vector<32x128xf32>, vector<2x128xf32> -> vector<2x128xf32>
    %c0_140 = arith.constant 0 : index
    %c0_141 = arith.constant 0 : index
    %343 = vector.load %arg18[%c0_140, %c0_141] : memref<1x128xf32, #tpu.memory_space<vmem>>, vector<1x128xf32>
    %344 = vector.broadcast %343 : vector<1x128xf32> to vector<2x128xf32>
    %345 = arith.addf %342, %344 : vector<2x128xf32>
    %cst_142 = arith.constant 0.000000e+00 : f32
    %346 = vector.broadcast %cst_142 : f32 to vector<2x128xf32>
    %347 = arith.maximumf %345, %346 : vector<2x128xf32>
    %c0_143 = arith.constant 0 : index
    %c0_144 = arith.constant 0 : index
    %348 = vector.load %arg19[%c0_143, %c0_144] : memref<128x128xf32, #tpu.memory_space<vmem>>, vector<128x128xf32>
    %cst_145 = arith.constant dense<0.000000e+00> : vector<2x128xf32>
    %349 = tpu.matmul %347, %348, %cst_145 {dimension_numbers = #tpu.dot_dimension_numbers<[1], [0], [0], [1], [0, 0, 1, 1], [], []>} : vector<2x128xf32>, vector<128x128xf32>, vector<2x128xf32> -> vector<2x128xf32>
    %c0_146 = arith.constant 0 : index
    %c0_147 = arith.constant 0 : index
    %350 = vector.load %arg20[%c0_146, %c0_147] : memref<1x128xf32, #tpu.memory_space<vmem>>, vector<1x128xf32>
    %351 = vector.broadcast %350 : vector<1x128xf32> to vector<2x128xf32>
    %352 = arith.addf %349, %351 : vector<2x128xf32>
    %cst_148 = arith.constant 0.000000e+00 : f32
    %353 = vector.broadcast %cst_148 : f32 to vector<2x128xf32>
    %354 = arith.maximumf %352, %353 : vector<2x128xf32>
    %c0_149 = arith.constant 0 : index
    %c0_150 = arith.constant 0 : index
    %355 = vector.load %arg21[%c0_149, %c0_150] : memref<2x128xf32, #tpu.memory_space<vmem>>, vector<2x128xf32>
    tpu.vector_store %arg21[%c0_149, %c0_150], %354 {strides = array<i32>} : memref<2x128xf32, #tpu.memory_space<vmem>>, vector<2x128xf32>,
    return
  }
}

</mosaic_0001>

<llo_original>
// kernel: bert_multilabel_cls_forward.1
$region0: #{bert_multilabel_cls_forward.1}
  #allocation0 [shape = 'u32[]', space=smem, size = 0x4, offset = 0x4, fixed_abs, tag = 'smem constant byte address 0x4 - core index']
  #allocation1 [shape = 'u32[144,128]{1,0:T(1,128)}', space=vmem, size = 0x12000, scoped, tag = 'internal scratch']
  %s0 = inlined_call_operand.vmem [shape: f32[16,32], index: 0, kind: input, shape index: {}]
  %s1 = inlined_call_operand.vmem [shape: f32[16,32], index: 1, kind: input, shape index: {}]
  %s2 = inlined_call_operand.vmem [shape: f32[2,1,8], index: 2, kind: input, shape index: {}]
  %s3 = inlined_call_operand.vmem [shape: f32[1,32], index: 3, kind: input, shape index: {}]
  %s4 = inlined_call_operand.vmem [shape: f32[1,32], index: 4, kind: input, shape index: {}]
  %s5 = inlined_call_operand.vmem [shape: f32[2,32,96], index: 5, kind: input, shape index: {}]
  %s6 = inlined_call_operand.vmem [shape: f32[2,1,96], index: 6, kind: input, shape index: {}]
  %s7 = inlined_call_operand.vmem [shape: f32[2,32,32], index: 7, kind: input, shape index: {}]
  %s8 = inlined_call_operand.vmem [shape: f32[2,1,32], index: 8, kind: input, shape index: {}]
  %s9 = inlined_call_operand.vmem [shape: f32[2,1,32], index: 9, kind: input, shape index: {}]
  %s10 = inlined_call_operand.vmem [shape: f32[2,1,32], index: 10, kind: input, shape index: {}]
  %s11 = inlined_call_operand.vmem [shape: f32[2,32,128], index: 11, kind: input, shape index: {}]
  %s12 = inlined_call_operand.vmem [shape: f32[2,1,128], index: 12, kind: input, shape index: {}]
  %s13 = inlined_call_operand.vmem [shape: f32[2,128,32], index: 13, kind: input, shape index: {}]
  %s14 = inlined_call_operand.vmem [shape: f32[2,1,32], index: 14, kind: input, shape index: {}]
  %s15 = inlined_call_operand.vmem [shape: f32[2,1,32], index: 15, kind: input, shape index: {}]
  %s16 = inlined_call_operand.vmem [shape: f32[2,1,32], index: 16, kind: input, shape index: {}]
  %s17 = inlined_call_operand.vmem [shape: f32[32,128], index: 17, kind: input, shape index: {}]
  %s18 = inlined_call_operand.vmem [shape: f32[1,128], index: 18, kind: input, shape index: {}]
  %s19 = inlined_call_operand.vmem [shape: f32[128,128], index: 19, kind: input, shape index: {}]
  %s20 = inlined_call_operand.vmem [shape: f32[1,128], index: 20, kind: input, shape index: {}]
  %s21 = inlined_call_operand.hbm [shape: f32[2,128], index: 21, kind: output, shape index: {}]
  %s22 = sld [smem:[#allocation0]]
  $region94: #{bert_multilabel_cls_forward.1} parent=0
    _
  %s24 = ssub.s32 1, %s22
  %s25 = scalar_select 0, %s24, %s22
  $region1: #{bert_multilabel_cls_forward.1} parent=0
    #allocation2 [shape = 'u8[1024]{0}', space=vmem, size = 0x400, scoped, tag = 'output window, operand 0, single buffered']
    #allocation3 [shape = 's32[1]{0}', space=sflag, size = 0x4, scoped, tag = 'scoped memory for bert_multilabel_cls_forward.1']
    %26 = vsyncpa [#allocation3], 0
    // Predicated region
    $region2: #{bert_multilabel_cls_forward.1} parent=1 // pred_check
      _
    $region3: #{bert_multilabel_cls_forward.1} parent=1 // pred_check_branch
      %28 = sbr.rel (0) target = $region5
    $region4: #{bert_multilabel_cls_forward.1} parent=1 // pred_region
      _
    $region5: #{bert_multilabel_cls_forward.1} parent=1 // pred_fallthru
      _
    // Predicated region
    $region6: #{bert_multilabel_cls_forward.1} parent=1 // pred_check
      _
    $region7: #{bert_multilabel_cls_forward.1} parent=1 // pred_check_branch
      %30 = sbr.rel (0) target = $region9
    $region8: #{bert_multilabel_cls_forward.1} parent=1 // pred_region
      _
    $region9: #{bert_multilabel_cls_forward.1} parent=1 // pred_fallthru
      _
    // Predicated region
    $region10: #{bert_multilabel_cls_forward.1} parent=1 // pred_check
      _
    $region11: #{bert_multilabel_cls_forward.1} parent=1 // pred_check_branch
      %32 = sbr.rel (0) target = $region13
    $region12: #{bert_multilabel_cls_forward.1} parent=1 // pred_region
      _
    $region13: #{bert_multilabel_cls_forward.1} parent=1 // pred_fallthru
      _
    // Predicated region
    $region14: #{bert_multilabel_cls_forward.1} parent=1 // pred_check
      _
    $region15: #{bert_multilabel_cls_forward.1} parent=1 // pred_check_branch
      %34 = sbr.rel (0) target = $region17
    $region16: #{bert_multilabel_cls_forward.1} parent=1 // pred_region
      _
    $region17: #{bert_multilabel_cls_forward.1} parent=1 // pred_fallthru
      _
    // Predicated region
    $region18: #{bert_multilabel_cls_forward.1} parent=1 // pred_check
      _
    $region19: #{bert_multilabel_cls_forward.1} parent=1 // pred_check_branch
      %36 = sbr.rel (0) target = $region21
    $region20: #{bert_multilabel_cls_forward.1} parent=1 // pred_region
      _
    $region21: #{bert_multilabel_cls_forward.1} parent=1 // pred_fallthru
      _
    // Predicated region
    $region22: #{bert_multilabel_cls_forward.1} parent=1 // pred_check
      _
    $region23: #{bert_multilabel_cls_forward.1} parent=1 // pred_check_branch
      %38 = sbr.rel (0) target = $region25
    $region24: #{bert_multilabel_cls_forward.1} parent=1 // pred_region
      _
    $region25: #{bert_multilabel_cls_forward.1} parent=1 // pred_fallthru
      _
    // Predicated region
    $region26: #{bert_multilabel_cls_forward.1} parent=1 // pred_check
      _
    $region27: #{bert_multilabel_cls_forward.1} parent=1 // pred_check_branch
      %40 = sbr.rel (0) target = $region29
    $region28: #{bert_multilabel_cls_forward.1} parent=1 // pred_region
      _
    $region29: #{bert_multilabel_cls_forward.1} parent=1 // pred_fallthru
      _
    // Predicated region
    $region30: #{bert_multilabel_cls_forward.1} parent=1 // pred_check
      _
    $region31: #{bert_multilabel_cls_forward.1} parent=1 // pred_check_branch
      %42 = sbr.rel (0) target = $region33
    $region32: #{bert_multilabel_cls_forward.1} parent=1 // pred_region
      _
    $region33: #{bert_multilabel_cls_forward.1} parent=1 // pred_fallthru
      _
    // Predicated region
    $region34: #{bert_multilabel_cls_forward.1} parent=1 // pred_check
      _
    $region35: #{bert_multilabel_cls_forward.1} parent=1 // pred_check_branch
      %44 = sbr.rel (0) target = $region37
    $region36: #{bert_multilabel_cls_forward.1} parent=1 // pred_region
      _
    $region37: #{bert_multilabel_cls_forward.1} parent=1 // pred_fallthru
      _
    // Predicated region
    $region38: #{bert_multilabel_cls_forward.1} parent=1 // pred_check
      _
    $region39: #{bert_multilabel_cls_forward.1} parent=1 // pred_check_branch
      %46 = sbr.rel (0) target = $region41
    $region40: #{bert_multilabel_cls_forward.1} parent=1 // pred_region
      _
    $region41: #{bert_multilabel_cls_forward.1} parent=1 // pred_fallthru
      _
    // Predicated region
    $region42: #{bert_multilabel_cls_forward.1} parent=1 // pred_check
      _
    $region43: #{bert_multilabel_cls_forward.1} parent=1 // pred_check_branch
      %48 = sbr.rel (0) target = $region45
    $region44: #{bert_multilabel_cls_forward.1} parent=1 // pred_region
      _
    $region45: #{bert_multilabel_cls_forward.1} parent=1 // pred_fallthru
      _
    // Predicated region
    $region46: #{bert_multilabel_cls_forward.1} parent=1 // pred_check
      _
    $region47: #{bert_multilabel_cls_forward.1} parent=1 // pred_check_branch
      %50 = sbr.rel (0) target = $region49
    $region48: #{bert_multilabel_cls_forward.1} parent=1 // pred_region
      _
    $region49: #{bert_multilabel_cls_forward.1} parent=1 // pred_fallthru
      _
    // Predicated region
    $region50: #{bert_multilabel_cls_forward.1} parent=1 // pred_check
      _
    $region51: #{bert_multilabel_cls_forward.1} parent=1 // pred_check_branch
      %52 = sbr.rel (0) target = $region53
    $region52: #{bert_multilabel_cls_forward.1} parent=1 // pred_region
      _
    $region53: #{bert_multilabel_cls_forward.1} parent=1 // pred_fallthru
      _
    // Predicated region
    $region54: #{bert_multilabel_cls_forward.1} parent=1 // pred_check
      _
    $region55: #{bert_multilabel_cls_forward.1} parent=1 // pred_check_branch
      %54 = sbr.rel (0) target = $region57
    $region56: #{bert_multilabel_cls_forward.1} parent=1 // pred_region
      _
    $region57: #{bert_multilabel_cls_forward.1} parent=1 // pred_fallthru
      _
    // Predicated region
    $region58: #{bert_multilabel_cls_forward.1} parent=1 // pred_check
      _
    $region59: #{bert_multilabel_cls_forward.1} parent=1 // pred_check_branch
      %56 = sbr.rel (0) target = $region61
    $region60: #{bert_multilabel_cls_forward.1} parent=1 // pred_region
      _
    $region61: #{bert_multilabel_cls_forward.1} parent=1 // pred_fallthru
      _
    // Predicated region
    $region62: #{bert_multilabel_cls_forward.1} parent=1 // pred_check
      _
    $region63: #{bert_multilabel_cls_forward.1} parent=1 // pred_check_branch
      %58 = sbr.rel (0) target = $region65
    $region64: #{bert_multilabel_cls_forward.1} parent=1 // pred_region
      _
    $region65: #{bert_multilabel_cls_forward.1} parent=1 // pred_fallthru
      _
    // Predicated region
    $region66: #{bert_multilabel_cls_forward.1} parent=1 // pred_check
      _
    $region67: #{bert_multilabel_cls_forward.1} parent=1 // pred_check_branch
      %60 = sbr.rel (0) target = $region69
    $region68: #{bert_multilabel_cls_forward.1} parent=1 // pred_region
      _
    $region69: #{bert_multilabel_cls_forward.1} parent=1 // pred_fallthru
      _
    // Predicated region
    $region70: #{bert_multilabel_cls_forward.1} parent=1 // pred_check
      _
    $region71: #{bert_multilabel_cls_forward.1} parent=1 // pred_check_branch
      %62 = sbr.rel (0) target = $region73
    $region72: #{bert_multilabel_cls_forward.1} parent=1 // pred_region
      _
    $region73: #{bert_multilabel_cls_forward.1} parent=1 // pred_fallthru
      _
    // Predicated region
    $region74: #{bert_multilabel_cls_forward.1} parent=1 // pred_check
      _
    $region75: #{bert_multilabel_cls_forward.1} parent=1 // pred_check_branch
      %64 = sbr.rel (0) target = $region77
    $region76: #{bert_multilabel_cls_forward.1} parent=1 // pred_region
      _
    $region77: #{bert_multilabel_cls_forward.1} parent=1 // pred_fallthru
      _
    // Predicated region
    $region78: #{bert_multilabel_cls_forward.1} parent=1 // pred_check
      _
    $region79: #{bert_multilabel_cls_forward.1} parent=1 // pred_check_branch
      %66 = sbr.rel (0) target = $region81
    $region80: #{bert_multilabel_cls_forward.1} parent=1 // pred_region
      _
    $region81: #{bert_multilabel_cls_forward.1} parent=1 // pred_fallthru
      _
    // Predicated region
    $region82: #{bert_multilabel_cls_forward.1} parent=1 // pred_check
      _
    $region83: #{bert_multilabel_cls_forward.1} parent=1 // pred_check_branch
      %68 = sbr.rel (0) target = $region85
    $region84: #{bert_multilabel_cls_forward.1} parent=1 // pred_region
      _
    $region85: #{bert_multilabel_cls_forward.1} parent=1 // pred_fallthru
      _
    %v69 = vld [vmem:[%s0] sm:$0xff]
    %v70 = vld [vmem:[%s0 + $0x8] sm:$0xff]
    %v71 = vld [vmem:[%s1] sm:$0xff]
    %v72 = vld [vmem:[%s1 + $0x8] sm:$0xff]
    %v73 = vadd.f32 %v69, %v71
    %v74 = vadd.f32 %v70, %v72
    %v75 = vld [vmem:[%s3] sm:$0x1]
    %v76 = vld [vmem:[%s4] sm:$0x1]
    %vm77 = vcmask 261120
    %v78 = vsel %vm77, %v73, 0.0
    %79 = vadd.xlane.f32.xlu0 %v78
    %v80 = vpop.xlane.xlu0 %79
    %v81 = vsel %vm77, %v74, 0.0
    %82 = vadd.xlane.f32.xlu0 %v81
    %v83 = vpop.xlane.xlu0 %82
    %v84 = vrcp.pop 32.0
    %v85 = vmul.f32 %v80, %v84
    %v86 = vmul.f32 %v83, %v84
    %v87 = vsub.f32 %v73, %v85
    %v88 = vsub.f32 %v74, %v86
    %v89 = vmul.f32 %v87, %v87
    %v90 = vmul.f32 %v88, %v88
    %v91 = vsel %vm77, %v89, 0.0
    %92 = vadd.xlane.f32.xlu0 %v91
    %v93 = vpop.xlane.xlu0 %92
    %v94 = vsel %vm77, %v90, 0.0
    %95 = vadd.xlane.f32.xlu0 %v94
    %v96 = vpop.xlane.xlu0 %95
    %v97 = vmul.f32 %v93, %v84
    %v98 = vmul.f32 %v96, %v84
    %v99 = vadd.f32 %v97, 1e-12
    %v100 = vadd.f32 %v98, 1e-12
    %v101 = vrsqrt.pop %v99
    %v102 = vrsqrt.pop %v100
    %v103 = vmul.f32 %v87, %v101
    %v104 = vmul.f32 %v88, %v102
    %v106 = vlaneseq
    %v107 = vshrl.u32 %v106, 7
    %v108 = vsub.s32 0, %v107
    %v109 = vrot.slane %v75, %v108
    %v111 = vmul.f32 %v103, %v109
    %v112 = vmul.f32 %v104, %v109
    %v114 = vlaneseq
    %v115 = vshrl.u32 %v114, 7
    %v116 = vsub.s32 0, %v115
    %v117 = vrot.slane %v76, %v116
    %v119 = vadd.f32 %v111, %v117
    %v120 = vadd.f32 %v112, %v117
    %v121 = vld [vmem:[%s2] sm:$0x1]
    %v122 = vld [vmem:[%s2 + $0x1] sm:$0x1]
    %v123 = vsub.f32 1.0, %v121
    %v124 = vsub.f32 1.0, %v122
    %v125 = vmul.f32 %v123, -1e+09
    %v126 = vmul.f32 %v124, -1e+09
    %v127 = vld [vmem:[%s5] sm:$0xff]
    %v128 = vld [vmem:[%s5 + $0x8] sm:$0xff]
    %v129 = vld [vmem:[%s5 + $0x10] sm:$0xff]
    %v130 = vld [vmem:[%s5 + $0x18] sm:$0xff]
    %v131 = vld [vmem:[%s6] sm:$0x1]
    %v133 = vlaneseq
    %v134 = vshrl.u32 %v133, 7
    %v135 = vsub.s32 0, %v134
    %v136 = vrot.slane %v131, %v135
    %v139 = vsel %vm77, %v119, 0
    %v142 = vsel %vm77, %v120, 0
    %144 = vmatprep.subr.mxu0 0.0
    %145 = vmatpush1.msra.mxu0 %v127
    %146 = vmatprep.subr.mxu0 0.0
    %147 = vmatpush1.msra.mxu0 %v128
    %148 = vmatprep.subr.mxu0 0.0
    %149 = vmatpush1.msra.mxu0 %v129
    %150 = vmatprep.subr.mxu0 0.0
    %151 = vmatpush1.msra.mxu0 %v130
    %152 = vmatprep.subr.mxu0 0.0
    %153 = vmatpush1.msra.mxu0 0.0
    %154 = vmatprep.subr.mxu0 0.0
    %155 = vmatpush1.msra.mxu0 0.0
    %156 = vmatprep.subr.mxu0 0.0
    %157 = vmatpush1.msra.mxu0 0.0
    %158 = vmatprep.subr.mxu0 0.0
    %159 = vmatpush1.msra.mxu0 0.0
    %160 = vmatprep.subr.mxu0 0.0
    %161 = vmatpush1.msra.mxu0 0.0
    %162 = vmatprep.subr.mxu0 0.0
    %163 = vmatpush1.msra.mxu0 0.0
    %164 = vmatprep.subr.mxu0 0.0
    %165 = vmatpush1.msra.mxu0 0.0
    %166 = vmatprep.subr.mxu0 0.0
    %167 = vmatpush1.msra.mxu0 0.0
    %168 = vmatprep.subr.mxu0 0.0
    %169 = vmatpush1.msra.mxu0 0.0
    %170 = vmatprep.subr.mxu0 0.0
    %171 = vmatpush1.msra.mxu0 0.0
    %172 = vmatprep.subr.mxu0 0.0
    %173 = vmatpush1.msra.mxu0 0.0
    %174 = vmatprep.subr.mxu0 0.0
    %175 = vmatpush1.msra.mxu0 0.0
    %176 = vmatprep.subr.mxu0 0.0
    %177 = vmatpush1.msra.mxu0 0.0
    %178 = vmatprep.subr.mxu0 0.0
    %179 = vmatpush1.msra.mxu0 0.0
    %180 = vmatprep.subr.mxu0 0.0
    %181 = vmatpush1.msra.mxu0 0.0
    %182 = vmatprep.subr.mxu0 0.0
    %183 = vmatpush1.msra.mxu0 0.0
    %184 = vmatprep.subr.mxu0 0.0
    %185 = vmatpush1.msra.mxu0 0.0
    %186 = vmatprep.subr.mxu0 0.0
    %187 = vmatpush1.msra.mxu0 0.0
    %188 = vmatprep.subr.mxu0 0.0
    %189 = vmatpush1.msra.mxu0 0.0
    %190 = vmatprep.subr.mxu0 0.0
    %191 = vmatpush1.msra.mxu0 0.0
    %192 = vmatprep.subr.mxu0 0.0
    %193 = vmatpush1.msra.mxu0 0.0
    %194 = vmatprep.subr.mxu0 0.0
    %195 = vmatpush1.msra.mxu0 0.0
    %196 = vmatprep.subr.mxu0 0.0
    %197 = vmatpush1.msra.mxu0 0.0
    %198 = vmatprep.subr.mxu0 0.0
    %199 = vmatpush1.msra.mxu0 0.0
    %200 = vmatprep.subr.mxu0 0.0
    %201 = vmatpush1.msra.mxu0 0.0
    %202 = vmatprep.subr.mxu0 0.0
    %203 = vmatpush1.msra.mxu0 0.0
    %204 = vmatprep.subr.mxu0 0.0
    %205 = vmatpush1.msra.mxu0 0.0
    %206 = vmatprep.subr.mxu0 0.0
    %207 = vmatpush1.msra.mxu0 0.0
    %208 = vmatprep.mubr.f32.mxu0 0.0
    %209 = vmatmul.mubr.f32.gmra.mrb[0].mxu0 %v139
    %v210 = vpop.f32.mrb[0].mxu0
    %v211 = vadd.f32 %v136, %v210
    %v212 = vpop.f32.mrb[0].mxu0
    %213 = vmatprep.mubr.f32.mxu0 0.0
    %214 = vmatmul.mubr.f32.gmra.mrb[0].mxu0 %v142
    %v215 = vpop.f32.mrb[0].mxu0
    %v216 = vadd.f32 %v136, %v215
    %v217 = vpop.f32.mrb[0].mxu0
    %218 = vdwg.mxu0
    %221 = vrot.lane.b32.xlu0 %v211, 120
    %v222 = vpop.permute.xlu0 %221
    %223 = vrot.lane.b32.xlu0 %v216, 120
    %v224 = vpop.permute.xlu0 %223
    %225 = vrot.lane.b32.xlu0 %v211, 112
    %v226 = vpop.permute.xlu0 %225
    %227 = vrot.lane.b32.xlu0 %v216, 112
    %v228 = vpop.permute.xlu0 %227
    %229 = vrot.lane.b32.xlu0 %v211, 104
    %v230 = vpop.permute.xlu0 %229
    %231 = vrot.lane.b32.xlu0 %v216, 104
    %v232 = vpop.permute.xlu0 %231
    %233 = vrot.lane.b32.xlu0 %v211, 96
    %v234 = vpop.permute.xlu0 %233
    %vm235 = vcmask 64512
    %v236 = vsel %vm235, %v211, 0
    %v238 = vsel %vm235, %v234, 0
    %240 = vmatprep.subr.mxu0 0.0
    %241 = vmatpush1.xpose.msra.mxu0 %v238
    %242 = vmatprep.subr.mxu0 0.0
    %243 = vmatpush1.xpose.msra.mxu0 0.0
    %244 = vmatprep.subr.mxu0 0.0
    %245 = vmatpush1.xpose.msra.mxu0 0.0
    %246 = vmatprep.subr.mxu0 0.0
    %247 = vmatpush1.xpose.msra.mxu0 0.0
    %248 = vmatprep.subr.mxu0 0.0
    %249 = vmatpush1.xpose.msra.mxu0 0.0
    %250 = vmatprep.subr.mxu0 0.0
    %251 = vmatpush1.xpose.msra.mxu0 0.0
    %252 = vmatprep.subr.mxu0 0.0
    %253 = vmatpush1.xpose.msra.mxu0 0.0
    %254 = vmatprep.subr.mxu0 0.0
    %255 = vmatpush1.xpose.msra.mxu0 0.0
    %256 = vmatprep.subr.mxu0 0.0
    %257 = vmatpush1.xpose.msra.mxu0 0.0
    %258 = vmatprep.subr.mxu0 0.0
    %259 = vmatpush1.xpose.msra.mxu0 0.0
    %260 = vmatprep.subr.mxu0 0.0
    %261 = vmatpush1.xpose.msra.mxu0 0.0
    %262 = vmatprep.subr.mxu0 0.0
    %263 = vmatpush1.xpose.msra.mxu0 0.0
    %264 = vmatprep.subr.mxu0 0.0
    %265 = vmatpush1.xpose.msra.mxu0 0.0
    %266 = vmatprep.subr.mxu0 0.0
    %267 = vmatpush1.xpose.msra.mxu0 0.0
    %268 = vmatprep.subr.mxu0 0.0
    %269 = vmatpush1.xpose.msra.mxu0 0.0
    %270 = vmatprep.subr.mxu0 0.0
    %271 = vmatpush1.xpose.msra.mxu0 0.0
    %272 = vmatprep.subr.mxu0 0.0
    %273 = vmatpush1.xpose.msra.mxu0 0.0
    %274 = vmatprep.subr.mxu0 0.0
    %275 = vmatpush1.xpose.msra.mxu0 0.0
    %276 = vmatprep.subr.mxu0 0.0
    %277 = vmatpush1.xpose.msra.mxu0 0.0
    %278 = vmatprep.subr.mxu0 0.0
    %279 = vmatpush1.xpose.msra.mxu0 0.0
    %280 = vmatprep.subr.mxu0 0.0
    %281 = vmatpush1.xpose.msra.mxu0 0.0
    %282 = vmatprep.subr.mxu0 0.0
    %283 = vmatpush1.xpose.msra.mxu0 0.0
    %284 = vmatprep.subr.mxu0 0.0
    %285 = vmatpush1.xpose.msra.mxu0 0.0
    %286 = vmatprep.subr.mxu0 0.0
    %287 = vmatpush1.xpose.msra.mxu0 0.0
    %288 = vmatprep.subr.mxu0 0.0
    %289 = vmatpush1.xpose.msra.mxu0 0.0
    %290 = vmatprep.subr.mxu0 0.0
    %291 = vmatpush1.xpose.msra.mxu0 0.0
    %292 = vmatprep.subr.mxu0 0.0
    %293 = vmatpush1.xpose.msra.mxu0 0.0
    %294 = vmatprep.subr.mxu0 0.0
    %295 = vmatpush1.xpose.msra.mxu0 0.0
    %296 = vmatprep.subr.mxu0 0.0
    %297 = vmatpush1.xpose.msra.mxu0 0.0
    %298 = vmatprep.subr.mxu0 0.0
    %299 = vmatpush1.xpose.msra.mxu0 0.0
    %300 = vmatprep.subr.mxu0 0.0
    %301 = vmatpush1.xpose.msra.mxu0 0.0
    %302 = vmatprep.subr.mxu0 0.0
    %303 = vmatpush1.xpose.msra.mxu0 0.0
    %304 = vmatprep.mubr.f32.mxu0 0.0
    %305 = vmatmul.mubr.f32.gmra.mrb[0].mxu0 %v236
    %v306 = vpop.f32.mrb[0].mxu0
    %v307 = vadd.f32 0.0, %v306
    %v308 = vpop.f32.mrb[0].mxu0
    %309 = vdwg.mxu0
    %310 = vrot.lane.b32.xlu0 %v216, 96
    %v311 = vpop.permute.xlu0 %310
    %v312 = vsel %vm235, %v216, 0
    %v314 = vsel %vm235, %v311, 0
    %316 = vmatprep.subr.mxu0 0.0
    %317 = vmatpush1.xpose.msra.mxu0 %v314
    %318 = vmatprep.subr.mxu0 0.0
    %319 = vmatpush1.xpose.msra.mxu0 0.0
    %320 = vmatprep.subr.mxu0 0.0
    %321 = vmatpush1.xpose.msra.mxu0 0.0
    %322 = vmatprep.subr.mxu0 0.0
    %323 = vmatpush1.xpose.msra.mxu0 0.0
    %324 = vmatprep.subr.mxu0 0.0
    %325 = vmatpush1.xpose.msra.mxu0 0.0
    %326 = vmatprep.subr.mxu0 0.0
    %327 = vmatpush1.xpose.msra.mxu0 0.0
    %328 = vmatprep.subr.mxu0 0.0
    %329 = vmatpush1.xpose.msra.mxu0 0.0
    %330 = vmatprep.subr.mxu0 0.0
    %331 = vmatpush1.xpose.msra.mxu0 0.0
    %332 = vmatprep.subr.mxu0 0.0
    %333 = vmatpush1.xpose.msra.mxu0 0.0
    %334 = vmatprep.subr.mxu0 0.0
    %335 = vmatpush1.xpose.msra.mxu0 0.0
    %336 = vmatprep.subr.mxu0 0.0
    %337 = vmatpush1.xpose.msra.mxu0 0.0
    %338 = vmatprep.subr.mxu0 0.0
    %339 = vmatpush1.xpose.msra.mxu0 0.0
    %340 = vmatprep.subr.mxu0 0.0
    %341 = vmatpush1.xpose.msra.mxu0 0.0
    %342 = vmatprep.subr.mxu0 0.0
    %343 = vmatpush1.xpose.msra.mxu0 0.0
    %344 = vmatprep.subr.mxu0 0.0
    %345 = vmatpush1.xpose.msra.mxu0 0.0
    %346 = vmatprep.subr.mxu0 0.0
    %347 = vmatpush1.xpose.msra.mxu0 0.0
    %348 = vmatprep.subr.mxu0 0.0
    %349 = vmatpush1.xpose.msra.mxu0 0.0
    %350 = vmatprep.subr.mxu0 0.0
    %351 = vmatpush1.xpose.msra.mxu0 0.0
    %352 = vmatprep.subr.mxu0 0.0
    %353 = vmatpush1.xpose.msra.mxu0 0.0
    %354 = vmatprep.subr.mxu0 0.0
    %355 = vmatpush1.xpose.msra.mxu0 0.0
    %356 = vmatprep.subr.mxu0 0.0
    %357 = vmatpush1.xpose.msra.mxu0 0.0
    %358 = vmatprep.subr.mxu0 0.0
    %359 = vmatpush1.xpose.msra.mxu0 0.0
    %360 = vmatprep.subr.mxu0 0.0
    %361 = vmatpush1.xpose.msra.mxu0 0.0
    %362 = vmatprep.subr.mxu0 0.0
    %363 = vmatpush1.xpose.msra.mxu0 0.0
    %364 = vmatprep.subr.mxu0 0.0
    %365 = vmatpush1.xpose.msra.mxu0 0.0
    %366 = vmatprep.subr.mxu0 0.0
    %367 = vmatpush1.xpose.msra.mxu0 0.0
    %368 = vmatprep.subr.mxu0 0.0
    %369 = vmatpush1.xpose.msra.mxu0 0.0
    %370 = vmatprep.subr.mxu0 0.0
    %371 = vmatpush1.xpose.msra.mxu0 0.0
    %372 = vmatprep.subr.mxu0 0.0
    %373 = vmatpush1.xpose.msra.mxu0 0.0
    %374 = vmatprep.subr.mxu0 0.0
    %375 = vmatpush1.xpose.msra.mxu0 0.0
    %376 = vmatprep.subr.mxu0 0.0
    %377 = vmatpush1.xpose.msra.mxu0 0.0
    %378 = vmatprep.subr.mxu0 0.0
    %379 = vmatpush1.xpose.msra.mxu0 0.0
    %380 = vmatprep.mubr.f32.mxu0 0.0
    %381 = vmatmul.mubr.f32.gmra.mrb[0].mxu0 %v312
    %v382 = vpop.f32.mrb[0].mxu0
    %v383 = vadd.f32 0.0, %v382
    %v384 = vpop.f32.mrb[0].mxu0
    %385 = vdwg.mxu0
    %386 = vrot.lane.b32.xlu0 %v222, 96
    %v387 = vpop.permute.xlu0 %386
    %v388 = vsel %vm235, %v222, 0
    %v390 = vsel %vm235, %v387, 0
    %392 = vmatprep.subr.mxu0 0.0
    %393 = vmatpush1.xpose.msra.mxu0 %v390
    %394 = vmatprep.subr.mxu0 0.0
    %395 = vmatpush1.xpose.msra.mxu0 0.0
    %396 = vmatprep.subr.mxu0 0.0
    %397 = vmatpush1.xpose.msra.mxu0 0.0
    %398 = vmatprep.subr.mxu0 0.0
    %399 = vmatpush1.xpose.msra.mxu0 0.0
    %400 = vmatprep.subr.mxu0 0.0
    %401 = vmatpush1.xpose.msra.mxu0 0.0
    %402 = vmatprep.subr.mxu0 0.0
    %403 = vmatpush1.xpose.msra.mxu0 0.0
    %404 = vmatprep.subr.mxu0 0.0
    %405 = vmatpush1.xpose.msra.mxu0 0.0
    %406 = vmatprep.subr.mxu0 0.0
    %407 = vmatpush1.xpose.msra.mxu0 0.0
    %408 = vmatprep.subr.mxu0 0.0
    %409 = vmatpush1.xpose.msra.mxu0 0.0
    %410 = vmatprep.subr.mxu0 0.0
    %411 = vmatpush1.xpose.msra.mxu0 0.0
    %412 = vmatprep.subr.mxu0 0.0
    %413 = vmatpush1.xpose.msra.mxu0 0.0
    %414 = vmatprep.subr.mxu0 0.0
    %415 = vmatpush1.xpose.msra.mxu0 0.0
    %416 = vmatprep.subr.mxu0 0.0
    %417 = vmatpush1.xpose.msra.mxu0 0.0
    %418 = vmatprep.subr.mxu0 0.0
    %419 = vmatpush1.xpose.msra.mxu0 0.0
    %420 = vmatprep.subr.mxu0 0.0
    %421 = vmatpush1.xpose.msra.mxu0 0.0
    %422 = vmatprep.subr.mxu0 0.0
    %423 = vmatpush1.xpose.msra.mxu0 0.0
    %424 = vmatprep.subr.mxu0 0.0
    %425 = vmatpush1.xpose.msra.mxu0 0.0
    %426 = vmatprep.subr.mxu0 0.0
    %427 = vmatpush1.xpose.msra.mxu0 0.0
    %428 = vmatprep.subr.mxu0 0.0
    %429 = vmatpush1.xpose.msra.mxu0 0.0
    %430 = vmatprep.subr.mxu0 0.0
    %431 = vmatpush1.xpose.msra.mxu0 0.0
    %432 = vmatprep.subr.mxu0 0.0
    %433 = vmatpush1.xpose.msra.mxu0 0.0
    %434 = vmatprep.subr.mxu0 0.0
    %435 = vmatpush1.xpose.msra.mxu0 0.0
    %436 = vmatprep.subr.mxu0 0.0
    %437 = vmatpush1.xpose.msra.mxu0 0.0
    %438 = vmatprep.subr.mxu0 0.0
    %439 = vmatpush1.xpose.msra.mxu0 0.0
    %440 = vmatprep.subr.mxu0 0.0
    %441 = vmatpush1.xpose.msra.mxu0 0.0
    %442 = vmatprep.subr.mxu0 0.0
    %443 = vmatpush1.xpose.msra.mxu0 0.0
    %444 = vmatprep.subr.mxu0 0.0
    %445 = vmatpush1.xpose.msra.mxu0 0.0
    %446 = vmatprep.subr.mxu0 0.0
    %447 = vmatpush1.xpose.msra.mxu0 0.0
    %448 = vmatprep.subr.mxu0 0.0
    %449 = vmatpush1.xpose.msra.mxu0 0.0
    %450 = vmatprep.subr.mxu0 0.0
    %451 = vmatpush1.xpose.msra.mxu0 0.0
    %452 = vmatprep.subr.mxu0 0.0
    %453 = vmatpush1.xpose.msra.mxu0 0.0
    %454 = vmatprep.subr.mxu0 0.0
    %455 = vmatpush1.xpose.msra.mxu0 0.0
    %456 = vmatprep.mubr.f32.mxu0 0.0
    %457 = vmatmul.mubr.f32.gmra.mrb[0].mxu0 %v388
    %v458 = vpop.f32.mrb[0].mxu0
    %v459 = vadd.f32 0.0, %v458
    %v460 = vpop.f32.mrb[0].mxu0
    %461 = vdwg.mxu0
    %462 = vrot.lane.b32.xlu0 %v224, 96
    %v463 = vpop.permute.xlu0 %462
    %v464 = vsel %vm235, %v224, 0
    %v466 = vsel %vm235, %v463, 0
    %468 = vmatprep.subr.mxu0 0.0
    %469 = vmatpush1.xpose.msra.mxu0 %v466
    %470 = vmatprep.subr.mxu0 0.0
    %471 = vmatpush1.xpose.msra.mxu0 0.0
    %472 = vmatprep.subr.mxu0 0.0
    %473 = vmatpush1.xpose.msra.mxu0 0.0
    %474 = vmatprep.subr.mxu0 0.0
    %475 = vmatpush1.xpose.msra.mxu0 0.0
    %476 = vmatprep.subr.mxu0 0.0
    %477 = vmatpush1.xpose.msra.mxu0 0.0
    %478 = vmatprep.subr.mxu0 0.0
    %479 = vmatpush1.xpose.msra.mxu0 0.0
    %480 = vmatprep.subr.mxu0 0.0
    %481 = vmatpush1.xpose.msra.mxu0 0.0
    %482 = vmatprep.subr.mxu0 0.0
    %483 = vmatpush1.xpose.msra.mxu0 0.0
    %484 = vmatprep.subr.mxu0 0.0
    %485 = vmatpush1.xpose.msra.mxu0 0.0
    %486 = vmatprep.subr.mxu0 0.0
    %487 = vmatpush1.xpose.msra.mxu0 0.0
    %488 = vmatprep.subr.mxu0 0.0
    %489 = vmatpush1.xpose.msra.mxu0 0.0
    %490 = vmatprep.subr.mxu0 0.0
    %491 = vmatpush1.xpose.msra.mxu0 0.0
    %492 = vmatprep.subr.mxu0 0.0
    %493 = vmatpush1.xpose.msra.mxu0 0.0
    %494 = vmatprep.subr.mxu0 0.0
    %495 = vmatpush1.xpose.msra.mxu0 0.0
    %496 = vmatprep.subr.mxu0 0.0
    %497 = vmatpush1.xpose.msra.mxu0 0.0
    %498 = vmatprep.subr.mxu0 0.0
    %499 = vmatpush1.xpose.msra.mxu0 0.0
    %500 = vmatprep.subr.mxu0 0.0
    %501 = vmatpush1.xpose.msra.mxu0 0.0
    %502 = vmatprep.subr.mxu0 0.0
    %503 = vmatpush1.xpose.msra.mxu0 0.0
    %504 = vmatprep.subr.mxu0 0.0
    %505 = vmatpush1.xpose.msra.mxu0 0.0
    %506 = vmatprep.subr.mxu0 0.0
    %507 = vmatpush1.xpose.msra.mxu0 0.0
    %508 = vmatprep.subr.mxu0 0.0
    %509 = vmatpush1.xpose.msra.mxu0 0.0
    %510 = vmatprep.subr.mxu0 0.0
    %511 = vmatpush1.xpose.msra.mxu0 0.0
    %512 = vmatprep.subr.mxu0 0.0
    %513 = vmatpush1.xpose.msra.mxu0 0.0
    %514 = vmatprep.subr.mxu0 0.0
    %515 = vmatpush1.xpose.msra.mxu0 0.0
    %516 = vmatprep.subr.mxu0 0.0
    %517 = vmatpush1.xpose.msra.mxu0 0.0
    %518 = vmatprep.subr.mxu0 0.0
    %519 = vmatpush1.xpose.msra.mxu0 0.0
    %520 = vmatprep.subr.mxu0 0.0
    %521 = vmatpush1.xpose.msra.mxu0 0.0
    %522 = vmatprep.subr.mxu0 0.0
    %523 = vmatpush1.xpose.msra.mxu0 0.0
    %524 = vmatprep.subr.mxu0 0.0
    %525 = vmatpush1.xpose.msra.mxu0 0.0
    %526 = vmatprep.subr.mxu0 0.0
    %527 = vmatpush1.xpose.msra.mxu0 0.0
    %528 = vmatprep.subr.mxu0 0.0
    %529 = vmatpush1.xpose.msra.mxu0 0.0
    %530 = vmatprep.subr.mxu0 0.0
    %531 = vmatpush1.xpose.msra.mxu0 0.0
    %532 = vmatprep.mubr.f32.mxu0 0.0
    %533 = vmatmul.mubr.f32.gmra.mrb[0].mxu0 %v464
    %v534 = vpop.f32.mrb[0].mxu0
    %v535 = vadd.f32 0.0, %v534
    %v536 = vpop.f32.mrb[0].mxu0
    %537 = vdwg.mxu0
    %538 = vrot.lane.b32.xlu0 %v226, 96
    %v539 = vpop.permute.xlu0 %538
    %v540 = vsel %vm235, %v226, 0
    %v542 = vsel %vm235, %v539, 0
    %544 = vmatprep.subr.mxu0 0.0
    %545 = vmatpush1.xpose.msra.mxu0 %v542
    %546 = vmatprep.subr.mxu0 0.0
    %547 = vmatpush1.xpose.msra.mxu0 0.0
    %548 = vmatprep.subr.mxu0 0.0
    %549 = vmatpush1.xpose.msra.mxu0 0.0
    %550 = vmatprep.subr.mxu0 0.0
    %551 = vmatpush1.xpose.msra.mxu0 0.0
    %552 = vmatprep.subr.mxu0 0.0
    %553 = vmatpush1.xpose.msra.mxu0 0.0
    %554 = vmatprep.subr.mxu0 0.0
    %555 = vmatpush1.xpose.msra.mxu0 0.0
    %556 = vmatprep.subr.mxu0 0.0
    %557 = vmatpush1.xpose.msra.mxu0 0.0
    %558 = vmatprep.subr.mxu0 0.0
    %559 = vmatpush1.xpose.msra.mxu0 0.0
    %560 = vmatprep.subr.mxu0 0.0
    %561 = vmatpush1.xpose.msra.mxu0 0.0
    %562 = vmatprep.subr.mxu0 0.0
    %563 = vmatpush1.xpose.msra.mxu0 0.0
    %564 = vmatprep.subr.mxu0 0.0
    %565 = vmatpush1.xpose.msra.mxu0 0.0
    %566 = vmatprep.subr.mxu0 0.0
    %567 = vmatpush1.xpose.msra.mxu0 0.0
    %568 = vmatprep.subr.mxu0 0.0
    %569 = vmatpush1.xpose.msra.mxu0 0.0
    %570 = vmatprep.subr.mxu0 0.0
    %571 = vmatpush1.xpose.msra.mxu0 0.0
    %572 = vmatprep.subr.mxu0 0.0
    %573 = vmatpush1.xpose.msra.mxu0 0.0
    %574 = vmatprep.subr.mxu0 0.0
    %575 = vmatpush1.xpose.msra.mxu0 0.0
    %576 = vmatprep.subr.mxu0 0.0
    %577 = vmatpush1.xpose.msra.mxu0 0.0
    %578 = vmatprep.subr.mxu0 0.0
    %579 = vmatpush1.xpose.msra.mxu0 0.0
    %580 = vmatprep.subr.mxu0 0.0
    %581 = vmatpush1.xpose.msra.mxu0 0.0
    %582 = vmatprep.subr.mxu0 0.0
    %583 = vmatpush1.xpose.msra.mxu0 0.0
    %584 = vmatprep.subr.mxu0 0.0
    %585 = vmatpush1.xpose.msra.mxu0 0.0
    %586 = vmatprep.subr.mxu0 0.0
    %587 = vmatpush1.xpose.msra.mxu0 0.0
    %588 = vmatprep.subr.mxu0 0.0
    %589 = vmatpush1.xpose.msra.mxu0 0.0
    %590 = vmatprep.subr.mxu0 0.0
    %591 = vmatpush1.xpose.msra.mxu0 0.0
    %592 = vmatprep.subr.mxu0 0.0
    %593 = vmatpush1.xpose.msra.mxu0 0.0
    %594 = vmatprep.subr.mxu0 0.0
    %595 = vmatpush1.xpose.msra.mxu0 0.0
    %596 = vmatprep.subr.mxu0 0.0
    %597 = vmatpush1.xpose.msra.mxu0 0.0
    %598 = vmatprep.subr.mxu0 0.0
    %599 = vmatpush1.xpose.msra.mxu0 0.0
    %600 = vmatprep.subr.mxu0 0.0
    %601 = vmatpush1.xpose.msra.mxu0 0.0
    %602 = vmatprep.subr.mxu0 0.0
    %603 = vmatpush1.xpose.msra.mxu0 0.0
    %604 = vmatprep.subr.mxu0 0.0
    %605 = vmatpush1.xpose.msra.mxu0 0.0
    %606 = vmatprep.subr.mxu0 0.0
    %607 = vmatpush1.xpose.msra.mxu0 0.0
    %608 = vmatprep.mubr.f32.mxu0 0.0
    %609 = vmatmul.mubr.f32.gmra.mrb[0].mxu0 %v540
    %v610 = vpop.f32.mrb[0].mxu0
    %v611 = vadd.f32 0.0, %v610
    %v612 = vpop.f32.mrb[0].mxu0
    %613 = vdwg.mxu0
    %614 = vrot.lane.b32.xlu0 %v228, 96
    %v615 = vpop.permute.xlu0 %614
    %v616 = vsel %vm235, %v228, 0
    %v618 = vsel %vm235, %v615, 0
    %620 = vmatprep.subr.mxu0 0.0
    %621 = vmatpush1.xpose.msra.mxu0 %v618
    %622 = vmatprep.subr.mxu0 0.0
    %623 = vmatpush1.xpose.msra.mxu0 0.0
    %624 = vmatprep.subr.mxu0 0.0
    %625 = vmatpush1.xpose.msra.mxu0 0.0
    %626 = vmatprep.subr.mxu0 0.0
    %627 = vmatpush1.xpose.msra.mxu0 0.0
    %628 = vmatprep.subr.mxu0 0.0
    %629 = vmatpush1.xpose.msra.mxu0 0.0
    %630 = vmatprep.subr.mxu0 0.0
    %631 = vmatpush1.xpose.msra.mxu0 0.0
    %632 = vmatprep.subr.mxu0 0.0
    %633 = vmatpush1.xpose.msra.mxu0 0.0
    %634 = vmatprep.subr.mxu0 0.0
    %635 = vmatpush1.xpose.msra.mxu0 0.0
    %636 = vmatprep.subr.mxu0 0.0
    %637 = vmatpush1.xpose.msra.mxu0 0.0
    %638 = vmatprep.subr.mxu0 0.0
    %639 = vmatpush1.xpose.msra.mxu0 0.0
    %640 = vmatprep.subr.mxu0 0.0
    %641 = vmatpush1.xpose.msra.mxu0 0.0
    %642 = vmatprep.subr.mxu0 0.0
    %643 = vmatpush1.xpose.msra.mxu0 0.0
    %644 = vmatprep.subr.mxu0 0.0
    %645 = vmatpush1.xpose.msra.mxu0 0.0
    %646 = vmatprep.subr.mxu0 0.0
    %647 = vmatpush1.xpose.msra.mxu0 0.0
    %648 = vmatprep.subr.mxu0 0.0
    %649 = vmatpush1.xpose.msra.mxu0 0.0
    %650 = vmatprep.subr.mxu0 0.0
    %651 = vmatpush1.xpose.msra.mxu0 0.0
    %652 = vmatprep.subr.mxu0 0.0
    %653 = vmatpush1.xpose.msra.mxu0 0.0
    %654 = vmatprep.subr.mxu0 0.0
    %655 = vmatpush1.xpose.msra.mxu0 0.0
    %656 = vmatprep.subr.mxu0 0.0
    %657 = vmatpush1.xpose.msra.mxu0 0.0
    %658 = vmatprep.subr.mxu0 0.0
    %659 = vmatpush1.xpose.msra.mxu0 0.0
    %660 = vmatprep.subr.mxu0 0.0
    %661 = vmatpush1.xpose.msra.mxu0 0.0
    %662 = vmatprep.subr.mxu0 0.0
    %663 = vmatpush1.xpose.msra.mxu0 0.0
    %664 = vmatprep.subr.mxu0 0.0
    %665 = vmatpush1.xpose.msra.mxu0 0.0
    %666 = vmatprep.subr.mxu0 0.0
    %667 = vmatpush1.xpose.msra.mxu0 0.0
    %668 = vmatprep.subr.mxu0 0.0
    %669 = vmatpush1.xpose.msra.mxu0 0.0
    %670 = vmatprep.subr.mxu0 0.0
    %671 = vmatpush1.xpose.msra.mxu0 0.0
    %672 = vmatprep.subr.mxu0 0.0
    %673 = vmatpush1.xpose.msra.mxu0 0.0
    %674 = vmatprep.subr.mxu0 0.0
    %675 = vmatpush1.xpose.msra.mxu0 0.0
    %676 = vmatprep.subr.mxu0 0.0
    %677 = vmatpush1.xpose.msra.mxu0 0.0
    %678 = vmatprep.subr.mxu0 0.0
    %679 = vmatpush1.xpose.msra.mxu0 0.0
    %680 = vmatprep.subr.mxu0 0.0
    %681 = vmatpush1.xpose.msra.mxu0 0.0
    %682 = vmatprep.subr.mxu0 0.0
    %683 = vmatpush1.xpose.msra.mxu0 0.0
    %684 = vmatprep.mubr.f32.mxu0 0.0
    %685 = vmatmul.mubr.f32.gmra.mrb[0].mxu0 %v616
    %v686 = vpop.f32.mrb[0].mxu0
    %v687 = vadd.f32 0.0, %v686
    %v688 = vpop.f32.mrb[0].mxu0
    %689 = vdwg.mxu0
    %690 = vrot.lane.b32.xlu0 %v230, 96
    %v691 = vpop.permute.xlu0 %690
    %v692 = vsel %vm235, %v230, 0
    %v694 = vsel %vm235, %v691, 0
    %696 = vmatprep.subr.mxu0 0.0
    %697 = vmatpush1.xpose.msra.mxu0 %v694
    %698 = vmatprep.subr.mxu0 0.0
    %699 = vmatpush1.xpose.msra.mxu0 0.0
    %700 = vmatprep.subr.mxu0 0.0
    %701 = vmatpush1.xpose.msra.mxu0 0.0
    %702 = vmatprep.subr.mxu0 0.0
    %703 = vmatpush1.xpose.msra.mxu0 0.0
    %704 = vmatprep.subr.mxu0 0.0
    %705 = vmatpush1.xpose.msra.mxu0 0.0
    %706 = vmatprep.subr.mxu0 0.0
    %707 = vmatpush1.xpose.msra.mxu0 0.0
    %708 = vmatprep.subr.mxu0 0.0
    %709 = vmatpush1.xpose.msra.mxu0 0.0
    %710 = vmatprep.subr.mxu0 0.0
    %711 = vmatpush1.xpose.msra.mxu0 0.0
    %712 = vmatprep.subr.mxu0 0.0
    %713 = vmatpush1.xpose.msra.mxu0 0.0
    %714 = vmatprep.subr.mxu0 0.0
    %715 = vmatpush1.xpose.msra.mxu0 0.0
    %716 = vmatprep.subr.mxu0 0.0
    %717 = vmatpush1.xpose.msra.mxu0 0.0
    %718 = vmatprep.subr.mxu0 0.0
    %719 = vmatpush1.xpose.msra.mxu0 0.0
    %720 = vmatprep.subr.mxu0 0.0
    %721 = vmatpush1.xpose.msra.mxu0 0.0
    %722 = vmatprep.subr.mxu0 0.0
    %723 = vmatpush1.xpose.msra.mxu0 0.0
    %724 = vmatprep.subr.mxu0 0.0
    %725 = vmatpush1.xpose.msra.mxu0 0.0
    %726 = vmatprep.subr.mxu0 0.0
    %727 = vmatpush1.xpose.msra.mxu0 0.0
    %728 = vmatprep.subr.mxu0 0.0
    %729 = vmatpush1.xpose.msra.mxu0 0.0
    %730 = vmatprep.subr.mxu0 0.0
    %731 = vmatpush1.xpose.msra.mxu0 0.0
    %732 = vmatprep.subr.mxu0 0.0
    %733 = vmatpush1.xpose.msra.mxu0 0.0
    %734 = vmatprep.subr.mxu0 0.0
    %735 = vmatpush1.xpose.msra.mxu0 0.0
    %736 = vmatprep.subr.mxu0 0.0
    %737 = vmatpush1.xpose.msra.mxu0 0.0
    %738 = vmatprep.subr.mxu0 0.0
    %739 = vmatpush1.xpose.msra.mxu0 0.0
    %740 = vmatprep.subr.mxu0 0.0
    %741 = vmatpush1.xpose.msra.mxu0 0.0
    %742 = vmatprep.subr.mxu0 0.0
    %743 = vmatpush1.xpose.msra.mxu0 0.0
    %744 = vmatprep.subr.mxu0 0.0
    %745 = vmatpush1.xpose.msra.mxu0 0.0
    %746 = vmatprep.subr.mxu0 0.0
    %747 = vmatpush1.xpose.msra.mxu0 0.0
    %748 = vmatprep.subr.mxu0 0.0
    %749 = vmatpush1.xpose.msra.mxu0 0.0
    %750 = vmatprep.subr.mxu0 0.0
    %751 = vmatpush1.xpose.msra.mxu0 0.0
    %752 = vmatprep.subr.mxu0 0.0
    %753 = vmatpush1.xpose.msra.mxu0 0.0
    %754 = vmatprep.subr.mxu0 0.0
    %755 = vmatpush1.xpose.msra.mxu0 0.0
    %756 = vmatprep.subr.mxu0 0.0
    %757 = vmatpush1.xpose.msra.mxu0 0.0
    %758 = vmatprep.subr.mxu0 0.0
    %759 = vmatpush1.xpose.msra.mxu0 0.0
    %760 = vmatprep.mubr.f32.mxu0 0.0
    %761 = vmatmul.mubr.f32.gmra.mrb[0].mxu0 %v692
    %v762 = vpop.f32.mrb[0].mxu0
    %v763 = vadd.f32 0.0, %v762
    %v764 = vpop.f32.mrb[0].mxu0
    %765 = vdwg.mxu0
    %766 = vrot.lane.b32.xlu0 %v232, 96
    %v767 = vpop.permute.xlu0 %766
    %v768 = vsel %vm235, %v232, 0
    %v770 = vsel %vm235, %v767, 0
    %772 = vmatprep.subr.mxu0 0.0
    %773 = vmatpush1.xpose.msra.mxu0 %v770
    %774 = vmatprep.subr.mxu0 0.0
    %775 = vmatpush1.xpose.msra.mxu0 0.0
    %776 = vmatprep.subr.mxu0 0.0
    %777 = vmatpush1.xpose.msra.mxu0 0.0
    %778 = vmatprep.subr.mxu0 0.0
    %779 = vmatpush1.xpose.msra.mxu0 0.0
    %780 = vmatprep.subr.mxu0 0.0
    %781 = vmatpush1.xpose.msra.mxu0 0.0
    %782 = vmatprep.subr.mxu0 0.0
    %783 = vmatpush1.xpose.msra.mxu0 0.0
    %784 = vmatprep.subr.mxu0 0.0
    %785 = vmatpush1.xpose.msra.mxu0 0.0
    %786 = vmatprep.subr.mxu0 0.0
    %787 = vmatpush1.xpose.msra.mxu0 0.0
    %788 = vmatprep.subr.mxu0 0.0
    %789 = vmatpush1.xpose.msra.mxu0 0.0
    %790 = vmatprep.subr.mxu0 0.0
    %791 = vmatpush1.xpose.msra.mxu0 0.0
    %792 = vmatprep.subr.mxu0 0.0
    %793 = vmatpush1.xpose.msra.mxu0 0.0
    %794 = vmatprep.subr.mxu0 0.0
    %795 = vmatpush1.xpose.msra.mxu0 0.0
    %796 = vmatprep.subr.mxu0 0.0
    %797 = vmatpush1.xpose.msra.mxu0 0.0
    %798 = vmatprep.subr.mxu0 0.0
    %799 = vmatpush1.xpose.msra.mxu0 0.0
    %800 = vmatprep.subr.mxu0 0.0
    %801 = vmatpush1.xpose.msra.mxu0 0.0
    %802 = vmatprep.subr.mxu0 0.0
    %803 = vmatpush1.xpose.msra.mxu0 0.0
    %804 = vmatprep.subr.mxu0 0.0
    %805 = vmatpush1.xpose.msra.mxu0 0.0
    %806 = vmatprep.subr.mxu0 0.0
    %807 = vmatpush1.xpose.msra.mxu0 0.0
    %808 = vmatprep.subr.mxu0 0.0
    %809 = vmatpush1.xpose.msra.mxu0 0.0
    %810 = vmatprep.subr.mxu0 0.0
    %811 = vmatpush1.xpose.msra.mxu0 0.0
    %812 = vmatprep.subr.mxu0 0.0
    %813 = vmatpush1.xpose.msra.mxu0 0.0
    %814 = vmatprep.subr.mxu0 0.0
    %815 = vmatpush1.xpose.msra.mxu0 0.0
    %816 = vmatprep.subr.mxu0 0.0
    %817 = vmatpush1.xpose.msra.mxu0 0.0
    %818 = vmatprep.subr.mxu0 0.0
    %819 = vmatpush1.xpose.msra.mxu0 0.0
    %820 = vmatprep.subr.mxu0 0.0
    %821 = vmatpush1.xpose.msra.mxu0 0.0
    %822 = vmatprep.subr.mxu0 0.0
    %823 = vmatpush1.xpose.msra.mxu0 0.0
    %824 = vmatprep.subr.mxu0 0.0
    %825 = vmatpush1.xpose.msra.mxu0 0.0
    %826 = vmatprep.subr.mxu0 0.0
    %827 = vmatpush1.xpose.msra.mxu0 0.0
    %828 = vmatprep.subr.mxu0 0.0
    %829 = vmatpush1.xpose.msra.mxu0 0.0
    %830 = vmatprep.subr.mxu0 0.0
    %831 = vmatpush1.xpose.msra.mxu0 0.0
    %832 = vmatprep.subr.mxu0 0.0
    %833 = vmatpush1.xpose.msra.mxu0 0.0
    %834 = vmatprep.subr.mxu0 0.0
    %835 = vmatpush1.xpose.msra.mxu0 0.0
    %836 = vmatprep.mubr.f32.mxu0 0.0
    %837 = vmatmul.mubr.f32.gmra.mrb[0].mxu0 %v768
    %v838 = vpop.f32.mrb[0].mxu0
    %v839 = vadd.f32 0.0, %v838
    %v840 = vpop.f32.mrb[0].mxu0
    %841 = vdwg.mxu0
    %v842 = vmul.f32 %v307, 0.35355338
    %v843 = vmul.f32 %v383, 0.35355338
    %v844 = vmul.f32 %v459, 0.35355338
    %v845 = vmul.f32 %v535, 0.35355338
    %v846 = vmul.f32 %v611, 0.35355338
    %v847 = vmul.f32 %v687, 0.35355338
    %v848 = vmul.f32 %v763, 0.35355338
    %v849 = vmul.f32 %v839, 0.35355338
    %v852 = vlaneseq
    %v853 = vshrl.u32 %v852, 7
    %v854 = vsub.s32 0, %v853
    %v855 = vrot.slane %v125, %v854
    %v856 = vlaneseq
    %v857 = vshrl.u32 %v856, 7
    %v858 = vsub.s32 0, %v857
    %v859 = vrot.slane %v126, %v858
    %v862 = vadd.f32 %v842, %v855
    %v863 = vadd.f32 %v843, %v859
    %v864 = vadd.f32 %v844, %v855
    %v865 = vadd.f32 %v845, %v859
    %v866 = vadd.f32 %v846, %v855
    %v867 = vadd.f32 %v847, %v859
    %v868 = vadd.f32 %v848, %v855
    %v869 = vadd.f32 %v849, %v859
    %v870 = vsel %vm235, %v862, -inf
    %871 = vmax.xlane.f32.xlu0 %v870
    %v872 = vpop.xlane.xlu0 %871
    %v873 = vsel %vm235, %v863, -inf
    %874 = vmax.xlane.f32.xlu0 %v873
    %v875 = vpop.xlane.xlu0 %874
    %v876 = vsel %vm235, %v864, -inf
    %877 = vmax.xlane.f32.xlu0 %v876
    %v878 = vpop.xlane.xlu0 %877
    %v879 = vsel %vm235, %v865, -inf
    %880 = vmax.xlane.f32.xlu0 %v879
    %v881 = vpop.xlane.xlu0 %880
    %v882 = vsel %vm235, %v866, -inf
    %883 = vmax.xlane.f32.xlu0 %v882
    %v884 = vpop.xlane.xlu0 %883
    %v885 = vsel %vm235, %v867, -inf
    %886 = vmax.xlane.f32.xlu0 %v885
    %v887 = vpop.xlane.xlu0 %886
    %v888 = vsel %vm235, %v868, -inf
    %889 = vmax.xlane.f32.xlu0 %v888
    %v890 = vpop.xlane.xlu0 %889
    %v891 = vsel %vm235, %v869, -inf
    %892 = vmax.xlane.f32.xlu0 %v891
    %v893 = vpop.xlane.xlu0 %892
    %v894 = vsub.f32 %v862, %v872
    %v895 = vsub.f32 %v863, %v875
    %v896 = vsub.f32 %v864, %v878
    %v897 = vsub.f32 %v865, %v881
    %v898 = vsub.f32 %v866, %v884
    %v899 = vsub.f32 %v867, %v887
    %v900 = vsub.f32 %v868, %v890
    %v901 = vsub.f32 %v869, %v893
    %v902 = vmul.f32 %v894, 1.442695
    %v903 = vpow.pop %v902
    %v904 = vmul.f32 %v895, 1.442695
    %v905 = vpow.pop %v904
    %v906 = vmul.f32 %v896, 1.442695
    %v907 = vpow.pop %v906
    %v908 = vmul.f32 %v897, 1.442695
    %v909 = vpow.pop %v908
    %v910 = vmul.f32 %v898, 1.442695
    %v911 = vpow.pop %v910
    %v912 = vmul.f32 %v899, 1.442695
    %v913 = vpow.pop %v912
    %v914 = vmul.f32 %v900, 1.442695
    %v915 = vpow.pop %v914
    %v916 = vmul.f32 %v901, 1.442695
    %v917 = vpow.pop %v916
    %v918 = vsel %vm235, %v903, 0.0
    %919 = vadd.xlane.f32.xlu0 %v918
    %v920 = vpop.xlane.xlu0 %919
    %v921 = vsel %vm235, %v905, 0.0
    %922 = vadd.xlane.f32.xlu0 %v921
    %v923 = vpop.xlane.xlu0 %922
    %v924 = vsel %vm235, %v907, 0.0
    %925 = vadd.xlane.f32.xlu0 %v924
    %v926 = vpop.xlane.xlu0 %925
    %v927 = vsel %vm235, %v909, 0.0
    %928 = vadd.xlane.f32.xlu0 %v927
    %v929 = vpop.xlane.xlu0 %928
    %v930 = vsel %vm235, %v911, 0.0
    %931 = vadd.xlane.f32.xlu0 %v930
    %v932 = vpop.xlane.xlu0 %931
    %v933 = vsel %vm235, %v913, 0.0
    %934 = vadd.xlane.f32.xlu0 %v933
    %v935 = vpop.xlane.xlu0 %934
    %v936 = vsel %vm235, %v915, 0.0
    %937 = vadd.xlane.f32.xlu0 %v936
    %v938 = vpop.xlane.xlu0 %937
    %v939 = vsel %vm235, %v917, 0.0
    %940 = vadd.xlane.f32.xlu0 %v939
    %v941 = vpop.xlane.xlu0 %940
    %v942 = vrcp.pop %v920
    %v943 = vmul.f32 %v903, %v942
    %v944 = vrcp.pop %v923
    %v945 = vmul.f32 %v905, %v944
    %v946 = vrcp.pop %v926
    %v947 = vmul.f32 %v907, %v946
    %v948 = vrcp.pop %v929
    %v949 = vmul.f32 %v909, %v948
    %v950 = vrcp.pop %v932
    %v951 = vmul.f32 %v911, %v950
    %v952 = vrcp.pop %v935
    %v953 = vmul.f32 %v913, %v952
    %v954 = vrcp.pop %v938
    %v955 = vmul.f32 %v915, %v954
    %v956 = vrcp.pop %v941
    %v957 = vmul.f32 %v917, %v956
    %958 = vrot.lane.b32.xlu0 %v211, 64
    %v959 = vpop.permute.xlu0 %958
    %v962 = vsel %vm235, %v943, 0
    %964 = vmatprep.subr.mxu0 0.0
    %965 = vmatpush1.msra.mxu0 %v959
    %966 = vmatprep.subr.mxu0 0.0
    %967 = vmatpush1.msra.mxu0 0.0
    %968 = vmatprep.subr.mxu0 0.0
    %969 = vmatpush1.msra.mxu0 0.0
    %970 = vmatprep.subr.mxu0 0.0
    %971 = vmatpush1.msra.mxu0 0.0
    %972 = vmatprep.subr.mxu0 0.0
    %973 = vmatpush1.msra.mxu0 0.0
    %974 = vmatprep.subr.mxu0 0.0
    %975 = vmatpush1.msra.mxu0 0.0
    %976 = vmatprep.subr.mxu0 0.0
    %977 = vmatpush1.msra.mxu0 0.0
    %978 = vmatprep.subr.mxu0 0.0
    %979 = vmatpush1.msra.mxu0 0.0
    %980 = vmatprep.subr.mxu0 0.0
    %981 = vmatpush1.msra.mxu0 0.0
    %982 = vmatprep.subr.mxu0 0.0
    %983 = vmatpush1.msra.mxu0 0.0
    %984 = vmatprep.subr.mxu0 0.0
    %985 = vmatpush1.msra.mxu0 0.0
    %986 = vmatprep.subr.mxu0 0.0
    %987 = vmatpush1.msra.mxu0 0.0
    %988 = vmatprep.subr.mxu0 0.0
    %989 = vmatpush1.msra.mxu0 0.0
    %990 = vmatprep.subr.mxu0 0.0
    %991 = vmatpush1.msra.mxu0 0.0
    %992 = vmatprep.subr.mxu0 0.0
    %993 = vmatpush1.msra.mxu0 0.0
    %994 = vmatprep.subr.mxu0 0.0
    %995 = vmatpush1.msra.mxu0 0.0
    %996 = vmatprep.subr.mxu0 0.0
    %997 = vmatpush1.msra.mxu0 0.0
    %998 = vmatprep.subr.mxu0 0.0
    %999 = vmatpush1.msra.mxu0 0.0
    %1000 = vmatprep.subr.mxu0 0.0
    %1001 = vmatpush1.msra.mxu0 0.0
    %1002 = vmatprep.subr.mxu0 0.0
    %1003 = vmatpush1.msra.mxu0 0.0
    %1004 = vmatprep.subr.mxu0 0.0
    %1005 = vmatpush1.msra.mxu0 0.0
    %1006 = vmatprep.subr.mxu0 0.0
    %1007 = vmatpush1.msra.mxu0 0.0
    %1008 = vmatprep.subr.mxu0 0.0
    %1009 = vmatpush1.msra.mxu0 0.0
    %1010 = vmatprep.subr.mxu0 0.0
    %1011 = vmatpush1.msra.mxu0 0.0
    %1012 = vmatprep.subr.mxu0 0.0
    %1013 = vmatpush1.msra.mxu0 0.0
    %1014 = vmatprep.subr.mxu0 0.0
    %1015 = vmatpush1.msra.mxu0 0.0
    %1016 = vmatprep.subr.mxu0 0.0
    %1017 = vmatpush1.msra.mxu0 0.0
    %1018 = vmatprep.subr.mxu0 0.0
    %1019 = vmatpush1.msra.mxu0 0.0
    %1020 = vmatprep.subr.mxu0 0.0
    %1021 = vmatpush1.msra.mxu0 0.0
    %1022 = vmatprep.subr.mxu0 0.0
    %1023 = vmatpush1.msra.mxu0 0.0
    %1024 = vmatprep.subr.mxu0 0.0
    %1025 = vmatpush1.msra.mxu0 0.0
    %1026 = vmatprep.subr.mxu0 0.0
    %1027 = vmatpush1.msra.mxu0 0.0
    %1028 = vmatprep.mubr.f32.mxu0 0.0
    %1029 = vmatmul.mubr.f32.gmra.mrb[0].mxu0 %v962
    %v1030 = vpop.f32.mrb[0].mxu0
    %v1031 = vadd.f32 0.0, %v1030
    %v1032 = vpop.f32.mrb[0].mxu0
    %1033 = vdwg.mxu0
    %1034 = vrot.lane.b32.xlu0 %v216, 64
    %v1035 = vpop.permute.xlu0 %1034
    %v1038 = vsel %vm235, %v945, 0
    %1040 = vmatprep.subr.mxu0 0.0
    %1041 = vmatpush1.msra.mxu0 %v1035
    %1042 = vmatprep.subr.mxu0 0.0
    %1043 = vmatpush1.msra.mxu0 0.0
    %1044 = vmatprep.subr.mxu0 0.0
    %1045 = vmatpush1.msra.mxu0 0.0
    %1046 = vmatprep.subr.mxu0 0.0
    %1047 = vmatpush1.msra.mxu0 0.0
    %1048 = vmatprep.subr.mxu0 0.0
    %1049 = vmatpush1.msra.mxu0 0.0
    %1050 = vmatprep.subr.mxu0 0.0
    %1051 = vmatpush1.msra.mxu0 0.0
    %1052 = vmatprep.subr.mxu0 0.0
    %1053 = vmatpush1.msra.mxu0 0.0
    %1054 = vmatprep.subr.mxu0 0.0
    %1055 = vmatpush1.msra.mxu0 0.0
    %1056 = vmatprep.subr.mxu0 0.0
    %1057 = vmatpush1.msra.mxu0 0.0
    %1058 = vmatprep.subr.mxu0 0.0
    %1059 = vmatpush1.msra.mxu0 0.0
    %1060 = vmatprep.subr.mxu0 0.0
    %1061 = vmatpush1.msra.mxu0 0.0
    %1062 = vmatprep.subr.mxu0 0.0
    %1063 = vmatpush1.msra.mxu0 0.0
    %1064 = vmatprep.subr.mxu0 0.0
    %1065 = vmatpush1.msra.mxu0 0.0
    %1066 = vmatprep.subr.mxu0 0.0
    %1067 = vmatpush1.msra.mxu0 0.0
    %1068 = vmatprep.subr.mxu0 0.0
    %1069 = vmatpush1.msra.mxu0 0.0
    %1070 = vmatprep.subr.mxu0 0.0
    %1071 = vmatpush1.msra.mxu0 0.0
    %1072 = vmatprep.subr.mxu0 0.0
    %1073 = vmatpush1.msra.mxu0 0.0
    %1074 = vmatprep.subr.mxu0 0.0
    %1075 = vmatpush1.msra.mxu0 0.0
    %1076 = vmatprep.subr.mxu0 0.0
    %1077 = vmatpush1.msra.mxu0 0.0
    %1078 = vmatprep.subr.mxu0 0.0
    %1079 = vmatpush1.msra.mxu0 0.0
    %1080 = vmatprep.subr.mxu0 0.0
    %1081 = vmatpush1.msra.mxu0 0.0
    %1082 = vmatprep.subr.mxu0 0.0
    %1083 = vmatpush1.msra.mxu0 0.0
    %1084 = vmatprep.subr.mxu0 0.0
    %1085 = vmatpush1.msra.mxu0 0.0
    %1086 = vmatprep.subr.mxu0 0.0
    %1087 = vmatpush1.msra.mxu0 0.0
    %1088 = vmatprep.subr.mxu0 0.0
    %1089 = vmatpush1.msra.mxu0 0.0
    %1090 = vmatprep.subr.mxu0 0.0
    %1091 = vmatpush1.msra.mxu0 0.0
    %1092 = vmatprep.subr.mxu0 0.0
    %1093 = vmatpush1.msra.mxu0 0.0
    %1094 = vmatprep.subr.mxu0 0.0
    %1095 = vmatpush1.msra.mxu0 0.0
    %1096 = vmatprep.subr.mxu0 0.0
    %1097 = vmatpush1.msra.mxu0 0.0
    %1098 = vmatprep.subr.mxu0 0.0
    %1099 = vmatpush1.msra.mxu0 0.0
    %1100 = vmatprep.subr.mxu0 0.0
    %1101 = vmatpush1.msra.mxu0 0.0
    %1102 = vmatprep.subr.mxu0 0.0
    %1103 = vmatpush1.msra.mxu0 0.0
    %1104 = vmatprep.mubr.f32.mxu0 0.0
    %1105 = vmatmul.mubr.f32.gmra.mrb[0].mxu0 %v1038
    %v1106 = vpop.f32.mrb[0].mxu0
    %v1107 = vadd.f32 0.0, %v1106
    %v1108 = vpop.f32.mrb[0].mxu0
    %1109 = vdwg.mxu0
    %1110 = vrot.lane.b32.xlu0 %v222, 64
    %v1111 = vpop.permute.xlu0 %1110
    %v1114 = vsel %vm235, %v947, 0
    %1116 = vmatprep.subr.mxu0 0.0
    %1117 = vmatpush1.msra.mxu0 %v1111
    %1118 = vmatprep.subr.mxu0 0.0
    %1119 = vmatpush1.msra.mxu0 0.0
    %1120 = vmatprep.subr.mxu0 0.0
    %1121 = vmatpush1.msra.mxu0 0.0
    %1122 = vmatprep.subr.mxu0 0.0
    %1123 = vmatpush1.msra.mxu0 0.0
    %1124 = vmatprep.subr.mxu0 0.0
    %1125 = vmatpush1.msra.mxu0 0.0
    %1126 = vmatprep.subr.mxu0 0.0
    %1127 = vmatpush1.msra.mxu0 0.0
    %1128 = vmatprep.subr.mxu0 0.0
    %1129 = vmatpush1.msra.mxu0 0.0
    %1130 = vmatprep.subr.mxu0 0.0
    %1131 = vmatpush1.msra.mxu0 0.0
    %1132 = vmatprep.subr.mxu0 0.0
    %1133 = vmatpush1.msra.mxu0 0.0
    %1134 = vmatprep.subr.mxu0 0.0
    %1135 = vmatpush1.msra.mxu0 0.0
    %1136 = vmatprep.subr.mxu0 0.0
    %1137 = vmatpush1.msra.mxu0 0.0
    %1138 = vmatprep.subr.mxu0 0.0
    %1139 = vmatpush1.msra.mxu0 0.0
    %1140 = vmatprep.subr.mxu0 0.0
    %1141 = vmatpush1.msra.mxu0 0.0
    %1142 = vmatprep.subr.mxu0 0.0
    %1143 = vmatpush1.msra.mxu0 0.0
    %1144 = vmatprep.subr.mxu0 0.0
    %1145 = vmatpush1.msra.mxu0 0.0
    %1146 = vmatprep.subr.mxu0 0.0
    %1147 = vmatpush1.msra.mxu0 0.0
    %1148 = vmatprep.subr.mxu0 0.0
    %1149 = vmatpush1.msra.mxu0 0.0
    %1150 = vmatprep.subr.mxu0 0.0
    %1151 = vmatpush1.msra.mxu0 0.0
    %1152 = vmatprep.subr.mxu0 0.0
    %1153 = vmatpush1.msra.mxu0 0.0
    %1154 = vmatprep.subr.mxu0 0.0
    %1155 = vmatpush1.msra.mxu0 0.0
    %1156 = vmatprep.subr.mxu0 0.0
    %1157 = vmatpush1.msra.mxu0 0.0
    %1158 = vmatprep.subr.mxu0 0.0
    %1159 = vmatpush1.msra.mxu0 0.0
    %1160 = vmatprep.subr.mxu0 0.0
    %1161 = vmatpush1.msra.mxu0 0.0
    %1162 = vmatprep.subr.mxu0 0.0
    %1163 = vmatpush1.msra.mxu0 0.0
    %1164 = vmatprep.subr.mxu0 0.0
    %1165 = vmatpush1.msra.mxu0 0.0
    %1166 = vmatprep.subr.mxu0 0.0
    %1167 = vmatpush1.msra.mxu0 0.0
    %1168 = vmatprep.subr.mxu0 0.0
    %1169 = vmatpush1.msra.mxu0 0.0
    %1170 = vmatprep.subr.mxu0 0.0
    %1171 = vmatpush1.msra.mxu0 0.0
    %1172 = vmatprep.subr.mxu0 0.0
    %1173 = vmatpush1.msra.mxu0 0.0
    %1174 = vmatprep.subr.mxu0 0.0
    %1175 = vmatpush1.msra.mxu0 0.0
    %1176 = vmatprep.subr.mxu0 0.0
    %1177 = vmatpush1.msra.mxu0 0.0
    %1178 = vmatprep.subr.mxu0 0.0
    %1179 = vmatpush1.msra.mxu0 0.0
    %1180 = vmatprep.mubr.f32.mxu0 0.0
    %1181 = vmatmul.mubr.f32.gmra.mrb[0].mxu0 %v1114
    %v1182 = vpop.f32.mrb[0].mxu0
    %v1183 = vadd.f32 0.0, %v1182
    %v1184 = vpop.f32.mrb[0].mxu0
    %1185 = vdwg.mxu0
    %1186 = vrot.lane.b32.xlu0 %v224, 64
    %v1187 = vpop.permute.xlu0 %1186
    %v1190 = vsel %vm235, %v949, 0
    %1192 = vmatprep.subr.mxu0 0.0
    %1193 = vmatpush1.msra.mxu0 %v1187
    %1194 = vmatprep.subr.mxu0 0.0
    %1195 = vmatpush1.msra.mxu0 0.0
    %1196 = vmatprep.subr.mxu0 0.0
    %1197 = vmatpush1.msra.mxu0 0.0
    %1198 = vmatprep.subr.mxu0 0.0
    %1199 = vmatpush1.msra.mxu0 0.0
    %1200 = vmatprep.subr.mxu0 0.0
    %1201 = vmatpush1.msra.mxu0 0.0
    %1202 = vmatprep.subr.mxu0 0.0
    %1203 = vmatpush1.msra.mxu0 0.0
    %1204 = vmatprep.subr.mxu0 0.0
    %1205 = vmatpush1.msra.mxu0 0.0
    %1206 = vmatprep.subr.mxu0 0.0
    %1207 = vmatpush1.msra.mxu0 0.0
    %1208 = vmatprep.subr.mxu0 0.0
    %1209 = vmatpush1.msra.mxu0 0.0
    %1210 = vmatprep.subr.mxu0 0.0
    %1211 = vmatpush1.msra.mxu0 0.0
    %1212 = vmatprep.subr.mxu0 0.0
    %1213 = vmatpush1.msra.mxu0 0.0
    %1214 = vmatprep.subr.mxu0 0.0
    %1215 = vmatpush1.msra.mxu0 0.0
    %1216 = vmatprep.subr.mxu0 0.0
    %1217 = vmatpush1.msra.mxu0 0.0
    %1218 = vmatprep.subr.mxu0 0.0
    %1219 = vmatpush1.msra.mxu0 0.0
    %1220 = vmatprep.subr.mxu0 0.0
    %1221 = vmatpush1.msra.mxu0 0.0
    %1222 = vmatprep.subr.mxu0 0.0
    %1223 = vmatpush1.msra.mxu0 0.0
    %1224 = vmatprep.subr.mxu0 0.0
    %1225 = vmatpush1.msra.mxu0 0.0
    %1226 = vmatprep.subr.mxu0 0.0
    %1227 = vmatpush1.msra.mxu0 0.0
    %1228 = vmatprep.subr.mxu0 0.0
    %1229 = vmatpush1.msra.mxu0 0.0
    %1230 = vmatprep.subr.mxu0 0.0
    %1231 = vmatpush1.msra.mxu0 0.0
    %1232 = vmatprep.subr.mxu0 0.0
    %1233 = vmatpush1.msra.mxu0 0.0
    %1234 = vmatprep.subr.mxu0 0.0
    %1235 = vmatpush1.msra.mxu0 0.0
    %1236 = vmatprep.subr.mxu0 0.0
    %1237 = vmatpush1.msra.mxu0 0.0
    %1238 = vmatprep.subr.mxu0 0.0
    %1239 = vmatpush1.msra.mxu0 0.0
    %1240 = vmatprep.subr.mxu0 0.0
    %1241 = vmatpush1.msra.mxu0 0.0
    %1242 = vmatprep.subr.mxu0 0.0
    %1243 = vmatpush1.msra.mxu0 0.0
    %1244 = vmatprep.subr.mxu0 0.0
    %1245 = vmatpush1.msra.mxu0 0.0
    %1246 = vmatprep.subr.mxu0 0.0
    %1247 = vmatpush1.msra.mxu0 0.0
    %1248 = vmatprep.subr.mxu0 0.0
    %1249 = vmatpush1.msra.mxu0 0.0
    %1250 = vmatprep.subr.mxu0 0.0
    %1251 = vmatpush1.msra.mxu0 0.0
    %1252 = vmatprep.subr.mxu0 0.0
    %1253 = vmatpush1.msra.mxu0 0.0
    %1254 = vmatprep.subr.mxu0 0.0
    %1255 = vmatpush1.msra.mxu0 0.0
    %1256 = vmatprep.mubr.f32.mxu0 0.0
    %1257 = vmatmul.mubr.f32.gmra.mrb[0].mxu0 %v1190
    %v1258 = vpop.f32.mrb[0].mxu0
    %v1259 = vadd.f32 0.0, %v1258
    %v1260 = vpop.f32.mrb[0].mxu0
    %1261 = vdwg.mxu0
    %1262 = vrot.lane.b32.xlu0 %v226, 64
    %v1263 = vpop.permute.xlu0 %1262
    %v1266 = vsel %vm235, %v951, 0
    %1268 = vmatprep.subr.mxu0 0.0
    %1269 = vmatpush1.msra.mxu0 %v1263
    %1270 = vmatprep.subr.mxu0 0.0
    %1271 = vmatpush1.msra.mxu0 0.0
    %1272 = vmatprep.subr.mxu0 0.0
    %1273 = vmatpush1.msra.mxu0 0.0
    %1274 = vmatprep.subr.mxu0 0.0
    %1275 = vmatpush1.msra.mxu0 0.0
    %1276 = vmatprep.subr.mxu0 0.0
    %1277 = vmatpush1.msra.mxu0 0.0
    %1278 = vmatprep.subr.mxu0 0.0
    %1279 = vmatpush1.msra.mxu0 0.0
    %1280 = vmatprep.subr.mxu0 0.0
    %1281 = vmatpush1.msra.mxu0 0.0
    %1282 = vmatprep.subr.mxu0 0.0
    %1283 = vmatpush1.msra.mxu0 0.0
    %1284 = vmatprep.subr.mxu0 0.0
    %1285 = vmatpush1.msra.mxu0 0.0
    %1286 = vmatprep.subr.mxu0 0.0
    %1287 = vmatpush1.msra.mxu0 0.0
    %1288 = vmatprep.subr.mxu0 0.0
    %1289 = vmatpush1.msra.mxu0 0.0
    %1290 = vmatprep.subr.mxu0 0.0
    %1291 = vmatpush1.msra.mxu0 0.0
    %1292 = vmatprep.subr.mxu0 0.0
    %1293 = vmatpush1.msra.mxu0 0.0
    %1294 = vmatprep.subr.mxu0 0.0
    %1295 = vmatpush1.msra.mxu0 0.0
    %1296 = vmatprep.subr.mxu0 0.0
    %1297 = vmatpush1.msra.mxu0 0.0
    %1298 = vmatprep.subr.mxu0 0.0
    %1299 = vmatpush1.msra.mxu0 0.0
    %1300 = vmatprep.subr.mxu0 0.0
    %1301 = vmatpush1.msra.mxu0 0.0
    %1302 = vmatprep.subr.mxu0 0.0
    %1303 = vmatpush1.msra.mxu0 0.0
    %1304 = vmatprep.subr.mxu0 0.0
    %1305 = vmatpush1.msra.mxu0 0.0
    %1306 = vmatprep.subr.mxu0 0.0
    %1307 = vmatpush1.msra.mxu0 0.0
    %1308 = vmatprep.subr.mxu0 0.0
    %1309 = vmatpush1.msra.mxu0 0.0
    %1310 = vmatprep.subr.mxu0 0.0
    %1311 = vmatpush1.msra.mxu0 0.0
    %1312 = vmatprep.subr.mxu0 0.0
    %1313 = vmatpush1.msra.mxu0 0.0
    %1314 = vmatprep.subr.mxu0 0.0
    %1315 = vmatpush1.msra.mxu0 0.0
    %1316 = vmatprep.subr.mxu0 0.0
    %1317 = vmatpush1.msra.mxu0 0.0
    %1318 = vmatprep.subr.mxu0 0.0
    %1319 = vmatpush1.msra.mxu0 0.0
    %1320 = vmatprep.subr.mxu0 0.0
    %1321 = vmatpush1.msra.mxu0 0.0
    %1322 = vmatprep.subr.mxu0 0.0
    %1323 = vmatpush1.msra.mxu0 0.0
    %1324 = vmatprep.subr.mxu0 0.0
    %1325 = vmatpush1.msra.mxu0 0.0
    %1326 = vmatprep.subr.mxu0 0.0
    %1327 = vmatpush1.msra.mxu0 0.0
    %1328 = vmatprep.subr.mxu0 0.0
    %1329 = vmatpush1.msra.mxu0 0.0
    %1330 = vmatprep.subr.mxu0 0.0
    %1331 = vmatpush1.msra.mxu0 0.0
    %1332 = vmatprep.mubr.f32.mxu0 0.0
    %1333 = vmatmul.mubr.f32.gmra.mrb[0].mxu0 %v1266
    %v1334 = vpop.f32.mrb[0].mxu0
    %v1335 = vadd.f32 0.0, %v1334
    %v1336 = vpop.f32.mrb[0].mxu0
    %1337 = vdwg.mxu0
    %1338 = vrot.lane.b32.xlu0 %v228, 64
    %v1339 = vpop.permute.xlu0 %1338
    %v1342 = vsel %vm235, %v953, 0
    %1344 = vmatprep.subr.mxu0 0.0
    %1345 = vmatpush1.msra.mxu0 %v1339
    %1346 = vmatprep.subr.mxu0 0.0
    %1347 = vmatpush1.msra.mxu0 0.0
    %1348 = vmatprep.subr.mxu0 0.0
    %1349 = vmatpush1.msra.mxu0 0.0
    %1350 = vmatprep.subr.mxu0 0.0
    %1351 = vmatpush1.msra.mxu0 0.0
    %1352 = vmatprep.subr.mxu0 0.0
    %1353 = vmatpush1.msra.mxu0 0.0
    %1354 = vmatprep.subr.mxu0 0.0
    %1355 = vmatpush1.msra.mxu0 0.0
    %1356 = vmatprep.subr.mxu0 0.0
    %1357 = vmatpush1.msra.mxu0 0.0
    %1358 = vmatprep.subr.mxu0 0.0
    %1359 = vmatpush1.msra.mxu0 0.0
    %1360 = vmatprep.subr.mxu0 0.0
    %1361 = vmatpush1.msra.mxu0 0.0
    %1362 = vmatprep.subr.mxu0 0.0
    %1363 = vmatpush1.msra.mxu0 0.0
    %1364 = vmatprep.subr.mxu0 0.0
    %1365 = vmatpush1.msra.mxu0 0.0
    %1366 = vmatprep.subr.mxu0 0.0
    %1367 = vmatpush1.msra.mxu0 0.0
    %1368 = vmatprep.subr.mxu0 0.0
    %1369 = vmatpush1.msra.mxu0 0.0
    %1370 = vmatprep.subr.mxu0 0.0
    %1371 = vmatpush1.msra.mxu0 0.0
    %1372 = vmatprep.subr.mxu0 0.0
    %1373 = vmatpush1.msra.mxu0 0.0
    %1374 = vmatprep.subr.mxu0 0.0
    %1375 = vmatpush1.msra.mxu0 0.0
    %1376 = vmatprep.subr.mxu0 0.0
    %1377 = vmatpush1.msra.mxu0 0.0
    %1378 = vmatprep.subr.mxu0 0.0
    %1379 = vmatpush1.msra.mxu0 0.0
    %1380 = vmatprep.subr.mxu0 0.0
    %1381 = vmatpush1.msra.mxu0 0.0
    %1382 = vmatprep.subr.mxu0 0.0
    %1383 = vmatpush1.msra.mxu0 0.0
    %1384 = vmatprep.subr.mxu0 0.0
    %1385 = vmatpush1.msra.mxu0 0.0
    %1386 = vmatprep.subr.mxu0 0.0
    %1387 = vmatpush1.msra.mxu0 0.0
    %1388 = vmatprep.subr.mxu0 0.0
    %1389 = vmatpush1.msra.mxu0 0.0
    %1390 = vmatprep.subr.mxu0 0.0
    %1391 = vmatpush1.msra.mxu0 0.0
    %1392 = vmatprep.subr.mxu0 0.0
    %1393 = vmatpush1.msra.mxu0 0.0
    %1394 = vmatprep.subr.mxu0 0.0
    %1395 = vmatpush1.msra.mxu0 0.0
    %1396 = vmatprep.subr.mxu0 0.0
    %1397 = vmatpush1.msra.mxu0 0.0
    %1398 = vmatprep.subr.mxu0 0.0
    %1399 = vmatpush1.msra.mxu0 0.0
    %1400 = vmatprep.subr.mxu0 0.0
    %1401 = vmatpush1.msra.mxu0 0.0
    %1402 = vmatprep.subr.mxu0 0.0
    %1403 = vmatpush1.msra.mxu0 0.0
    %1404 = vmatprep.subr.mxu0 0.0
    %1405 = vmatpush1.msra.mxu0 0.0
    %1406 = vmatprep.subr.mxu0 0.0
    %1407 = vmatpush1.msra.mxu0 0.0
    %1408 = vmatprep.mubr.f32.mxu0 0.0
    %1409 = vmatmul.mubr.f32.gmra.mrb[0].mxu0 %v1342
    %v1410 = vpop.f32.mrb[0].mxu0
    %v1411 = vadd.f32 0.0, %v1410
    %v1412 = vpop.f32.mrb[0].mxu0
    %1413 = vdwg.mxu0
    %1414 = vrot.lane.b32.xlu0 %v230, 64
    %v1415 = vpop.permute.xlu0 %1414
    %v1418 = vsel %vm235, %v955, 0
    %1420 = vmatprep.subr.mxu0 0.0
    %1421 = vmatpush1.msra.mxu0 %v1415
    %1422 = vmatprep.subr.mxu0 0.0
    %1423 = vmatpush1.msra.mxu0 0.0
    %1424 = vmatprep.subr.mxu0 0.0
    %1425 = vmatpush1.msra.mxu0 0.0
    %1426 = vmatprep.subr.mxu0 0.0
    %1427 = vmatpush1.msra.mxu0 0.0
    %1428 = vmatprep.subr.mxu0 0.0
    %1429 = vmatpush1.msra.mxu0 0.0
    %1430 = vmatprep.subr.mxu0 0.0
    %1431 = vmatpush1.msra.mxu0 0.0
    %1432 = vmatprep.subr.mxu0 0.0
    %1433 = vmatpush1.msra.mxu0 0.0
    %1434 = vmatprep.subr.mxu0 0.0
    %1435 = vmatpush1.msra.mxu0 0.0
    %1436 = vmatprep.subr.mxu0 0.0
    %1437 = vmatpush1.msra.mxu0 0.0
    %1438 = vmatprep.subr.mxu0 0.0
    %1439 = vmatpush1.msra.mxu0 0.0
    %1440 = vmatprep.subr.mxu0 0.0
    %1441 = vmatpush1.msra.mxu0 0.0
    %1442 = vmatprep.subr.mxu0 0.0
    %1443 = vmatpush1.msra.mxu0 0.0
    %1444 = vmatprep.subr.mxu0 0.0
    %1445 = vmatpush1.msra.mxu0 0.0
    %1446 = vmatprep.subr.mxu0 0.0
    %1447 = vmatpush1.msra.mxu0 0.0
    %1448 = vmatprep.subr.mxu0 0.0
    %1449 = vmatpush1.msra.mxu0 0.0
    %1450 = vmatprep.subr.mxu0 0.0
    %1451 = vmatpush1.msra.mxu0 0.0
    %1452 = vmatprep.subr.mxu0 0.0
    %1453 = vmatpush1.msra.mxu0 0.0
    %1454 = vmatprep.subr.mxu0 0.0
    %1455 = vmatpush1.msra.mxu0 0.0
    %1456 = vmatprep.subr.mxu0 0.0
    %1457 = vmatpush1.msra.mxu0 0.0
    %1458 = vmatprep.subr.mxu0 0.0
    %1459 = vmatpush1.msra.mxu0 0.0
    %1460 = vmatprep.subr.mxu0 0.0
    %1461 = vmatpush1.msra.mxu0 0.0
    %1462 = vmatprep.subr.mxu0 0.0
    %1463 = vmatpush1.msra.mxu0 0.0
    %1464 = vmatprep.subr.mxu0 0.0
    %1465 = vmatpush1.msra.mxu0 0.0
    %1466 = vmatprep.subr.mxu0 0.0
    %1467 = vmatpush1.msra.mxu0 0.0
    %1468 = vmatprep.subr.mxu0 0.0
    %1469 = vmatpush1.msra.mxu0 0.0
    %1470 = vmatprep.subr.mxu0 0.0
    %1471 = vmatpush1.msra.mxu0 0.0
    %1472 = vmatprep.subr.mxu0 0.0
    %1473 = vmatpush1.msra.mxu0 0.0
    %1474 = vmatprep.subr.mxu0 0.0
    %1475 = vmatpush1.msra.mxu0 0.0
    %1476 = vmatprep.subr.mxu0 0.0
    %1477 = vmatpush1.msra.mxu0 0.0
    %1478 = vmatprep.subr.mxu0 0.0
    %1479 = vmatpush1.msra.mxu0 0.0
    %1480 = vmatprep.subr.mxu0 0.0
    %1481 = vmatpush1.msra.mxu0 0.0
    %1482 = vmatprep.subr.mxu0 0.0
    %1483 = vmatpush1.msra.mxu0 0.0
    %1484 = vmatprep.mubr.f32.mxu0 0.0
    %1485 = vmatmul.mubr.f32.gmra.mrb[0].mxu0 %v1418
    %v1486 = vpop.f32.mrb[0].mxu0
    %v1487 = vadd.f32 0.0, %v1486
    %v1488 = vpop.f32.mrb[0].mxu0
    %1489 = vdwg.mxu0
    %1490 = vrot.lane.b32.xlu0 %v232, 64
    %v1491 = vpop.permute.xlu0 %1490
    %v1494 = vsel %vm235, %v957, 0
    %1496 = vmatprep.subr.mxu0 0.0
    %1497 = vmatpush1.msra.mxu0 %v1491
    %1498 = vmatprep.subr.mxu0 0.0
    %1499 = vmatpush1.msra.mxu0 0.0
    %1500 = vmatprep.subr.mxu0 0.0
    %1501 = vmatpush1.msra.mxu0 0.0
    %1502 = vmatprep.subr.mxu0 0.0
    %1503 = vmatpush1.msra.mxu0 0.0
    %1504 = vmatprep.subr.mxu0 0.0
    %1505 = vmatpush1.msra.mxu0 0.0
    %1506 = vmatprep.subr.mxu0 0.0
    %1507 = vmatpush1.msra.mxu0 0.0
    %1508 = vmatprep.subr.mxu0 0.0
    %1509 = vmatpush1.msra.mxu0 0.0
    %1510 = vmatprep.subr.mxu0 0.0
    %1511 = vmatpush1.msra.mxu0 0.0
    %1512 = vmatprep.subr.mxu0 0.0
    %1513 = vmatpush1.msra.mxu0 0.0
    %1514 = vmatprep.subr.mxu0 0.0
    %1515 = vmatpush1.msra.mxu0 0.0
    %1516 = vmatprep.subr.mxu0 0.0
    %1517 = vmatpush1.msra.mxu0 0.0
    %1518 = vmatprep.subr.mxu0 0.0
    %1519 = vmatpush1.msra.mxu0 0.0
    %1520 = vmatprep.subr.mxu0 0.0
    %1521 = vmatpush1.msra.mxu0 0.0
    %1522 = vmatprep.subr.mxu0 0.0
    %1523 = vmatpush1.msra.mxu0 0.0
    %1524 = vmatprep.subr.mxu0 0.0
    %1525 = vmatpush1.msra.mxu0 0.0
    %1526 = vmatprep.subr.mxu0 0.0
    %1527 = vmatpush1.msra.mxu0 0.0
    %1528 = vmatprep.subr.mxu0 0.0
    %1529 = vmatpush1.msra.mxu0 0.0
    %1530 = vmatprep.subr.mxu0 0.0
    %1531 = vmatpush1.msra.mxu0 0.0
    %1532 = vmatprep.subr.mxu0 0.0
    %1533 = vmatpush1.msra.mxu0 0.0
    %1534 = vmatprep.subr.mxu0 0.0
    %1535 = vmatpush1.msra.mxu0 0.0
    %1536 = vmatprep.subr.mxu0 0.0
    %1537 = vmatpush1.msra.mxu0 0.0
    %1538 = vmatprep.subr.mxu0 0.0
    %1539 = vmatpush1.msra.mxu0 0.0
    %1540 = vmatprep.subr.mxu0 0.0
    %1541 = vmatpush1.msra.mxu0 0.0
    %1542 = vmatprep.subr.mxu0 0.0
    %1543 = vmatpush1.msra.mxu0 0.0
    %1544 = vmatprep.subr.mxu0 0.0
    %1545 = vmatpush1.msra.mxu0 0.0
    %1546 = vmatprep.subr.mxu0 0.0
    %1547 = vmatpush1.msra.mxu0 0.0
    %1548 = vmatprep.subr.mxu0 0.0
    %1549 = vmatpush1.msra.mxu0 0.0
    %1550 = vmatprep.subr.mxu0 0.0
    %1551 = vmatpush1.msra.mxu0 0.0
    %1552 = vmatprep.subr.mxu0 0.0
    %1553 = vmatpush1.msra.mxu0 0.0
    %1554 = vmatprep.subr.mxu0 0.0
    %1555 = vmatpush1.msra.mxu0 0.0
    %1556 = vmatprep.subr.mxu0 0.0
    %1557 = vmatpush1.msra.mxu0 0.0
    %1558 = vmatprep.subr.mxu0 0.0
    %1559 = vmatpush1.msra.mxu0 0.0
    %1560 = vmatprep.mubr.f32.mxu0 0.0
    %1561 = vmatmul.mubr.f32.gmra.mrb[0].mxu0 %v1494
    %v1562 = vpop.f32.mrb[0].mxu0
    %v1563 = vadd.f32 0.0, %v1562
    %v1564 = vpop.f32.mrb[0].mxu0
    %1565 = vdwg.mxu0
    %1568 = vrot.lane.b32.xlu0 %v1183, 8
    %v1569 = vpop.permute.xlu0 %1568
    %1570 = vrot.lane.b32.xlu0 %v1259, 8
    %v1571 = vpop.permute.xlu0 %1570
    %1576 = vrot.lane.b32.xlu0 %v1335, 16
    %v1577 = vpop.permute.xlu0 %1576
    %1578 = vrot.lane.b32.xlu0 %v1411, 16
    %v1579 = vpop.permute.xlu0 %1578
    %1584 = vrot.lane.b32.xlu0 %v1487, 24
    %v1585 = vpop.permute.xlu0 %1584
    %1586 = vrot.lane.b32.xlu0 %v1563, 24
    %v1587 = vpop.permute.xlu0 %1586
    %v1590 = vsel %vm235, %v1031, %v1569
    %v1591 = vsel %vm235, %v1107, %v1571
    %vm1592 = vcmask 130048
    %v1593 = vsel %vm1592, %v1590, %v1577
    %v1594 = vsel %vm1592, %v1591, %v1579
    %vm1595 = vcmask 195584
    %v1596 = vsel %vm1595, %v1593, %v1585
    %v1597 = vsel %vm1595, %v1594, %v1587
    %v1598 = vld [vmem:[%s7] sm:$0xff]
    %v1599 = vld [vmem:[%s7 + $0x8] sm:$0xff]
    %v1600 = vld [vmem:[%s7 + $0x10] sm:$0xff]
    %v1601 = vld [vmem:[%s7 + $0x18] sm:$0xff]
    %v1602 = vld [vmem:[%s8] sm:$0x1]
    %v1604 = vlaneseq
    %v1605 = vshrl.u32 %v1604, 7
    %v1606 = vsub.s32 0, %v1605
    %v1607 = vrot.slane %v1602, %v1606
    %v1610 = vsel %vm77, %v1596, 0
    %v1613 = vsel %vm77, %v1597, 0
    %1615 = vmatprep.subr.mxu0 0.0
    %1616 = vmatpush1.msra.mxu0 %v1598
    %1617 = vmatprep.subr.mxu0 0.0
    %1618 = vmatpush1.msra.mxu0 %v1599
    %1619 = vmatprep.subr.mxu0 0.0
    %1620 = vmatpush1.msra.mxu0 %v1600
    %1621 = vmatprep.subr.mxu0 0.0
    %1622 = vmatpush1.msra.mxu0 %v1601
    %1623 = vmatprep.subr.mxu0 0.0
    %1624 = vmatpush1.msra.mxu0 0.0
    %1625 = vmatprep.subr.mxu0 0.0
    %1626 = vmatpush1.msra.mxu0 0.0
    %1627 = vmatprep.subr.mxu0 0.0
    %1628 = vmatpush1.msra.mxu0 0.0
    %1629 = vmatprep.subr.mxu0 0.0
    %1630 = vmatpush1.msra.mxu0 0.0
    %1631 = vmatprep.subr.mxu0 0.0
    %1632 = vmatpush1.msra.mxu0 0.0
    %1633 = vmatprep.subr.mxu0 0.0
    %1634 = vmatpush1.msra.mxu0 0.0
    %1635 = vmatprep.subr.mxu0 0.0
    %1636 = vmatpush1.msra.mxu0 0.0
    %1637 = vmatprep.subr.mxu0 0.0
    %1638 = vmatpush1.msra.mxu0 0.0
    %1639 = vmatprep.subr.mxu0 0.0
    %1640 = vmatpush1.msra.mxu0 0.0
    %1641 = vmatprep.subr.mxu0 0.0
    %1642 = vmatpush1.msra.mxu0 0.0
    %1643 = vmatprep.subr.mxu0 0.0
    %1644 = vmatpush1.msra.mxu0 0.0
    %1645 = vmatprep.subr.mxu0 0.0
    %1646 = vmatpush1.msra.mxu0 0.0
    %1647 = vmatprep.subr.mxu0 0.0
    %1648 = vmatpush1.msra.mxu0 0.0
    %1649 = vmatprep.subr.mxu0 0.0
    %1650 = vmatpush1.msra.mxu0 0.0
    %1651 = vmatprep.subr.mxu0 0.0
    %1652 = vmatpush1.msra.mxu0 0.0
    %1653 = vmatprep.subr.mxu0 0.0
    %1654 = vmatpush1.msra.mxu0 0.0
    %1655 = vmatprep.subr.mxu0 0.0
    %1656 = vmatpush1.msra.mxu0 0.0
    %1657 = vmatprep.subr.mxu0 0.0
    %1658 = vmatpush1.msra.mxu0 0.0
    %1659 = vmatprep.subr.mxu0 0.0
    %1660 = vmatpush1.msra.mxu0 0.0
    %1661 = vmatprep.subr.mxu0 0.0
    %1662 = vmatpush1.msra.mxu0 0.0
    %1663 = vmatprep.subr.mxu0 0.0
    %1664 = vmatpush1.msra.mxu0 0.0
    %1665 = vmatprep.subr.mxu0 0.0
    %1666 = vmatpush1.msra.mxu0 0.0
    %1667 = vmatprep.subr.mxu0 0.0
    %1668 = vmatpush1.msra.mxu0 0.0
    %1669 = vmatprep.subr.mxu0 0.0
    %1670 = vmatpush1.msra.mxu0 0.0
    %1671 = vmatprep.subr.mxu0 0.0
    %1672 = vmatpush1.msra.mxu0 0.0
    %1673 = vmatprep.subr.mxu0 0.0
    %1674 = vmatpush1.msra.mxu0 0.0
    %1675 = vmatprep.subr.mxu0 0.0
    %1676 = vmatpush1.msra.mxu0 0.0
    %1677 = vmatprep.subr.mxu0 0.0
    %1678 = vmatpush1.msra.mxu0 0.0
    %1679 = vmatprep.mubr.f32.mxu0 0.0
    %1680 = vmatmul.mubr.f32.gmra.mrb[0].mxu0 %v1610
    %v1681 = vpop.f32.mrb[0].mxu0
    %v1682 = vadd.f32 %v1607, %v1681
    %v1683 = vpop.f32.mrb[0].mxu0
    %1684 = vmatprep.mubr.f32.mxu0 0.0
    %1685 = vmatmul.mubr.f32.gmra.mrb[0].mxu0 %v1613
    %v1686 = vpop.f32.mrb[0].mxu0
    %v1687 = vadd.f32 %v1607, %v1686
    %v1688 = vpop.f32.mrb[0].mxu0
    %1689 = vdwg.mxu0
    %v1690 = vadd.f32 %v1682, %v119
    %v1691 = vadd.f32 %v1687, %v120
    %v1692 = vld [vmem:[%s9] sm:$0x1]
    %v1693 = vld [vmem:[%s10] sm:$0x1]
    %v1694 = vsel %vm77, %v1690, 0.0
    %1695 = vadd.xlane.f32.xlu0 %v1694
    %v1696 = vpop.xlane.xlu0 %1695
    %v1697 = vsel %vm77, %v1691, 0.0
    %1698 = vadd.xlane.f32.xlu0 %v1697
    %v1699 = vpop.xlane.xlu0 %1698
    %v1700 = vmul.f32 %v1696, %v84
    %v1701 = vmul.f32 %v1699, %v84
    %v1702 = vsub.f32 %v1690, %v1700
    %v1703 = vsub.f32 %v1691, %v1701
    %v1704 = vmul.f32 %v1702, %v1702
    %v1705 = vmul.f32 %v1703, %v1703
    %v1706 = vsel %vm77, %v1704, 0.0
    %1707 = vadd.xlane.f32.xlu0 %v1706
    %v1708 = vpop.xlane.xlu0 %1707
    %v1709 = vsel %vm77, %v1705, 0.0
    %1710 = vadd.xlane.f32.xlu0 %v1709
    %v1711 = vpop.xlane.xlu0 %1710
    %v1712 = vmul.f32 %v1708, %v84
    %v1713 = vmul.f32 %v1711, %v84
    %v1714 = vadd.f32 %v1712, 1e-12
    %v1715 = vadd.f32 %v1713, 1e-12
    %v1716 = vrsqrt.pop %v1714
    %v1717 = vrsqrt.pop %v1715
    %v1718 = vmul.f32 %v1702, %v1716
    %v1719 = vmul.f32 %v1703, %v1717
    %v1721 = vlaneseq
    %v1722 = vshrl.u32 %v1721, 7
    %v1723 = vsub.s32 0, %v1722
    %v1724 = vrot.slane %v1692, %v1723
    %v1726 = vmul.f32 %v1718, %v1724
    %v1727 = vmul.f32 %v1719, %v1724
    %v1729 = vlaneseq
    %v1730 = vshrl.u32 %v1729, 7
    %v1731 = vsub.s32 0, %v1730
    %v1732 = vrot.slane %v1693, %v1731
    %v1734 = vadd.f32 %v1726, %v1732
    %v1735 = vadd.f32 %v1727, %v1732
    %v1736 = vld [vmem:[%s11] sm:$0xff]
    %v1737 = vld [vmem:[%s11 + $0x8] sm:$0xff]
    %v1738 = vld [vmem:[%s11 + $0x10] sm:$0xff]
    %v1739 = vld [vmem:[%s11 + $0x18] sm:$0xff]
    %v1740 = vld [vmem:[%s12] sm:$0x1]
    %v1742 = vlaneseq
    %v1743 = vshrl.u32 %v1742, 7
    %v1744 = vsub.s32 0, %v1743
    %v1745 = vrot.slane %v1740, %v1744
    %v1748 = vsel %vm77, %v1734, 0
    %v1751 = vsel %vm77, %v1735, 0
    %1753 = vmatprep.subr.mxu0 0.0
    %1754 = vmatpush1.msra.mxu0 %v1736
    %1755 = vmatprep.subr.mxu0 0.0
    %1756 = vmatpush1.msra.mxu0 %v1737
    %1757 = vmatprep.subr.mxu0 0.0
    %1758 = vmatpush1.msra.mxu0 %v1738
    %1759 = vmatprep.subr.mxu0 0.0
    %1760 = vmatpush1.msra.mxu0 %v1739
    %1761 = vmatprep.subr.mxu0 0.0
    %1762 = vmatpush1.msra.mxu0 0.0
    %1763 = vmatprep.subr.mxu0 0.0
    %1764 = vmatpush1.msra.mxu0 0.0
    %1765 = vmatprep.subr.mxu0 0.0
    %1766 = vmatpush1.msra.mxu0 0.0
    %1767 = vmatprep.subr.mxu0 0.0
    %1768 = vmatpush1.msra.mxu0 0.0
    %1769 = vmatprep.subr.mxu0 0.0
    %1770 = vmatpush1.msra.mxu0 0.0
    %1771 = vmatprep.subr.mxu0 0.0
    %1772 = vmatpush1.msra.mxu0 0.0
    %1773 = vmatprep.subr.mxu0 0.0
    %1774 = vmatpush1.msra.mxu0 0.0
    %1775 = vmatprep.subr.mxu0 0.0
    %1776 = vmatpush1.msra.mxu0 0.0
    %1777 = vmatprep.subr.mxu0 0.0
    %1778 = vmatpush1.msra.mxu0 0.0
    %1779 = vmatprep.subr.mxu0 0.0
    %1780 = vmatpush1.msra.mxu0 0.0
    %1781 = vmatprep.subr.mxu0 0.0
    %1782 = vmatpush1.msra.mxu0 0.0
    %1783 = vmatprep.subr.mxu0 0.0
    %1784 = vmatpush1.msra.mxu0 0.0
    %1785 = vmatprep.subr.mxu0 0.0
    %1786 = vmatpush1.msra.mxu0 0.0
    %1787 = vmatprep.subr.mxu0 0.0
    %1788 = vmatpush1.msra.mxu0 0.0
    %1789 = vmatprep.subr.mxu0 0.0
    %1790 = vmatpush1.msra.mxu0 0.0
    %1791 = vmatprep.subr.mxu0 0.0
    %1792 = vmatpush1.msra.mxu0 0.0
    %1793 = vmatprep.subr.mxu0 0.0
    %1794 = vmatpush1.msra.mxu0 0.0
    %1795 = vmatprep.subr.mxu0 0.0
    %1796 = vmatpush1.msra.mxu0 0.0
    %1797 = vmatprep.subr.mxu0 0.0
    %1798 = vmatpush1.msra.mxu0 0.0
    %1799 = vmatprep.subr.mxu0 0.0
    %1800 = vmatpush1.msra.mxu0 0.0
    %1801 = vmatprep.subr.mxu0 0.0
    %1802 = vmatpush1.msra.mxu0 0.0
    %1803 = vmatprep.subr.mxu0 0.0
    %1804 = vmatpush1.msra.mxu0 0.0
    %1805 = vmatprep.subr.mxu0 0.0
    %1806 = vmatpush1.msra.mxu0 0.0
    %1807 = vmatprep.subr.mxu0 0.0
    %1808 = vmatpush1.msra.mxu0 0.0
    %1809 = vmatprep.subr.mxu0 0.0
    %1810 = vmatpush1.msra.mxu0 0.0
    %1811 = vmatprep.subr.mxu0 0.0
    %1812 = vmatpush1.msra.mxu0 0.0
    %1813 = vmatprep.subr.mxu0 0.0
    %1814 = vmatpush1.msra.mxu0 0.0
    %1815 = vmatprep.subr.mxu0 0.0
    %1816 = vmatpush1.msra.mxu0 0.0
    %1817 = vmatprep.mubr.f32.mxu0 0.0
    %1818 = vmatmul.mubr.f32.gmra.mrb[0].mxu0 %v1748
    %v1819 = vpop.f32.mrb[0].mxu0
    %v1820 = vadd.f32 %v1745, %v1819
    %v1821 = vpop.f32.mrb[0].mxu0
    %1822 = vmatprep.mubr.f32.mxu0 0.0
    %1823 = vmatmul.mubr.f32.gmra.mrb[0].mxu0 %v1751
    %v1824 = vpop.f32.mrb[0].mxu0
    %v1825 = vadd.f32 %v1745, %v1824
    %v1826 = vpop.f32.mrb[0].mxu0
    %1827 = vdwg.mxu0
    %v1828 = vmul.f32 %v1820, %v1820
    %v1829 = vmul.f32 %v1825, %v1825
    %v1830 = vmul.f32 %v1820, %v1828
    %v1831 = vmul.f32 %v1825, %v1829
    %v1832 = vmul.f32 %v1830, 0.044715
    %v1833 = vmul.f32 %v1831, 0.044715
    %v1834 = vadd.f32 %v1820, %v1832
    %v1835 = vadd.f32 %v1825, %v1833
    %v1836 = vmul.f32 %v1834, 0.7978846
    %v1837 = vmul.f32 %v1835, 0.7978846
    %v1838 = vtanh.pop %v1836
    %v1839 = vtanh.pop %v1837
    %v1840 = vadd.f32 %v1838, 1.0
    %v1841 = vadd.f32 %v1839, 1.0
    %v1842 = vmul.f32 %v1840, 0.5
    %v1843 = vmul.f32 %v1841, 0.5
    %v1844 = vmul.f32 %v1820, %v1842
    %v1845 = vmul.f32 %v1825, %v1843
    %v1846 = vld [vmem:[%s13] sm:$0xff]
    %v1847 = vld [vmem:[%s13 + $0x8] sm:$0xff]
    %v1848 = vld [vmem:[%s13 + $0x10] sm:$0xff]
    %v1849 = vld [vmem:[%s13 + $0x18] sm:$0xff]
    %v1850 = vld [vmem:[%s13 + $0x20] sm:$0xff]
    %v1851 = vld [vmem:[%s13 + $0x28] sm:$0xff]
    %v1852 = vld [vmem:[%s13 + $0x30] sm:$0xff]
    %v1853 = vld [vmem:[%s13 + $0x38] sm:$0xff]
    %v1854 = vld [vmem:[%s13 + $0x40] sm:$0xff]
    %v1855 = vld [vmem:[%s13 + $0x48] sm:$0xff]
    %v1856 = vld [vmem:[%s13 + $0x50] sm:$0xff]
    %v1857 = vld [vmem:[%s13 + $0x58] sm:$0xff]
    %v1858 = vld [vmem:[%s13 + $0x60] sm:$0xff]
    %v1859 = vld [vmem:[%s13 + $0x68] sm:$0xff]
    %v1860 = vld [vmem:[%s13 + $0x70] sm:$0xff]
    %v1861 = vld [vmem:[%s13 + $0x78] sm:$0xff]
    %v1862 = vld [vmem:[%s14] sm:$0x1]
    %v1864 = vlaneseq
    %v1865 = vshrl.u32 %v1864, 7
    %v1866 = vsub.s32 0, %v1865
    %v1867 = vrot.slane %v1862, %v1866
    %1869 = vmatprep.subr.mxu0 0.0
    %1870 = vmatpush1.msra.mxu0 %v1846
    %1871 = vmatprep.subr.mxu0 0.0
    %1872 = vmatpush1.msra.mxu0 %v1847
    %1873 = vmatprep.subr.mxu0 0.0
    %1874 = vmatpush1.msra.mxu0 %v1848
    %1875 = vmatprep.subr.mxu0 0.0
    %1876 = vmatpush1.msra.mxu0 %v1849
    %1877 = vmatprep.subr.mxu0 0.0
    %1878 = vmatpush1.msra.mxu0 %v1850
    %1879 = vmatprep.subr.mxu0 0.0
    %1880 = vmatpush1.msra.mxu0 %v1851
    %1881 = vmatprep.subr.mxu0 0.0
    %1882 = vmatpush1.msra.mxu0 %v1852
    %1883 = vmatprep.subr.mxu0 0.0
    %1884 = vmatpush1.msra.mxu0 %v1853
    %1885 = vmatprep.subr.mxu0 0.0
    %1886 = vmatpush1.msra.mxu0 %v1854
    %1887 = vmatprep.subr.mxu0 0.0
    %1888 = vmatpush1.msra.mxu0 %v1855
    %1889 = vmatprep.subr.mxu0 0.0
    %1890 = vmatpush1.msra.mxu0 %v1856
    %1891 = vmatprep.subr.mxu0 0.0
    %1892 = vmatpush1.msra.mxu0 %v1857
    %1893 = vmatprep.subr.mxu0 0.0
    %1894 = vmatpush1.msra.mxu0 %v1858
    %1895 = vmatprep.subr.mxu0 0.0
    %1896 = vmatpush1.msra.mxu0 %v1859
    %1897 = vmatprep.subr.mxu0 0.0
    %1898 = vmatpush1.msra.mxu0 %v1860
    %1899 = vmatprep.subr.mxu0 0.0
    %1900 = vmatpush1.msra.mxu0 %v1861
    %1901 = vmatprep.subr.mxu0 0.0
    %1902 = vmatpush1.msra.mxu0 0.0
    %1903 = vmatprep.subr.mxu0 0.0
    %1904 = vmatpush1.msra.mxu0 0.0
    %1905 = vmatprep.subr.mxu0 0.0
    %1906 = vmatpush1.msra.mxu0 0.0
    %1907 = vmatprep.subr.mxu0 0.0
    %1908 = vmatpush1.msra.mxu0 0.0
    %1909 = vmatprep.subr.mxu0 0.0
    %1910 = vmatpush1.msra.mxu0 0.0
    %1911 = vmatprep.subr.mxu0 0.0
    %1912 = vmatpush1.msra.mxu0 0.0
    %1913 = vmatprep.subr.mxu0 0.0
    %1914 = vmatpush1.msra.mxu0 0.0
    %1915 = vmatprep.subr.mxu0 0.0
    %1916 = vmatpush1.msra.mxu0 0.0
    %1917 = vmatprep.subr.mxu0 0.0
    %1918 = vmatpush1.msra.mxu0 0.0
    %1919 = vmatprep.subr.mxu0 0.0
    %1920 = vmatpush1.msra.mxu0 0.0
    %1921 = vmatprep.subr.mxu0 0.0
    %1922 = vmatpush1.msra.mxu0 0.0
    %1923 = vmatprep.subr.mxu0 0.0
    %1924 = vmatpush1.msra.mxu0 0.0
    %1925 = vmatprep.subr.mxu0 0.0
    %1926 = vmatpush1.msra.mxu0 0.0
    %1927 = vmatprep.subr.mxu0 0.0
    %1928 = vmatpush1.msra.mxu0 0.0
    %1929 = vmatprep.subr.mxu0 0.0
    %1930 = vmatpush1.msra.mxu0 0.0
    %1931 = vmatprep.subr.mxu0 0.0
    %1932 = vmatpush1.msra.mxu0 0.0
    %1933 = vmatprep.mubr.f32.mxu0 0.0
    %1934 = vmatmul.mubr.f32.gmra.mrb[0].mxu0 %v1844
    %v1935 = vpop.f32.mrb[0].mxu0
    %v1936 = vadd.f32 %v1867, %v1935
    %v1937 = vpop.f32.mrb[0].mxu0
    %1938 = vmatprep.mubr.f32.mxu0 0.0
    %1939 = vmatmul.mubr.f32.gmra.mrb[0].mxu0 %v1845
    %v1940 = vpop.f32.mrb[0].mxu0
    %v1941 = vadd.f32 %v1867, %v1940
    %v1942 = vpop.f32.mrb[0].mxu0
    %1943 = vdwg.mxu0
    %v1944 = vadd.f32 %v1936, %v1734
    %v1945 = vadd.f32 %v1941, %v1735
    %v1946 = vld [vmem:[%s15] sm:$0x1]
    %v1947 = vld [vmem:[%s16] sm:$0x1]
    %v1948 = vsel %vm77, %v1944, 0.0
    %1949 = vadd.xlane.f32.xlu0 %v1948
    %v1950 = vpop.xlane.xlu0 %1949
    %v1951 = vsel %vm77, %v1945, 0.0
    %1952 = vadd.xlane.f32.xlu0 %v1951
    %v1953 = vpop.xlane.xlu0 %1952
    %v1954 = vmul.f32 %v1950, %v84
    %v1955 = vmul.f32 %v1953, %v84
    %v1956 = vsub.f32 %v1944, %v1954
    %v1957 = vsub.f32 %v1945, %v1955
    %v1958 = vmul.f32 %v1956, %v1956
    %v1959 = vmul.f32 %v1957, %v1957
    %v1960 = vsel %vm77, %v1958, 0.0
    %1961 = vadd.xlane.f32.xlu0 %v1960
    %v1962 = vpop.xlane.xlu0 %1961
    %v1963 = vsel %vm77, %v1959, 0.0
    %1964 = vadd.xlane.f32.xlu0 %v1963
    %v1965 = vpop.xlane.xlu0 %1964
    %v1966 = vmul.f32 %v1962, %v84
    %v1967 = vmul.f32 %v1965, %v84
    %v1968 = vadd.f32 %v1966, 1e-12
    %v1969 = vadd.f32 %v1967, 1e-12
    %v1970 = vrsqrt.pop %v1968
    %v1971 = vrsqrt.pop %v1969
    %v1972 = vmul.f32 %v1956, %v1970
    %v1973 = vmul.f32 %v1957, %v1971
    %v1975 = vlaneseq
    %v1976 = vshrl.u32 %v1975, 7
    %v1977 = vsub.s32 0, %v1976
    %v1978 = vrot.slane %v1946, %v1977
    %v1980 = vmul.f32 %v1972, %v1978
    %v1981 = vmul.f32 %v1973, %v1978
    %v1983 = vlaneseq
    %v1984 = vshrl.u32 %v1983, 7
    %v1985 = vsub.s32 0, %v1984
    %v1986 = vrot.slane %v1947, %v1985
    %v1988 = vadd.f32 %v1980, %v1986
    %v1989 = vadd.f32 %v1981, %v1986
    %s1990 = scalar_lea.vmem %s5, 32
    %v1991 = vld [vmem:[%s1990] sm:$0xff]
    %v1992 = vld [vmem:[%s1990 + $0x8] sm:$0xff]
    %v1993 = vld [vmem:[%s1990 + $0x10] sm:$0xff]
    %v1994 = vld [vmem:[%s1990 + $0x18] sm:$0xff]
    %s1995 = scalar_lea.vmem %s6, 1
    %v1996 = vld [vmem:[%s1995] sm:$0x1]
    %v1998 = vlaneseq
    %v1999 = vshrl.u32 %v1998, 7
    %v2000 = vsub.s32 0, %v1999
    %v2001 = vrot.slane %v1996, %v2000
    %v2004 = vsel %vm77, %v1988, 0
    %v2007 = vsel %vm77, %v1989, 0
    %2009 = vmatprep.subr.mxu0 0.0
    %2010 = vmatpush1.msra.mxu0 %v1991
    %2011 = vmatprep.subr.mxu0 0.0
    %2012 = vmatpush1.msra.mxu0 %v1992
    %2013 = vmatprep.subr.mxu0 0.0
    %2014 = vmatpush1.msra.mxu0 %v1993
    %2015 = vmatprep.subr.mxu0 0.0
    %2016 = vmatpush1.msra.mxu0 %v1994
    %2017 = vmatprep.subr.mxu0 0.0
    %2018 = vmatpush1.msra.mxu0 0.0
    %2019 = vmatprep.subr.mxu0 0.0
    %2020 = vmatpush1.msra.mxu0 0.0
    %2021 = vmatprep.subr.mxu0 0.0
    %2022 = vmatpush1.msra.mxu0 0.0
    %2023 = vmatprep.subr.mxu0 0.0
    %2024 = vmatpush1.msra.mxu0 0.0
    %2025 = vmatprep.subr.mxu0 0.0
    %2026 = vmatpush1.msra.mxu0 0.0
    %2027 = vmatprep.subr.mxu0 0.0
    %2028 = vmatpush1.msra.mxu0 0.0
    %2029 = vmatprep.subr.mxu0 0.0
    %2030 = vmatpush1.msra.mxu0 0.0
    %2031 = vmatprep.subr.mxu0 0.0
    %2032 = vmatpush1.msra.mxu0 0.0
    %2033 = vmatprep.subr.mxu0 0.0
    %2034 = vmatpush1.msra.mxu0 0.0
    %2035 = vmatprep.subr.mxu0 0.0
    %2036 = vmatpush1.msra.mxu0 0.0
    %2037 = vmatprep.subr.mxu0 0.0
    %2038 = vmatpush1.msra.mxu0 0.0
    %2039 = vmatprep.subr.mxu0 0.0
    %2040 = vmatpush1.msra.mxu0 0.0
    %2041 = vmatprep.subr.mxu0 0.0
    %2042 = vmatpush1.msra.mxu0 0.0
    %2043 = vmatprep.subr.mxu0 0.0
    %2044 = vmatpush1.msra.mxu0 0.0
    %2045 = vmatprep.subr.mxu0 0.0
    %2046 = vmatpush1.msra.mxu0 0.0
    %2047 = vmatprep.subr.mxu0 0.0
    %2048 = vmatpush1.msra.mxu0 0.0
    %2049 = vmatprep.subr.mxu0 0.0
    %2050 = vmatpush1.msra.mxu0 0.0
    %2051 = vmatprep.subr.mxu0 0.0
    %2052 = vmatpush1.msra.mxu0 0.0
    %2053 = vmatprep.subr.mxu0 0.0
    %2054 = vmatpush1.msra.mxu0 0.0
    %2055 = vmatprep.subr.mxu0 0.0
    %2056 = vmatpush1.msra.mxu0 0.0
    %2057 = vmatprep.subr.mxu0 0.0
    %2058 = vmatpush1.msra.mxu0 0.0
    %2059 = vmatprep.subr.mxu0 0.0
    %2060 = vmatpush1.msra.mxu0 0.0
    %2061 = vmatprep.subr.mxu0 0.0
    %2062 = vmatpush1.msra.mxu0 0.0
    %2063 = vmatprep.subr.mxu0 0.0
    %2064 = vmatpush1.msra.mxu0 0.0
    %2065 = vmatprep.subr.mxu0 0.0
    %2066 = vmatpush1.msra.mxu0 0.0
    %2067 = vmatprep.subr.mxu0 0.0
    %2068 = vmatpush1.msra.mxu0 0.0
    %2069 = vmatprep.subr.mxu0 0.0
    %2070 = vmatpush1.msra.mxu0 0.0
    %2071 = vmatprep.subr.mxu0 0.0
    %2072 = vmatpush1.msra.mxu0 0.0
    %2073 = vmatprep.mubr.f32.mxu0 0.0
    %2074 = vmatmul.mubr.f32.gmra.mrb[0].mxu0 %v2004
    %v2075 = vpop.f32.mrb[0].mxu0
    %v2076 = vadd.f32 %v2001, %v2075
    %v2077 = vpop.f32.mrb[0].mxu0
    %2078 = vmatprep.mubr.f32.mxu0 0.0
    %2079 = vmatmul.mubr.f32.gmra.mrb[0].mxu0 %v2007
    %v2080 = vpop.f32.mrb[0].mxu0
    %v2081 = vadd.f32 %v2001, %v2080
    %v2082 = vpop.f32.mrb[0].mxu0
    %2083 = vdwg.mxu0
    %2086 = vrot.lane.b32.xlu0 %v2076, 120
    %v2087 = vpop.permute.xlu0 %2086
    %2088 = vrot.lane.b32.xlu0 %v2081, 120
    %v2089 = vpop.permute.xlu0 %2088
    %2090 = vrot.lane.b32.xlu0 %v2076, 112
    %v2091 = vpop.permute.xlu0 %2090
    %2092 = vrot.lane.b32.xlu0 %v2081, 112
    %v2093 = vpop.permute.xlu0 %2092
    %2094 = vrot.lane.b32.xlu0 %v2076, 104
    %v2095 = vpop.permute.xlu0 %2094
    %2096 = vrot.lane.b32.xlu0 %v2081, 104
    %v2097 = vpop.permute.xlu0 %2096
    %2098 = vrot.lane.b32.xlu0 %v2076, 96
    %v2099 = vpop.permute.xlu0 %2098
    %v2100 = vsel %vm235, %v2076, 0
    %v2102 = vsel %vm235, %v2099, 0
    %2104 = vmatprep.subr.mxu0 0.0
    %2105 = vmatpush1.xpose.msra.mxu0 %v2102
    %2106 = vmatprep.subr.mxu0 0.0
    %2107 = vmatpush1.xpose.msra.mxu0 0.0
    %2108 = vmatprep.subr.mxu0 0.0
    %2109 = vmatpush1.xpose.msra.mxu0 0.0
    %2110 = vmatprep.subr.mxu0 0.0
    %2111 = vmatpush1.xpose.msra.mxu0 0.0
    %2112 = vmatprep.subr.mxu0 0.0
    %2113 = vmatpush1.xpose.msra.mxu0 0.0
    %2114 = vmatprep.subr.mxu0 0.0
    %2115 = vmatpush1.xpose.msra.mxu0 0.0
    %2116 = vmatprep.subr.mxu0 0.0
    %2117 = vmatpush1.xpose.msra.mxu0 0.0
    %2118 = vmatprep.subr.mxu0 0.0
    %2119 = vmatpush1.xpose.msra.mxu0 0.0
    %2120 = vmatprep.subr.mxu0 0.0
    %2121 = vmatpush1.xpose.msra.mxu0 0.0
    %2122 = vmatprep.subr.mxu0 0.0
    %2123 = vmatpush1.xpose.msra.mxu0 0.0
    %2124 = vmatprep.subr.mxu0 0.0
    %2125 = vmatpush1.xpose.msra.mxu0 0.0
    %2126 = vmatprep.subr.mxu0 0.0
    %2127 = vmatpush1.xpose.msra.mxu0 0.0
    %2128 = vmatprep.subr.mxu0 0.0
    %2129 = vmatpush1.xpose.msra.mxu0 0.0
    %2130 = vmatprep.subr.mxu0 0.0
    %2131 = vmatpush1.xpose.msra.mxu0 0.0
    %2132 = vmatprep.subr.mxu0 0.0
    %2133 = vmatpush1.xpose.msra.mxu0 0.0
    %2134 = vmatprep.subr.mxu0 0.0
    %2135 = vmatpush1.xpose.msra.mxu0 0.0
    %2136 = vmatprep.subr.mxu0 0.0
    %2137 = vmatpush1.xpose.msra.mxu0 0.0
    %2138 = vmatprep.subr.mxu0 0.0
    %2139 = vmatpush1.xpose.msra.mxu0 0.0
    %2140 = vmatprep.subr.mxu0 0.0
    %2141 = vmatpush1.xpose.msra.mxu0 0.0
    %2142 = vmatprep.subr.mxu0 0.0
    %2143 = vmatpush1.xpose.msra.mxu0 0.0
    %2144 = vmatprep.subr.mxu0 0.0
    %2145 = vmatpush1.xpose.msra.mxu0 0.0
    %2146 = vmatprep.subr.mxu0 0.0
    %2147 = vmatpush1.xpose.msra.mxu0 0.0
    %2148 = vmatprep.subr.mxu0 0.0
    %2149 = vmatpush1.xpose.msra.mxu0 0.0
    %2150 = vmatprep.subr.mxu0 0.0
    %2151 = vmatpush1.xpose.msra.mxu0 0.0
    %2152 = vmatprep.subr.mxu0 0.0
    %2153 = vmatpush1.xpose.msra.mxu0 0.0
    %2154 = vmatprep.subr.mxu0 0.0
    %2155 = vmatpush1.xpose.msra.mxu0 0.0
    %2156 = vmatprep.subr.mxu0 0.0
    %2157 = vmatpush1.xpose.msra.mxu0 0.0
    %2158 = vmatprep.subr.mxu0 0.0
    %2159 = vmatpush1.xpose.msra.mxu0 0.0
    %2160 = vmatprep.subr.mxu0 0.0
    %2161 = vmatpush1.xpose.msra.mxu0 0.0
    %2162 = vmatprep.subr.mxu0 0.0
    %2163 = vmatpush1.xpose.msra.mxu0 0.0
    %2164 = vmatprep.subr.mxu0 0.0
    %2165 = vmatpush1.xpose.msra.mxu0 0.0
    %2166 = vmatprep.subr.mxu0 0.0
    %2167 = vmatpush1.xpose.msra.mxu0 0.0
    %2168 = vmatprep.mubr.f32.mxu0 0.0
    %2169 = vmatmul.mubr.f32.gmra.mrb[0].mxu0 %v2100
    %v2170 = vpop.f32.mrb[0].mxu0
    %v2171 = vadd.f32 0.0, %v2170
    %v2172 = vpop.f32.mrb[0].mxu0
    %2173 = vdwg.mxu0
    %2174 = vrot.lane.b32.xlu0 %v2081, 96
    %v2175 = vpop.permute.xlu0 %2174
    %v2176 = vsel %vm235, %v2081, 0
    %v2178 = vsel %vm235, %v2175, 0
    %2180 = vmatprep.subr.mxu0 0.0
    %2181 = vmatpush1.xpose.msra.mxu0 %v2178
    %2182 = vmatprep.subr.mxu0 0.0
    %2183 = vmatpush1.xpose.msra.mxu0 0.0
    %2184 = vmatprep.subr.mxu0 0.0
    %2185 = vmatpush1.xpose.msra.mxu0 0.0
    %2186 = vmatprep.subr.mxu0 0.0
    %2187 = vmatpush1.xpose.msra.mxu0 0.0
    %2188 = vmatprep.subr.mxu0 0.0
    %2189 = vmatpush1.xpose.msra.mxu0 0.0
    %2190 = vmatprep.subr.mxu0 0.0
    %2191 = vmatpush1.xpose.msra.mxu0 0.0
    %2192 = vmatprep.subr.mxu0 0.0
    %2193 = vmatpush1.xpose.msra.mxu0 0.0
    %2194 = vmatprep.subr.mxu0 0.0
    %2195 = vmatpush1.xpose.msra.mxu0 0.0
    %2196 = vmatprep.subr.mxu0 0.0
    %2197 = vmatpush1.xpose.msra.mxu0 0.0
    %2198 = vmatprep.subr.mxu0 0.0
    %2199 = vmatpush1.xpose.msra.mxu0 0.0
    %2200 = vmatprep.subr.mxu0 0.0
    %2201 = vmatpush1.xpose.msra.mxu0 0.0
    %2202 = vmatprep.subr.mxu0 0.0
    %2203 = vmatpush1.xpose.msra.mxu0 0.0
    %2204 = vmatprep.subr.mxu0 0.0
    %2205 = vmatpush1.xpose.msra.mxu0 0.0
    %2206 = vmatprep.subr.mxu0 0.0
    %2207 = vmatpush1.xpose.msra.mxu0 0.0
    %2208 = vmatprep.subr.mxu0 0.0
    %2209 = vmatpush1.xpose.msra.mxu0 0.0
    %2210 = vmatprep.subr.mxu0 0.0
    %2211 = vmatpush1.xpose.msra.mxu0 0.0
    %2212 = vmatprep.subr.mxu0 0.0
    %2213 = vmatpush1.xpose.msra.mxu0 0.0
    %2214 = vmatprep.subr.mxu0 0.0
    %2215 = vmatpush1.xpose.msra.mxu0 0.0
    %2216 = vmatprep.subr.mxu0 0.0
    %2217 = vmatpush1.xpose.msra.mxu0 0.0
    %2218 = vmatprep.subr.mxu0 0.0
    %2219 = vmatpush1.xpose.msra.mxu0 0.0
    %2220 = vmatprep.subr.mxu0 0.0
    %2221 = vmatpush1.xpose.msra.mxu0 0.0
    %2222 = vmatprep.subr.mxu0 0.0
    %2223 = vmatpush1.xpose.msra.mxu0 0.0
    %2224 = vmatprep.subr.mxu0 0.0
    %2225 = vmatpush1.xpose.msra.mxu0 0.0
    %2226 = vmatprep.subr.mxu0 0.0
    %2227 = vmatpush1.xpose.msra.mxu0 0.0
    %2228 = vmatprep.subr.mxu0 0.0
    %2229 = vmatpush1.xpose.msra.mxu0 0.0
    %2230 = vmatprep.subr.mxu0 0.0
    %2231 = vmatpush1.xpose.msra.mxu0 0.0
    %2232 = vmatprep.subr.mxu0 0.0
    %2233 = vmatpush1.xpose.msra.mxu0 0.0
    %2234 = vmatprep.subr.mxu0 0.0
    %2235 = vmatpush1.xpose.msra.mxu0 0.0
    %2236 = vmatprep.subr.mxu0 0.0
    %2237 = vmatpush1.xpose.msra.mxu0 0.0
    %2238 = vmatprep.subr.mxu0 0.0
    %2239 = vmatpush1.xpose.msra.mxu0 0.0
    %2240 = vmatprep.subr.mxu0 0.0
    %2241 = vmatpush1.xpose.msra.mxu0 0.0
    %2242 = vmatprep.subr.mxu0 0.0
    %2243 = vmatpush1.xpose.msra.mxu0 0.0
    %2244 = vmatprep.mubr.f32.mxu0 0.0
    %2245 = vmatmul.mubr.f32.gmra.mrb[0].mxu0 %v2176
    %v2246 = vpop.f32.mrb[0].mxu0
    %v2247 = vadd.f32 0.0, %v2246
    %v2248 = vpop.f32.mrb[0].mxu0
    %2249 = vdwg.mxu0
    %2250 = vrot.lane.b32.xlu0 %v2087, 96
    %v2251 = vpop.permute.xlu0 %2250
    %v2252 = vsel %vm235, %v2087, 0
    %v2254 = vsel %vm235, %v2251, 0
    %2256 = vmatprep.subr.mxu0 0.0
    %2257 = vmatpush1.xpose.msra.mxu0 %v2254
    %2258 = vmatprep.subr.mxu0 0.0
    %2259 = vmatpush1.xpose.msra.mxu0 0.0
    %2260 = vmatprep.subr.mxu0 0.0
    %2261 = vmatpush1.xpose.msra.mxu0 0.0
    %2262 = vmatprep.subr.mxu0 0.0
    %2263 = vmatpush1.xpose.msra.mxu0 0.0
    %2264 = vmatprep.subr.mxu0 0.0
    %2265 = vmatpush1.xpose.msra.mxu0 0.0
    %2266 = vmatprep.subr.mxu0 0.0
    %2267 = vmatpush1.xpose.msra.mxu0 0.0
    %2268 = vmatprep.subr.mxu0 0.0
    %2269 = vmatpush1.xpose.msra.mxu0 0.0
    %2270 = vmatprep.subr.mxu0 0.0
    %2271 = vmatpush1.xpose.msra.mxu0 0.0
    %2272 = vmatprep.subr.mxu0 0.0
    %2273 = vmatpush1.xpose.msra.mxu0 0.0
    %2274 = vmatprep.subr.mxu0 0.0
    %2275 = vmatpush1.xpose.msra.mxu0 0.0
    %2276 = vmatprep.subr.mxu0 0.0
    %2277 = vmatpush1.xpose.msra.mxu0 0.0
    %2278 = vmatprep.subr.mxu0 0.0
    %2279 = vmatpush1.xpose.msra.mxu0 0.0
    %2280 = vmatprep.subr.mxu0 0.0
    %2281 = vmatpush1.xpose.msra.mxu0 0.0
    %2282 = vmatprep.subr.mxu0 0.0
    %2283 = vmatpush1.xpose.msra.mxu0 0.0
    %2284 = vmatprep.subr.mxu0 0.0
    %2285 = vmatpush1.xpose.msra.mxu0 0.0
    %2286 = vmatprep.subr.mxu0 0.0
    %2287 = vmatpush1.xpose.msra.mxu0 0.0
    %2288 = vmatprep.subr.mxu0 0.0
    %2289 = vmatpush1.xpose.msra.mxu0 0.0
    %2290 = vmatprep.subr.mxu0 0.0
    %2291 = vmatpush1.xpose.msra.mxu0 0.0
    %2292 = vmatprep.subr.mxu0 0.0
    %2293 = vmatpush1.xpose.msra.mxu0 0.0
    %2294 = vmatprep.subr.mxu0 0.0
    %2295 = vmatpush1.xpose.msra.mxu0 0.0
    %2296 = vmatprep.subr.mxu0 0.0
    %2297 = vmatpush1.xpose.msra.mxu0 0.0
    %2298 = vmatprep.subr.mxu0 0.0
    %2299 = vmatpush1.xpose.msra.mxu0 0.0
    %2300 = vmatprep.subr.mxu0 0.0
    %2301 = vmatpush1.xpose.msra.mxu0 0.0
    %2302 = vmatprep.subr.mxu0 0.0
    %2303 = vmatpush1.xpose.msra.mxu0 0.0
    %2304 = vmatprep.subr.mxu0 0.0
    %2305 = vmatpush1.xpose.msra.mxu0 0.0
    %2306 = vmatprep.subr.mxu0 0.0
    %2307 = vmatpush1.xpose.msra.mxu0 0.0
    %2308 = vmatprep.subr.mxu0 0.0
    %2309 = vmatpush1.xpose.msra.mxu0 0.0
    %2310 = vmatprep.subr.mxu0 0.0
    %2311 = vmatpush1.xpose.msra.mxu0 0.0
    %2312 = vmatprep.subr.mxu0 0.0
    %2313 = vmatpush1.xpose.msra.mxu0 0.0
    %2314 = vmatprep.subr.mxu0 0.0
    %2315 = vmatpush1.xpose.msra.mxu0 0.0
    %2316 = vmatprep.subr.mxu0 0.0
    %2317 = vmatpush1.xpose.msra.mxu0 0.0
    %2318 = vmatprep.subr.mxu0 0.0
    %2319 = vmatpush1.xpose.msra.mxu0 0.0
    %2320 = vmatprep.mubr.f32.mxu0 0.0
    %2321 = vmatmul.mubr.f32.gmra.mrb[0].mxu0 %v2252
    %v2322 = vpop.f32.mrb[0].mxu0
    %v2323 = vadd.f32 0.0, %v2322
    %v2324 = vpop.f32.mrb[0].mxu0
    %2325 = vdwg.mxu0
    %2326 = vrot.lane.b32.xlu0 %v2089, 96
    %v2327 = vpop.permute.xlu0 %2326
    %v2328 = vsel %vm235, %v2089, 0
    %v2330 = vsel %vm235, %v2327, 0
    %2332 = vmatprep.subr.mxu0 0.0
    %2333 = vmatpush1.xpose.msra.mxu0 %v2330
    %2334 = vmatprep.subr.mxu0 0.0
    %2335 = vmatpush1.xpose.msra.mxu0 0.0
    %2336 = vmatprep.subr.mxu0 0.0
    %2337 = vmatpush1.xpose.msra.mxu0 0.0
    %2338 = vmatprep.subr.mxu0 0.0
    %2339 = vmatpush1.xpose.msra.mxu0 0.0
    %2340 = vmatprep.subr.mxu0 0.0
    %2341 = vmatpush1.xpose.msra.mxu0 0.0
    %2342 = vmatprep.subr.mxu0 0.0
    %2343 = vmatpush1.xpose.msra.mxu0 0.0
    %2344 = vmatprep.subr.mxu0 0.0
    %2345 = vmatpush1.xpose.msra.mxu0 0.0
    %2346 = vmatprep.subr.mxu0 0.0
    %2347 = vmatpush1.xpose.msra.mxu0 0.0
    %2348 = vmatprep.subr.mxu0 0.0
    %2349 = vmatpush1.xpose.msra.mxu0 0.0
    %2350 = vmatprep.subr.mxu0 0.0
    %2351 = vmatpush1.xpose.msra.mxu0 0.0
    %2352 = vmatprep.subr.mxu0 0.0
    %2353 = vmatpush1.xpose.msra.mxu0 0.0
    %2354 = vmatprep.subr.mxu0 0.0
    %2355 = vmatpush1.xpose.msra.mxu0 0.0
    %2356 = vmatprep.subr.mxu0 0.0
    %2357 = vmatpush1.xpose.msra.mxu0 0.0
    %2358 = vmatprep.subr.mxu0 0.0
    %2359 = vmatpush1.xpose.msra.mxu0 0.0
    %2360 = vmatprep.subr.mxu0 0.0
    %2361 = vmatpush1.xpose.msra.mxu0 0.0
    %2362 = vmatprep.subr.mxu0 0.0
    %2363 = vmatpush1.xpose.msra.mxu0 0.0
    %2364 = vmatprep.subr.mxu0 0.0
    %2365 = vmatpush1.xpose.msra.mxu0 0.0
    %2366 = vmatprep.subr.mxu0 0.0
    %2367 = vmatpush1.xpose.msra.mxu0 0.0
    %2368 = vmatprep.subr.mxu0 0.0
    %2369 = vmatpush1.xpose.msra.mxu0 0.0
    %2370 = vmatprep.subr.mxu0 0.0
    %2371 = vmatpush1.xpose.msra.mxu0 0.0
    %2372 = vmatprep.subr.mxu0 0.0
    %2373 = vmatpush1.xpose.msra.mxu0 0.0
    %2374 = vmatprep.subr.mxu0 0.0
    %2375 = vmatpush1.xpose.msra.mxu0 0.0
    %2376 = vmatprep.subr.mxu0 0.0
    %2377 = vmatpush1.xpose.msra.mxu0 0.0
    %2378 = vmatprep.subr.mxu0 0.0
    %2379 = vmatpush1.xpose.msra.mxu0 0.0
    %2380 = vmatprep.subr.mxu0 0.0
    %2381 = vmatpush1.xpose.msra.mxu0 0.0
    %2382 = vmatprep.subr.mxu0 0.0
    %2383 = vmatpush1.xpose.msra.mxu0 0.0
    %2384 = vmatprep.subr.mxu0 0.0
    %2385 = vmatpush1.xpose.msra.mxu0 0.0
    %2386 = vmatprep.subr.mxu0 0.0
    %2387 = vmatpush1.xpose.msra.mxu0 0.0
    %2388 = vmatprep.subr.mxu0 0.0
    %2389 = vmatpush1.xpose.msra.mxu0 0.0
    %2390 = vmatprep.subr.mxu0 0.0
    %2391 = vmatpush1.xpose.msra.mxu0 0.0
    %2392 = vmatprep.subr.mxu0 0.0
    %2393 = vmatpush1.xpose.msra.mxu0 0.0
    %2394 = vmatprep.subr.mxu0 0.0
    %2395 = vmatpush1.xpose.msra.mxu0 0.0
    %2396 = vmatprep.mubr.f32.mxu0 0.0
    %2397 = vmatmul.mubr.f32.gmra.mrb[0].mxu0 %v2328
    %v2398 = vpop.f32.mrb[0].mxu0
    %v2399 = vadd.f32 0.0, %v2398
    %v2400 = vpop.f32.mrb[0].mxu0
    %2401 = vdwg.mxu0
    %2402 = vrot.lane.b32.xlu0 %v2091, 96
    %v2403 = vpop.permute.xlu0 %2402
    %v2404 = vsel %vm235, %v2091, 0
    %v2406 = vsel %vm235, %v2403, 0
    %2408 = vmatprep.subr.mxu0 0.0
    %2409 = vmatpush1.xpose.msra.mxu0 %v2406
    %2410 = vmatprep.subr.mxu0 0.0
    %2411 = vmatpush1.xpose.msra.mxu0 0.0
    %2412 = vmatprep.subr.mxu0 0.0
    %2413 = vmatpush1.xpose.msra.mxu0 0.0
    %2414 = vmatprep.subr.mxu0 0.0
    %2415 = vmatpush1.xpose.msra.mxu0 0.0
    %2416 = vmatprep.subr.mxu0 0.0
    %2417 = vmatpush1.xpose.msra.mxu0 0.0
    %2418 = vmatprep.subr.mxu0 0.0
    %2419 = vmatpush1.xpose.msra.mxu0 0.0
    %2420 = vmatprep.subr.mxu0 0.0
    %2421 = vmatpush1.xpose.msra.mxu0 0.0
    %2422 = vmatprep.subr.mxu0 0.0
    %2423 = vmatpush1.xpose.msra.mxu0 0.0
    %2424 = vmatprep.subr.mxu0 0.0
    %2425 = vmatpush1.xpose.msra.mxu0 0.0
    %2426 = vmatprep.subr.mxu0 0.0
    %2427 = vmatpush1.xpose.msra.mxu0 0.0
    %2428 = vmatprep.subr.mxu0 0.0
    %2429 = vmatpush1.xpose.msra.mxu0 0.0
    %2430 = vmatprep.subr.mxu0 0.0
    %2431 = vmatpush1.xpose.msra.mxu0 0.0
    %2432 = vmatprep.subr.mxu0 0.0
    %2433 = vmatpush1.xpose.msra.mxu0 0.0
    %2434 = vmatprep.subr.mxu0 0.0
    %2435 = vmatpush1.xpose.msra.mxu0 0.0
    %2436 = vmatprep.subr.mxu0 0.0
    %2437 = vmatpush1.xpose.msra.mxu0 0.0
    %2438 = vmatprep.subr.mxu0 0.0
    %2439 = vmatpush1.xpose.msra.mxu0 0.0
    %2440 = vmatprep.subr.mxu0 0.0
    %2441 = vmatpush1.xpose.msra.mxu0 0.0
    %2442 = vmatprep.subr.mxu0 0.0
    %2443 = vmatpush1.xpose.msra.mxu0 0.0
    %2444 = vmatprep.subr.mxu0 0.0
    %2445 = vmatpush1.xpose.msra.mxu0 0.0
    %2446 = vmatprep.subr.mxu0 0.0
    %2447 = vmatpush1.xpose.msra.mxu0 0.0
    %2448 = vmatprep.subr.mxu0 0.0
    %2449 = vmatpush1.xpose.msra.mxu0 0.0
    %2450 = vmatprep.subr.mxu0 0.0
    %2451 = vmatpush1.xpose.msra.mxu0 0.0
    %2452 = vmatprep.subr.mxu0 0.0
    %2453 = vmatpush1.xpose.msra.mxu0 0.0
    %2454 = vmatprep.subr.mxu0 0.0
    %2455 = vmatpush1.xpose.msra.mxu0 0.0
    %2456 = vmatprep.subr.mxu0 0.0
    %2457 = vmatpush1.xpose.msra.mxu0 0.0
    %2458 = vmatprep.subr.mxu0 0.0
    %2459 = vmatpush1.xpose.msra.mxu0 0.0
    %2460 = vmatprep.subr.mxu0 0.0
    %2461 = vmatpush1.xpose.msra.mxu0 0.0
    %2462 = vmatprep.subr.mxu0 0.0
    %2463 = vmatpush1.xpose.msra.mxu0 0.0
    %2464 = vmatprep.subr.mxu0 0.0
    %2465 = vmatpush1.xpose.msra.mxu0 0.0
    %2466 = vmatprep.subr.mxu0 0.0
    %2467 = vmatpush1.xpose.msra.mxu0 0.0
    %2468 = vmatprep.subr.mxu0 0.0
    %2469 = vmatpush1.xpose.msra.mxu0 0.0
    %2470 = vmatprep.subr.mxu0 0.0
    %2471 = vmatpush1.xpose.msra.mxu0 0.0
    %2472 = vmatprep.mubr.f32.mxu0 0.0
    %2473 = vmatmul.mubr.f32.gmra.mrb[0].mxu0 %v2404
    %v2474 = vpop.f32.mrb[0].mxu0
    %v2475 = vadd.f32 0.0, %v2474
    %v2476 = vpop.f32.mrb[0].mxu0
    %2477 = vdwg.mxu0
    %2478 = vrot.lane.b32.xlu0 %v2093, 96
    %v2479 = vpop.permute.xlu0 %2478
    %v2480 = vsel %vm235, %v2093, 0
    %v2482 = vsel %vm235, %v2479, 0
    %2484 = vmatprep.subr.mxu0 0.0
    %2485 = vmatpush1.xpose.msra.mxu0 %v2482
    %2486 = vmatprep.subr.mxu0 0.0
    %2487 = vmatpush1.xpose.msra.mxu0 0.0
    %2488 = vmatprep.subr.mxu0 0.0
    %2489 = vmatpush1.xpose.msra.mxu0 0.0
    %2490 = vmatprep.subr.mxu0 0.0
    %2491 = vmatpush1.xpose.msra.mxu0 0.0
    %2492 = vmatprep.subr.mxu0 0.0
    %2493 = vmatpush1.xpose.msra.mxu0 0.0
    %2494 = vmatprep.subr.mxu0 0.0
    %2495 = vmatpush1.xpose.msra.mxu0 0.0
    %2496 = vmatprep.subr.mxu0 0.0
    %2497 = vmatpush1.xpose.msra.mxu0 0.0
    %2498 = vmatprep.subr.mxu0 0.0
    %2499 = vmatpush1.xpose.msra.mxu0 0.0
    %2500 = vmatprep.subr.mxu0 0.0
    %2501 = vmatpush1.xpose.msra.mxu0 0.0
    %2502 = vmatprep.subr.mxu0 0.0
    %2503 = vmatpush1.xpose.msra.mxu0 0.0
    %2504 = vmatprep.subr.mxu0 0.0
    %2505 = vmatpush1.xpose.msra.mxu0 0.0
    %2506 = vmatprep.subr.mxu0 0.0
    %2507 = vmatpush1.xpose.msra.mxu0 0.0
    %2508 = vmatprep.subr.mxu0 0.0
    %2509 = vmatpush1.xpose.msra.mxu0 0.0
    %2510 = vmatprep.subr.mxu0 0.0
    %2511 = vmatpush1.xpose.msra.mxu0 0.0
    %2512 = vmatprep.subr.mxu0 0.0
    %2513 = vmatpush1.xpose.msra.mxu0 0.0
    %2514 = vmatprep.subr.mxu0 0.0
    %2515 = vmatpush1.xpose.msra.mxu0 0.0
    %2516 = vmatprep.subr.mxu0 0.0
    %2517 = vmatpush1.xpose.msra.mxu0 0.0
    %2518 = vmatprep.subr.mxu0 0.0
    %2519 = vmatpush1.xpose.msra.mxu0 0.0
    %2520 = vmatprep.subr.mxu0 0.0
    %2521 = vmatpush1.xpose.msra.mxu0 0.0
    %2522 = vmatprep.subr.mxu0 0.0
    %2523 = vmatpush1.xpose.msra.mxu0 0.0
    %2524 = vmatprep.subr.mxu0 0.0
    %2525 = vmatpush1.xpose.msra.mxu0 0.0
    %2526 = vmatprep.subr.mxu0 0.0
    %2527 = vmatpush1.xpose.msra.mxu0 0.0
    %2528 = vmatprep.subr.mxu0 0.0
    %2529 = vmatpush1.xpose.msra.mxu0 0.0
    %2530 = vmatprep.subr.mxu0 0.0
    %2531 = vmatpush1.xpose.msra.mxu0 0.0
    %2532 = vmatprep.subr.mxu0 0.0
    %2533 = vmatpush1.xpose.msra.mxu0 0.0
    %2534 = vmatprep.subr.mxu0 0.0
    %2535 = vmatpush1.xpose.msra.mxu0 0.0
    %2536 = vmatprep.subr.mxu0 0.0
    %2537 = vmatpush1.xpose.msra.mxu0 0.0
    %2538 = vmatprep.subr.mxu0 0.0
    %2539 = vmatpush1.xpose.msra.mxu0 0.0
    %2540 = vmatprep.subr.mxu0 0.0
    %2541 = vmatpush1.xpose.msra.mxu0 0.0
    %2542 = vmatprep.subr.mxu0 0.0
    %2543 = vmatpush1.xpose.msra.mxu0 0.0
    %2544 = vmatprep.subr.mxu0 0.0
    %2545 = vmatpush1.xpose.msra.mxu0 0.0
    %2546 = vmatprep.subr.mxu0 0.0
    %2547 = vmatpush1.xpose.msra.mxu0 0.0
    %2548 = vmatprep.mubr.f32.mxu0 0.0
    %2549 = vmatmul.mubr.f32.gmra.mrb[0].mxu0 %v2480
    %v2550 = vpop.f32.mrb[0].mxu0
    %v2551 = vadd.f32 0.0, %v2550
    %v2552 = vpop.f32.mrb[0].mxu0
    %2553 = vdwg.mxu0
    %2554 = vrot.lane.b32.xlu0 %v2095, 96
    %v2555 = vpop.permute.xlu0 %2554
    %v2556 = vsel %vm235, %v2095, 0
    %v2558 = vsel %vm235, %v2555, 0
    %2560 = vmatprep.subr.mxu0 0.0
    %2561 = vmatpush1.xpose.msra.mxu0 %v2558
    %2562 = vmatprep.subr.mxu0 0.0
    %2563 = vmatpush1.xpose.msra.mxu0 0.0
    %2564 = vmatprep.subr.mxu0 0.0
    %2565 = vmatpush1.xpose.msra.mxu0 0.0
    %2566 = vmatprep.subr.mxu0 0.0
    %2567 = vmatpush1.xpose.msra.mxu0 0.0
    %2568 = vmatprep.subr.mxu0 0.0
    %2569 = vmatpush1.xpose.msra.mxu0 0.0
    %2570 = vmatprep.subr.mxu0 0.0
    %2571 = vmatpush1.xpose.msra.mxu0 0.0
    %2572 = vmatprep.subr.mxu0 0.0
    %2573 = vmatpush1.xpose.msra.mxu0 0.0
    %2574 = vmatprep.subr.mxu0 0.0
    %2575 = vmatpush1.xpose.msra.mxu0 0.0
    %2576 = vmatprep.subr.mxu0 0.0
    %2577 = vmatpush1.xpose.msra.mxu0 0.0
    %2578 = vmatprep.subr.mxu0 0.0
    %2579 = vmatpush1.xpose.msra.mxu0 0.0
    %2580 = vmatprep.subr.mxu0 0.0
    %2581 = vmatpush1.xpose.msra.mxu0 0.0
    %2582 = vmatprep.subr.mxu0 0.0
    %2583 = vmatpush1.xpose.msra.mxu0 0.0
    %2584 = vmatprep.subr.mxu0 0.0
    %2585 = vmatpush1.xpose.msra.mxu0 0.0
    %2586 = vmatprep.subr.mxu0 0.0
    %2587 = vmatpush1.xpose.msra.mxu0 0.0
    %2588 = vmatprep.subr.mxu0 0.0
    %2589 = vmatpush1.xpose.msra.mxu0 0.0
    %2590 = vmatprep.subr.mxu0 0.0
    %2591 = vmatpush1.xpose.msra.mxu0 0.0
    %2592 = vmatprep.subr.mxu0 0.0
    %2593 = vmatpush1.xpose.msra.mxu0 0.0
    %2594 = vmatprep.subr.mxu0 0.0
    %2595 = vmatpush1.xpose.msra.mxu0 0.0
    %2596 = vmatprep.subr.mxu0 0.0
    %2597 = vmatpush1.xpose.msra.mxu0 0.0
    %2598 = vmatprep.subr.mxu0 0.0
    %2599 = vmatpush1.xpose.msra.mxu0 0.0
    %2600 = vmatprep.subr.mxu0 0.0
    %2601 = vmatpush1.xpose.msra.mxu0 0.0
    %2602 = vmatprep.subr.mxu0 0.0
    %2603 = vmatpush1.xpose.msra.mxu0 0.0
    %2604 = vmatprep.subr.mxu0 0.0
    %2605 = vmatpush1.xpose.msra.mxu0 0.0
    %2606 = vmatprep.subr.mxu0 0.0
    %2607 = vmatpush1.xpose.msra.mxu0 0.0
    %2608 = vmatprep.subr.mxu0 0.0
    %2609 = vmatpush1.xpose.msra.mxu0 0.0
    %2610 = vmatprep.subr.mxu0 0.0
    %2611 = vmatpush1.xpose.msra.mxu0 0.0
    %2612 = vmatprep.subr.mxu0 0.0
    %2613 = vmatpush1.xpose.msra.mxu0 0.0
    %2614 = vmatprep.subr.mxu0 0.0
    %2615 = vmatpush1.xpose.msra.mxu0 0.0
    %2616 = vmatprep.subr.mxu0 0.0
    %2617 = vmatpush1.xpose.msra.mxu0 0.0
    %2618 = vmatprep.subr.mxu0 0.0
    %2619 = vmatpush1.xpose.msra.mxu0 0.0
    %2620 = vmatprep.subr.mxu0 0.0
    %2621 = vmatpush1.xpose.msra.mxu0 0.0
    %2622 = vmatprep.subr.mxu0 0.0
    %2623 = vmatpush1.xpose.msra.mxu0 0.0
    %2624 = vmatprep.mubr.f32.mxu0 0.0
    %2625 = vmatmul.mubr.f32.gmra.mrb[0].mxu0 %v2556
    %v2626 = vpop.f32.mrb[0].mxu0
    %v2627 = vadd.f32 0.0, %v2626
    %v2628 = vpop.f32.mrb[0].mxu0
    %2629 = vdwg.mxu0
    %2630 = vrot.lane.b32.xlu0 %v2097, 96
    %v2631 = vpop.permute.xlu0 %2630
    %v2632 = vsel %vm235, %v2097, 0
    %v2634 = vsel %vm235, %v2631, 0
    %2636 = vmatprep.subr.mxu0 0.0
    %2637 = vmatpush1.xpose.msra.mxu0 %v2634
    %2638 = vmatprep.subr.mxu0 0.0
    %2639 = vmatpush1.xpose.msra.mxu0 0.0
    %2640 = vmatprep.subr.mxu0 0.0
    %2641 = vmatpush1.xpose.msra.mxu0 0.0
    %2642 = vmatprep.subr.mxu0 0.0
    %2643 = vmatpush1.xpose.msra.mxu0 0.0
    %2644 = vmatprep.subr.mxu0 0.0
    %2645 = vmatpush1.xpose.msra.mxu0 0.0
    %2646 = vmatprep.subr.mxu0 0.0
    %2647 = vmatpush1.xpose.msra.mxu0 0.0
    %2648 = vmatprep.subr.mxu0 0.0
    %2649 = vmatpush1.xpose.msra.mxu0 0.0
    %2650 = vmatprep.subr.mxu0 0.0
    %2651 = vmatpush1.xpose.msra.mxu0 0.0
    %2652 = vmatprep.subr.mxu0 0.0
    %2653 = vmatpush1.xpose.msra.mxu0 0.0
    %2654 = vmatprep.subr.mxu0 0.0
    %2655 = vmatpush1.xpose.msra.mxu0 0.0
    %2656 = vmatprep.subr.mxu0 0.0
    %2657 = vmatpush1.xpose.msra.mxu0 0.0
    %2658 = vmatprep.subr.mxu0 0.0
    %2659 = vmatpush1.xpose.msra.mxu0 0.0
    %2660 = vmatprep.subr.mxu0 0.0
    %2661 = vmatpush1.xpose.msra.mxu0 0.0
    %2662 = vmatprep.subr.mxu0 0.0
    %2663 = vmatpush1.xpose.msra.mxu0 0.0
    %2664 = vmatprep.subr.mxu0 0.0
    %2665 = vmatpush1.xpose.msra.mxu0 0.0
    %2666 = vmatprep.subr.mxu0 0.0
    %2667 = vmatpush1.xpose.msra.mxu0 0.0
    %2668 = vmatprep.subr.mxu0 0.0
    %2669 = vmatpush1.xpose.msra.mxu0 0.0
    %2670 = vmatprep.subr.mxu0 0.0
    %2671 = vmatpush1.xpose.msra.mxu0 0.0
    %2672 = vmatprep.subr.mxu0 0.0
    %2673 = vmatpush1.xpose.msra.mxu0 0.0
    %2674 = vmatprep.subr.mxu0 0.0
    %2675 = vmatpush1.xpose.msra.mxu0 0.0
    %2676 = vmatprep.subr.mxu0 0.0
    %2677 = vmatpush1.xpose.msra.mxu0 0.0
    %2678 = vmatprep.subr.mxu0 0.0
    %2679 = vmatpush1.xpose.msra.mxu0 0.0
    %2680 = vmatprep.subr.mxu0 0.0
    %2681 = vmatpush1.xpose.msra.mxu0 0.0
    %2682 = vmatprep.subr.mxu0 0.0
    %2683 = vmatpush1.xpose.msra.mxu0 0.0
    %2684 = vmatprep.subr.mxu0 0.0
    %2685 = vmatpush1.xpose.msra.mxu0 0.0
    %2686 = vmatprep.subr.mxu0 0.0
    %2687 = vmatpush1.xpose.msra.mxu0 0.0
    %2688 = vmatprep.subr.mxu0 0.0
    %2689 = vmatpush1.xpose.msra.mxu0 0.0
    %2690 = vmatprep.subr.mxu0 0.0
    %2691 = vmatpush1.xpose.msra.mxu0 0.0
    %2692 = vmatprep.subr.mxu0 0.0
    %2693 = vmatpush1.xpose.msra.mxu0 0.0
    %2694 = vmatprep.subr.mxu0 0.0
    %2695 = vmatpush1.xpose.msra.mxu0 0.0
    %2696 = vmatprep.subr.mxu0 0.0
    %2697 = vmatpush1.xpose.msra.mxu0 0.0
    %2698 = vmatprep.subr.mxu0 0.0
    %2699 = vmatpush1.xpose.msra.mxu0 0.0
    %2700 = vmatprep.mubr.f32.mxu0 0.0
    %2701 = vmatmul.mubr.f32.gmra.mrb[0].mxu0 %v2632
    %v2702 = vpop.f32.mrb[0].mxu0
    %v2703 = vadd.f32 0.0, %v2702
    %v2704 = vpop.f32.mrb[0].mxu0
    %2705 = vdwg.mxu0
    %v2706 = vmul.f32 %v2171, 0.35355338
    %v2707 = vmul.f32 %v2247, 0.35355338
    %v2708 = vmul.f32 %v2323, 0.35355338
    %v2709 = vmul.f32 %v2399, 0.35355338
    %v2710 = vmul.f32 %v2475, 0.35355338
    %v2711 = vmul.f32 %v2551, 0.35355338
    %v2712 = vmul.f32 %v2627, 0.35355338
    %v2713 = vmul.f32 %v2703, 0.35355338
    %v2714 = vadd.f32 %v2706, %v855
    %v2715 = vadd.f32 %v2707, %v859
    %v2716 = vadd.f32 %v2708, %v855
    %v2717 = vadd.f32 %v2709, %v859
    %v2718 = vadd.f32 %v2710, %v855
    %v2719 = vadd.f32 %v2711, %v859
    %v2720 = vadd.f32 %v2712, %v855
    %v2721 = vadd.f32 %v2713, %v859
    %v2722 = vsel %vm235, %v2714, -inf
    %2723 = vmax.xlane.f32.xlu0 %v2722
    %v2724 = vpop.xlane.xlu0 %2723
    %v2725 = vsel %vm235, %v2715, -inf
    %2726 = vmax.xlane.f32.xlu0 %v2725
    %v2727 = vpop.xlane.xlu0 %2726
    %v2728 = vsel %vm235, %v2716, -inf
    %2729 = vmax.xlane.f32.xlu0 %v2728
    %v2730 = vpop.xlane.xlu0 %2729
    %v2731 = vsel %vm235, %v2717, -inf
    %2732 = vmax.xlane.f32.xlu0 %v2731
    %v2733 = vpop.xlane.xlu0 %2732
    %v2734 = vsel %vm235, %v2718, -inf
    %2735 = vmax.xlane.f32.xlu0 %v2734
    %v2736 = vpop.xlane.xlu0 %2735
    %v2737 = vsel %vm235, %v2719, -inf
    %2738 = vmax.xlane.f32.xlu0 %v2737
    %v2739 = vpop.xlane.xlu0 %2738
    %v2740 = vsel %vm235, %v2720, -inf
    %2741 = vmax.xlane.f32.xlu0 %v2740
    %v2742 = vpop.xlane.xlu0 %2741
    %v2743 = vsel %vm235, %v2721, -inf
    %2744 = vmax.xlane.f32.xlu0 %v2743
    %v2745 = vpop.xlane.xlu0 %2744
    %v2746 = vsub.f32 %v2714, %v2724
    %v2747 = vsub.f32 %v2715, %v2727
    %v2748 = vsub.f32 %v2716, %v2730
    %v2749 = vsub.f32 %v2717, %v2733
    %v2750 = vsub.f32 %v2718, %v2736
    %v2751 = vsub.f32 %v2719, %v2739
    %v2752 = vsub.f32 %v2720, %v2742
    %v2753 = vsub.f32 %v2721, %v2745
    %v2754 = vmul.f32 %v2746, 1.442695
    %v2755 = vpow.pop %v2754
    %v2756 = vmul.f32 %v2747, 1.442695
    %v2757 = vpow.pop %v2756
    %v2758 = vmul.f32 %v2748, 1.442695
    %v2759 = vpow.pop %v2758
    %v2760 = vmul.f32 %v2749, 1.442695
    %v2761 = vpow.pop %v2760
    %v2762 = vmul.f32 %v2750, 1.442695
    %v2763 = vpow.pop %v2762
    %v2764 = vmul.f32 %v2751, 1.442695
    %v2765 = vpow.pop %v2764
    %v2766 = vmul.f32 %v2752, 1.442695
    %v2767 = vpow.pop %v2766
    %v2768 = vmul.f32 %v2753, 1.442695
    %v2769 = vpow.pop %v2768
    %v2770 = vsel %vm235, %v2755, 0.0
    %2771 = vadd.xlane.f32.xlu0 %v2770
    %v2772 = vpop.xlane.xlu0 %2771
    %v2773 = vsel %vm235, %v2757, 0.0
    %2774 = vadd.xlane.f32.xlu0 %v2773
    %v2775 = vpop.xlane.xlu0 %2774
    %v2776 = vsel %vm235, %v2759, 0.0
    %2777 = vadd.xlane.f32.xlu0 %v2776
    %v2778 = vpop.xlane.xlu0 %2777
    %v2779 = vsel %vm235, %v2761, 0.0
    %2780 = vadd.xlane.f32.xlu0 %v2779
    %v2781 = vpop.xlane.xlu0 %2780
    %v2782 = vsel %vm235, %v2763, 0.0
    %2783 = vadd.xlane.f32.xlu0 %v2782
    %v2784 = vpop.xlane.xlu0 %2783
    %v2785 = vsel %vm235, %v2765, 0.0
    %2786 = vadd.xlane.f32.xlu0 %v2785
    %v2787 = vpop.xlane.xlu0 %2786
    %v2788 = vsel %vm235, %v2767, 0.0
    %2789 = vadd.xlane.f32.xlu0 %v2788
    %v2790 = vpop.xlane.xlu0 %2789
    %v2791 = vsel %vm235, %v2769, 0.0
    %2792 = vadd.xlane.f32.xlu0 %v2791
    %v2793 = vpop.xlane.xlu0 %2792
    %v2794 = vrcp.pop %v2772
    %v2795 = vmul.f32 %v2755, %v2794
    %v2796 = vrcp.pop %v2775
    %v2797 = vmul.f32 %v2757, %v2796
    %v2798 = vrcp.pop %v2778
    %v2799 = vmul.f32 %v2759, %v2798
    %v2800 = vrcp.pop %v2781
    %v2801 = vmul.f32 %v2761, %v2800
    %v2802 = vrcp.pop %v2784
    %v2803 = vmul.f32 %v2763, %v2802
    %v2804 = vrcp.pop %v2787
    %v2805 = vmul.f32 %v2765, %v2804
    %v2806 = vrcp.pop %v2790
    %v2807 = vmul.f32 %v2767, %v2806
    %v2808 = vrcp.pop %v2793
    %v2809 = vmul.f32 %v2769, %v2808
    %2810 = vrot.lane.b32.xlu0 %v2076, 64
    %v2811 = vpop.permute.xlu0 %2810
    %v2814 = vsel %vm235, %v2795, 0
    %2816 = vmatprep.subr.mxu0 0.0
    %2817 = vmatpush1.msra.mxu0 %v2811
    %2818 = vmatprep.subr.mxu0 0.0
    %2819 = vmatpush1.msra.mxu0 0.0
    %2820 = vmatprep.subr.mxu0 0.0
    %2821 = vmatpush1.msra.mxu0 0.0
    %2822 = vmatprep.subr.mxu0 0.0
    %2823 = vmatpush1.msra.mxu0 0.0
    %2824 = vmatprep.subr.mxu0 0.0
    %2825 = vmatpush1.msra.mxu0 0.0
    %2826 = vmatprep.subr.mxu0 0.0
    %2827 = vmatpush1.msra.mxu0 0.0
    %2828 = vmatprep.subr.mxu0 0.0
    %2829 = vmatpush1.msra.mxu0 0.0
    %2830 = vmatprep.subr.mxu0 0.0
    %2831 = vmatpush1.msra.mxu0 0.0
    %2832 = vmatprep.subr.mxu0 0.0
    %2833 = vmatpush1.msra.mxu0 0.0
    %2834 = vmatprep.subr.mxu0 0.0
    %2835 = vmatpush1.msra.mxu0 0.0
    %2836 = vmatprep.subr.mxu0 0.0
    %2837 = vmatpush1.msra.mxu0 0.0
    %2838 = vmatprep.subr.mxu0 0.0
    %2839 = vmatpush1.msra.mxu0 0.0
    %2840 = vmatprep.subr.mxu0 0.0
    %2841 = vmatpush1.msra.mxu0 0.0
    %2842 = vmatprep.subr.mxu0 0.0
    %2843 = vmatpush1.msra.mxu0 0.0
    %2844 = vmatprep.subr.mxu0 0.0
    %2845 = vmatpush1.msra.mxu0 0.0
    %2846 = vmatprep.subr.mxu0 0.0
    %2847 = vmatpush1.msra.mxu0 0.0
    %2848 = vmatprep.subr.mxu0 0.0
    %2849 = vmatpush1.msra.mxu0 0.0
    %2850 = vmatprep.subr.mxu0 0.0
    %2851 = vmatpush1.msra.mxu0 0.0
    %2852 = vmatprep.subr.mxu0 0.0
    %2853 = vmatpush1.msra.mxu0 0.0
    %2854 = vmatprep.subr.mxu0 0.0
    %2855 = vmatpush1.msra.mxu0 0.0
    %2856 = vmatprep.subr.mxu0 0.0
    %2857 = vmatpush1.msra.mxu0 0.0
    %2858 = vmatprep.subr.mxu0 0.0
    %2859 = vmatpush1.msra.mxu0 0.0
    %2860 = vmatprep.subr.mxu0 0.0
    %2861 = vmatpush1.msra.mxu0 0.0
    %2862 = vmatprep.subr.mxu0 0.0
    %2863 = vmatpush1.msra.mxu0 0.0
    %2864 = vmatprep.subr.mxu0 0.0
    %2865 = vmatpush1.msra.mxu0 0.0
    %2866 = vmatprep.subr.mxu0 0.0
    %2867 = vmatpush1.msra.mxu0 0.0
    %2868 = vmatprep.subr.mxu0 0.0
    %2869 = vmatpush1.msra.mxu0 0.0
    %2870 = vmatprep.subr.mxu0 0.0
    %2871 = vmatpush1.msra.mxu0 0.0
    %2872 = vmatprep.subr.mxu0 0.0
    %2873 = vmatpush1.msra.mxu0 0.0
    %2874 = vmatprep.subr.mxu0 0.0
    %2875 = vmatpush1.msra.mxu0 0.0
    %2876 = vmatprep.subr.mxu0 0.0
    %2877 = vmatpush1.msra.mxu0 0.0
    %2878 = vmatprep.subr.mxu0 0.0
    %2879 = vmatpush1.msra.mxu0 0.0
    %2880 = vmatprep.mubr.f32.mxu0 0.0
    %2881 = vmatmul.mubr.f32.gmra.mrb[0].mxu0 %v2814
    %v2882 = vpop.f32.mrb[0].mxu0
    %v2883 = vadd.f32 0.0, %v2882
    %v2884 = vpop.f32.mrb[0].mxu0
    %2885 = vdwg.mxu0
    %2886 = vrot.lane.b32.xlu0 %v2081, 64
    %v2887 = vpop.permute.xlu0 %2886
    %v2890 = vsel %vm235, %v2797, 0
    %2892 = vmatprep.subr.mxu0 0.0
    %2893 = vmatpush1.msra.mxu0 %v2887
    %2894 = vmatprep.subr.mxu0 0.0
    %2895 = vmatpush1.msra.mxu0 0.0
    %2896 = vmatprep.subr.mxu0 0.0
    %2897 = vmatpush1.msra.mxu0 0.0
    %2898 = vmatprep.subr.mxu0 0.0
    %2899 = vmatpush1.msra.mxu0 0.0
    %2900 = vmatprep.subr.mxu0 0.0
    %2901 = vmatpush1.msra.mxu0 0.0
    %2902 = vmatprep.subr.mxu0 0.0
    %2903 = vmatpush1.msra.mxu0 0.0
    %2904 = vmatprep.subr.mxu0 0.0
    %2905 = vmatpush1.msra.mxu0 0.0
    %2906 = vmatprep.subr.mxu0 0.0
    %2907 = vmatpush1.msra.mxu0 0.0
    %2908 = vmatprep.subr.mxu0 0.0
    %2909 = vmatpush1.msra.mxu0 0.0
    %2910 = vmatprep.subr.mxu0 0.0
    %2911 = vmatpush1.msra.mxu0 0.0
    %2912 = vmatprep.subr.mxu0 0.0
    %2913 = vmatpush1.msra.mxu0 0.0
    %2914 = vmatprep.subr.mxu0 0.0
    %2915 = vmatpush1.msra.mxu0 0.0
    %2916 = vmatprep.subr.mxu0 0.0
    %2917 = vmatpush1.msra.mxu0 0.0
    %2918 = vmatprep.subr.mxu0 0.0
    %2919 = vmatpush1.msra.mxu0 0.0
    %2920 = vmatprep.subr.mxu0 0.0
    %2921 = vmatpush1.msra.mxu0 0.0
    %2922 = vmatprep.subr.mxu0 0.0
    %2923 = vmatpush1.msra.mxu0 0.0
    %2924 = vmatprep.subr.mxu0 0.0
    %2925 = vmatpush1.msra.mxu0 0.0
    %2926 = vmatprep.subr.mxu0 0.0
    %2927 = vmatpush1.msra.mxu0 0.0
    %2928 = vmatprep.subr.mxu0 0.0
    %2929 = vmatpush1.msra.mxu0 0.0
    %2930 = vmatprep.subr.mxu0 0.0
    %2931 = vmatpush1.msra.mxu0 0.0
    %2932 = vmatprep.subr.mxu0 0.0
    %2933 = vmatpush1.msra.mxu0 0.0
    %2934 = vmatprep.subr.mxu0 0.0
    %2935 = vmatpush1.msra.mxu0 0.0
    %2936 = vmatprep.subr.mxu0 0.0
    %2937 = vmatpush1.msra.mxu0 0.0
    %2938 = vmatprep.subr.mxu0 0.0
    %2939 = vmatpush1.msra.mxu0 0.0
    %2940 = vmatprep.subr.mxu0 0.0
    %2941 = vmatpush1.msra.mxu0 0.0
    %2942 = vmatprep.subr.mxu0 0.0
    %2943 = vmatpush1.msra.mxu0 0.0
    %2944 = vmatprep.subr.mxu0 0.0
    %2945 = vmatpush1.msra.mxu0 0.0
    %2946 = vmatprep.subr.mxu0 0.0
    %2947 = vmatpush1.msra.mxu0 0.0
    %2948 = vmatprep.subr.mxu0 0.0
    %2949 = vmatpush1.msra.mxu0 0.0
    %2950 = vmatprep.subr.mxu0 0.0
    %2951 = vmatpush1.msra.mxu0 0.0
    %2952 = vmatprep.subr.mxu0 0.0
    %2953 = vmatpush1.msra.mxu0 0.0
    %2954 = vmatprep.subr.mxu0 0.0
    %2955 = vmatpush1.msra.mxu0 0.0
    %2956 = vmatprep.mubr.f32.mxu0 0.0
    %2957 = vmatmul.mubr.f32.gmra.mrb[0].mxu0 %v2890
    %v2958 = vpop.f32.mrb[0].mxu0
    %v2959 = vadd.f32 0.0, %v2958
    %v2960 = vpop.f32.mrb[0].mxu0
    %2961 = vdwg.mxu0
    %2962 = vrot.lane.b32.xlu0 %v2087, 64
    %v2963 = vpop.permute.xlu0 %2962
    %v2966 = vsel %vm235, %v2799, 0
    %2968 = vmatprep.subr.mxu0 0.0
    %2969 = vmatpush1.msra.mxu0 %v2963
    %2970 = vmatprep.subr.mxu0 0.0
    %2971 = vmatpush1.msra.mxu0 0.0
    %2972 = vmatprep.subr.mxu0 0.0
    %2973 = vmatpush1.msra.mxu0 0.0
    %2974 = vmatprep.subr.mxu0 0.0
    %2975 = vmatpush1.msra.mxu0 0.0
    %2976 = vmatprep.subr.mxu0 0.0
    %2977 = vmatpush1.msra.mxu0 0.0
    %2978 = vmatprep.subr.mxu0 0.0
    %2979 = vmatpush1.msra.mxu0 0.0
    %2980 = vmatprep.subr.mxu0 0.0
    %2981 = vmatpush1.msra.mxu0 0.0
    %2982 = vmatprep.subr.mxu0 0.0
    %2983 = vmatpush1.msra.mxu0 0.0
    %2984 = vmatprep.subr.mxu0 0.0
    %2985 = vmatpush1.msra.mxu0 0.0
    %2986 = vmatprep.subr.mxu0 0.0
    %2987 = vmatpush1.msra.mxu0 0.0
    %2988 = vmatprep.subr.mxu0 0.0
    %2989 = vmatpush1.msra.mxu0 0.0
    %2990 = vmatprep.subr.mxu0 0.0
    %2991 = vmatpush1.msra.mxu0 0.0
    %2992 = vmatprep.subr.mxu0 0.0
    %2993 = vmatpush1.msra.mxu0 0.0
    %2994 = vmatprep.subr.mxu0 0.0
    %2995 = vmatpush1.msra.mxu0 0.0
    %2996 = vmatprep.subr.mxu0 0.0
    %2997 = vmatpush1.msra.mxu0 0.0
    %2998 = vmatprep.subr.mxu0 0.0
    %2999 = vmatpush1.msra.mxu0 0.0
    %3000 = vmatprep.subr.mxu0 0.0
    %3001 = vmatpush1.msra.mxu0 0.0
    %3002 = vmatprep.subr.mxu0 0.0
    %3003 = vmatpush1.msra.mxu0 0.0
    %3004 = vmatprep.subr.mxu0 0.0
    %3005 = vmatpush1.msra.mxu0 0.0
    %3006 = vmatprep.subr.mxu0 0.0
    %3007 = vmatpush1.msra.mxu0 0.0
    %3008 = vmatprep.subr.mxu0 0.0
    %3009 = vmatpush1.msra.mxu0 0.0
    %3010 = vmatprep.subr.mxu0 0.0
    %3011 = vmatpush1.msra.mxu0 0.0
    %3012 = vmatprep.subr.mxu0 0.0
    %3013 = vmatpush1.msra.mxu0 0.0
    %3014 = vmatprep.subr.mxu0 0.0
    %3015 = vmatpush1.msra.mxu0 0.0
    %3016 = vmatprep.subr.mxu0 0.0
    %3017 = vmatpush1.msra.mxu0 0.0
    %3018 = vmatprep.subr.mxu0 0.0
    %3019 = vmatpush1.msra.mxu0 0.0
    %3020 = vmatprep.subr.mxu0 0.0
    %3021 = vmatpush1.msra.mxu0 0.0
    %3022 = vmatprep.subr.mxu0 0.0
    %3023 = vmatpush1.msra.mxu0 0.0
    %3024 = vmatprep.subr.mxu0 0.0
    %3025 = vmatpush1.msra.mxu0 0.0
    %3026 = vmatprep.subr.mxu0 0.0
    %3027 = vmatpush1.msra.mxu0 0.0
    %3028 = vmatprep.subr.mxu0 0.0
    %3029 = vmatpush1.msra.mxu0 0.0
    %3030 = vmatprep.subr.mxu0 0.0
    %3031 = vmatpush1.msra.mxu0 0.0
    %3032 = vmatprep.mubr.f32.mxu0 0.0
    %3033 = vmatmul.mubr.f32.gmra.mrb[0].mxu0 %v2966
    %v3034 = vpop.f32.mrb[0].mxu0
    %v3035 = vadd.f32 0.0, %v3034
    %v3036 = vpop.f32.mrb[0].mxu0
    %3037 = vdwg.mxu0
    %3038 = vrot.lane.b32.xlu0 %v2089, 64
    %v3039 = vpop.permute.xlu0 %3038
    %v3042 = vsel %vm235, %v2801, 0
    %3044 = vmatprep.subr.mxu0 0.0
    %3045 = vmatpush1.msra.mxu0 %v3039
    %3046 = vmatprep.subr.mxu0 0.0
    %3047 = vmatpush1.msra.mxu0 0.0
    %3048 = vmatprep.subr.mxu0 0.0
    %3049 = vmatpush1.msra.mxu0 0.0
    %3050 = vmatprep.subr.mxu0 0.0
    %3051 = vmatpush1.msra.mxu0 0.0
    %3052 = vmatprep.subr.mxu0 0.0
    %3053 = vmatpush1.msra.mxu0 0.0
    %3054 = vmatprep.subr.mxu0 0.0
    %3055 = vmatpush1.msra.mxu0 0.0
    %3056 = vmatprep.subr.mxu0 0.0
    %3057 = vmatpush1.msra.mxu0 0.0
    %3058 = vmatprep.subr.mxu0 0.0
    %3059 = vmatpush1.msra.mxu0 0.0
    %3060 = vmatprep.subr.mxu0 0.0
    %3061 = vmatpush1.msra.mxu0 0.0
    %3062 = vmatprep.subr.mxu0 0.0
    %3063 = vmatpush1.msra.mxu0 0.0
    %3064 = vmatprep.subr.mxu0 0.0
    %3065 = vmatpush1.msra.mxu0 0.0
    %3066 = vmatprep.subr.mxu0 0.0
    %3067 = vmatpush1.msra.mxu0 0.0
    %3068 = vmatprep.subr.mxu0 0.0
    %3069 = vmatpush1.msra.mxu0 0.0
    %3070 = vmatprep.subr.mxu0 0.0
    %3071 = vmatpush1.msra.mxu0 0.0
    %3072 = vmatprep.subr.mxu0 0.0
    %3073 = vmatpush1.msra.mxu0 0.0
    %3074 = vmatprep.subr.mxu0 0.0
    %3075 = vmatpush1.msra.mxu0 0.0
    %3076 = vmatprep.subr.mxu0 0.0
    %3077 = vmatpush1.msra.mxu0 0.0
    %3078 = vmatprep.subr.mxu0 0.0
    %3079 = vmatpush1.msra.mxu0 0.0
    %3080 = vmatprep.subr.mxu0 0.0
    %3081 = vmatpush1.msra.mxu0 0.0
    %3082 = vmatprep.subr.mxu0 0.0
    %3083 = vmatpush1.msra.mxu0 0.0
    %3084 = vmatprep.subr.mxu0 0.0
    %3085 = vmatpush1.msra.mxu0 0.0
    %3086 = vmatprep.subr.mxu0 0.0
    %3087 = vmatpush1.msra.mxu0 0.0
    %3088 = vmatprep.subr.mxu0 0.0
    %3089 = vmatpush1.msra.mxu0 0.0
    %3090 = vmatprep.subr.mxu0 0.0
    %3091 = vmatpush1.msra.mxu0 0.0
    %3092 = vmatprep.subr.mxu0 0.0
    %3093 = vmatpush1.msra.mxu0 0.0
    %3094 = vmatprep.subr.mxu0 0.0
    %3095 = vmatpush1.msra.mxu0 0.0
    %3096 = vmatprep.subr.mxu0 0.0
    %3097 = vmatpush1.msra.mxu0 0.0
    %3098 = vmatprep.subr.mxu0 0.0
    %3099 = vmatpush1.msra.mxu0 0.0
    %3100 = vmatprep.subr.mxu0 0.0
    %3101 = vmatpush1.msra.mxu0 0.0
    %3102 = vmatprep.subr.mxu0 0.0
    %3103 = vmatpush1.msra.mxu0 0.0
    %3104 = vmatprep.subr.mxu0 0.0
    %3105 = vmatpush1.msra.mxu0 0.0
    %3106 = vmatprep.subr.mxu0 0.0
    %3107 = vmatpush1.msra.mxu0 0.0
    %3108 = vmatprep.mubr.f32.mxu0 0.0
    %3109 = vmatmul.mubr.f32.gmra.mrb[0].mxu0 %v3042
    %v3110 = vpop.f32.mrb[0].mxu0
    %v3111 = vadd.f32 0.0, %v3110
    %v3112 = vpop.f32.mrb[0].mxu0
    %3113 = vdwg.mxu0
    %3114 = vrot.lane.b32.xlu0 %v2091, 64
    %v3115 = vpop.permute.xlu0 %3114
    %v3118 = vsel %vm235, %v2803, 0
    %3120 = vmatprep.subr.mxu0 0.0
    %3121 = vmatpush1.msra.mxu0 %v3115
    %3122 = vmatprep.subr.mxu0 0.0
    %3123 = vmatpush1.msra.mxu0 0.0
    %3124 = vmatprep.subr.mxu0 0.0
    %3125 = vmatpush1.msra.mxu0 0.0
    %3126 = vmatprep.subr.mxu0 0.0
    %3127 = vmatpush1.msra.mxu0 0.0
    %3128 = vmatprep.subr.mxu0 0.0
    %3129 = vmatpush1.msra.mxu0 0.0
    %3130 = vmatprep.subr.mxu0 0.0
    %3131 = vmatpush1.msra.mxu0 0.0
    %3132 = vmatprep.subr.mxu0 0.0
    %3133 = vmatpush1.msra.mxu0 0.0
    %3134 = vmatprep.subr.mxu0 0.0
    %3135 = vmatpush1.msra.mxu0 0.0
    %3136 = vmatprep.subr.mxu0 0.0
    %3137 = vmatpush1.msra.mxu0 0.0
    %3138 = vmatprep.subr.mxu0 0.0
    %3139 = vmatpush1.msra.mxu0 0.0
    %3140 = vmatprep.subr.mxu0 0.0
    %3141 = vmatpush1.msra.mxu0 0.0
    %3142 = vmatprep.subr.mxu0 0.0
    %3143 = vmatpush1.msra.mxu0 0.0
    %3144 = vmatprep.subr.mxu0 0.0
    %3145 = vmatpush1.msra.mxu0 0.0
    %3146 = vmatprep.subr.mxu0 0.0
    %3147 = vmatpush1.msra.mxu0 0.0
    %3148 = vmatprep.subr.mxu0 0.0
    %3149 = vmatpush1.msra.mxu0 0.0
    %3150 = vmatprep.subr.mxu0 0.0
    %3151 = vmatpush1.msra.mxu0 0.0
    %3152 = vmatprep.subr.mxu0 0.0
    %3153 = vmatpush1.msra.mxu0 0.0
    %3154 = vmatprep.subr.mxu0 0.0
    %3155 = vmatpush1.msra.mxu0 0.0
    %3156 = vmatprep.subr.mxu0 0.0
    %3157 = vmatpush1.msra.mxu0 0.0
    %3158 = vmatprep.subr.mxu0 0.0
    %3159 = vmatpush1.msra.mxu0 0.0
    %3160 = vmatprep.subr.mxu0 0.0
    %3161 = vmatpush1.msra.mxu0 0.0
    %3162 = vmatprep.subr.mxu0 0.0
    %3163 = vmatpush1.msra.mxu0 0.0
    %3164 = vmatprep.subr.mxu0 0.0
    %3165 = vmatpush1.msra.mxu0 0.0
    %3166 = vmatprep.subr.mxu0 0.0
    %3167 = vmatpush1.msra.mxu0 0.0
    %3168 = vmatprep.subr.mxu0 0.0
    %3169 = vmatpush1.msra.mxu0 0.0
    %3170 = vmatprep.subr.mxu0 0.0
    %3171 = vmatpush1.msra.mxu0 0.0
    %3172 = vmatprep.subr.mxu0 0.0
    %3173 = vmatpush1.msra.mxu0 0.0
    %3174 = vmatprep.subr.mxu0 0.0
    %3175 = vmatpush1.msra.mxu0 0.0
    %3176 = vmatprep.subr.mxu0 0.0
    %3177 = vmatpush1.msra.mxu0 0.0
    %3178 = vmatprep.subr.mxu0 0.0
    %3179 = vmatpush1.msra.mxu0 0.0
    %3180 = vmatprep.subr.mxu0 0.0
    %3181 = vmatpush1.msra.mxu0 0.0
    %3182 = vmatprep.subr.mxu0 0.0
    %3183 = vmatpush1.msra.mxu0 0.0
    %3184 = vmatprep.mubr.f32.mxu0 0.0
    %3185 = vmatmul.mubr.f32.gmra.mrb[0].mxu0 %v3118
    %v3186 = vpop.f32.mrb[0].mxu0
    %v3187 = vadd.f32 0.0, %v3186
    %v3188 = vpop.f32.mrb[0].mxu0
    %3189 = vdwg.mxu0
    %3190 = vrot.lane.b32.xlu0 %v2093, 64
    %v3191 = vpop.permute.xlu0 %3190
    %v3194 = vsel %vm235, %v2805, 0
    %3196 = vmatprep.subr.mxu0 0.0
    %3197 = vmatpush1.msra.mxu0 %v3191
    %3198 = vmatprep.subr.mxu0 0.0
    %3199 = vmatpush1.msra.mxu0 0.0
    %3200 = vmatprep.subr.mxu0 0.0
    %3201 = vmatpush1.msra.mxu0 0.0
    %3202 = vmatprep.subr.mxu0 0.0
    %3203 = vmatpush1.msra.mxu0 0.0
    %3204 = vmatprep.subr.mxu0 0.0
    %3205 = vmatpush1.msra.mxu0 0.0
    %3206 = vmatprep.subr.mxu0 0.0
    %3207 = vmatpush1.msra.mxu0 0.0
    %3208 = vmatprep.subr.mxu0 0.0
    %3209 = vmatpush1.msra.mxu0 0.0
    %3210 = vmatprep.subr.mxu0 0.0
    %3211 = vmatpush1.msra.mxu0 0.0
    %3212 = vmatprep.subr.mxu0 0.0
    %3213 = vmatpush1.msra.mxu0 0.0
    %3214 = vmatprep.subr.mxu0 0.0
    %3215 = vmatpush1.msra.mxu0 0.0
    %3216 = vmatprep.subr.mxu0 0.0
    %3217 = vmatpush1.msra.mxu0 0.0
    %3218 = vmatprep.subr.mxu0 0.0
    %3219 = vmatpush1.msra.mxu0 0.0
    %3220 = vmatprep.subr.mxu0 0.0
    %3221 = vmatpush1.msra.mxu0 0.0
    %3222 = vmatprep.subr.mxu0 0.0
    %3223 = vmatpush1.msra.mxu0 0.0
    %3224 = vmatprep.subr.mxu0 0.0
    %3225 = vmatpush1.msra.mxu0 0.0
    %3226 = vmatprep.subr.mxu0 0.0
    %3227 = vmatpush1.msra.mxu0 0.0
    %3228 = vmatprep.subr.mxu0 0.0
    %3229 = vmatpush1.msra.mxu0 0.0
    %3230 = vmatprep.subr.mxu0 0.0
    %3231 = vmatpush1.msra.mxu0 0.0
    %3232 = vmatprep.subr.mxu0 0.0
    %3233 = vmatpush1.msra.mxu0 0.0
    %3234 = vmatprep.subr.mxu0 0.0
    %3235 = vmatpush1.msra.mxu0 0.0
    %3236 = vmatprep.subr.mxu0 0.0
    %3237 = vmatpush1.msra.mxu0 0.0
    %3238 = vmatprep.subr.mxu0 0.0
    %3239 = vmatpush1.msra.mxu0 0.0
    %3240 = vmatprep.subr.mxu0 0.0
    %3241 = vmatpush1.msra.mxu0 0.0
    %3242 = vmatprep.subr.mxu0 0.0
    %3243 = vmatpush1.msra.mxu0 0.0
    %3244 = vmatprep.subr.mxu0 0.0
    %3245 = vmatpush1.msra.mxu0 0.0
    %3246 = vmatprep.subr.mxu0 0.0
    %3247 = vmatpush1.msra.mxu0 0.0
    %3248 = vmatprep.subr.mxu0 0.0
    %3249 = vmatpush1.msra.mxu0 0.0
    %3250 = vmatprep.subr.mxu0 0.0
    %3251 = vmatpush1.msra.mxu0 0.0
    %3252 = vmatprep.subr.mxu0 0.0
    %3253 = vmatpush1.msra.mxu0 0.0
    %3254 = vmatprep.subr.mxu0 0.0
    %3255 = vmatpush1.msra.mxu0 0.0
    %3256 = vmatprep.subr.mxu0 0.0
    %3257 = vmatpush1.msra.mxu0 0.0
    %3258 = vmatprep.subr.mxu0 0.0
    %3259 = vmatpush1.msra.mxu0 0.0
    %3260 = vmatprep.mubr.f32.mxu0 0.0
    %3261 = vmatmul.mubr.f32.gmra.mrb[0].mxu0 %v3194
    %v3262 = vpop.f32.mrb[0].mxu0
    %v3263 = vadd.f32 0.0, %v3262
    %v3264 = vpop.f32.mrb[0].mxu0
    %3265 = vdwg.mxu0
    %3266 = vrot.lane.b32.xlu0 %v2095, 64
    %v3267 = vpop.permute.xlu0 %3266
    %v3270 = vsel %vm235, %v2807, 0
    %3272 = vmatprep.subr.mxu0 0.0
    %3273 = vmatpush1.msra.mxu0 %v3267
    %3274 = vmatprep.subr.mxu0 0.0
    %3275 = vmatpush1.msra.mxu0 0.0
    %3276 = vmatprep.subr.mxu0 0.0
    %3277 = vmatpush1.msra.mxu0 0.0
    %3278 = vmatprep.subr.mxu0 0.0
    %3279 = vmatpush1.msra.mxu0 0.0
    %3280 = vmatprep.subr.mxu0 0.0
    %3281 = vmatpush1.msra.mxu0 0.0
    %3282 = vmatprep.subr.mxu0 0.0
    %3283 = vmatpush1.msra.mxu0 0.0
    %3284 = vmatprep.subr.mxu0 0.0
    %3285 = vmatpush1.msra.mxu0 0.0
    %3286 = vmatprep.subr.mxu0 0.0
    %3287 = vmatpush1.msra.mxu0 0.0
    %3288 = vmatprep.subr.mxu0 0.0
    %3289 = vmatpush1.msra.mxu0 0.0
    %3290 = vmatprep.subr.mxu0 0.0
    %3291 = vmatpush1.msra.mxu0 0.0
    %3292 = vmatprep.subr.mxu0 0.0
    %3293 = vmatpush1.msra.mxu0 0.0
    %3294 = vmatprep.subr.mxu0 0.0
    %3295 = vmatpush1.msra.mxu0 0.0
    %3296 = vmatprep.subr.mxu0 0.0
    %3297 = vmatpush1.msra.mxu0 0.0
    %3298 = vmatprep.subr.mxu0 0.0
    %3299 = vmatpush1.msra.mxu0 0.0
    %3300 = vmatprep.subr.mxu0 0.0
    %3301 = vmatpush1.msra.mxu0 0.0
    %3302 = vmatprep.subr.mxu0 0.0
    %3303 = vmatpush1.msra.mxu0 0.0
    %3304 = vmatprep.subr.mxu0 0.0
    %3305 = vmatpush1.msra.mxu0 0.0
    %3306 = vmatprep.subr.mxu0 0.0
    %3307 = vmatpush1.msra.mxu0 0.0
    %3308 = vmatprep.subr.mxu0 0.0
    %3309 = vmatpush1.msra.mxu0 0.0
    %3310 = vmatprep.subr.mxu0 0.0
    %3311 = vmatpush1.msra.mxu0 0.0
    %3312 = vmatprep.subr.mxu0 0.0
    %3313 = vmatpush1.msra.mxu0 0.0
    %3314 = vmatprep.subr.mxu0 0.0
    %3315 = vmatpush1.msra.mxu0 0.0
    %3316 = vmatprep.subr.mxu0 0.0
    %3317 = vmatpush1.msra.mxu0 0.0
    %3318 = vmatprep.subr.mxu0 0.0
    %3319 = vmatpush1.msra.mxu0 0.0
    %3320 = vmatprep.subr.mxu0 0.0
    %3321 = vmatpush1.msra.mxu0 0.0
    %3322 = vmatprep.subr.mxu0 0.0
    %3323 = vmatpush1.msra.mxu0 0.0
    %3324 = vmatprep.subr.mxu0 0.0
    %3325 = vmatpush1.msra.mxu0 0.0
    %3326 = vmatprep.subr.mxu0 0.0
    %3327 = vmatpush1.msra.mxu0 0.0
    %3328 = vmatprep.subr.mxu0 0.0
    %3329 = vmatpush1.msra.mxu0 0.0
    %3330 = vmatprep.subr.mxu0 0.0
    %3331 = vmatpush1.msra.mxu0 0.0
    %3332 = vmatprep.subr.mxu0 0.0
    %3333 = vmatpush1.msra.mxu0 0.0
    %3334 = vmatprep.subr.mxu0 0.0
    %3335 = vmatpush1.msra.mxu0 0.0
    %3336 = vmatprep.mubr.f32.mxu0 0.0
    %3337 = vmatmul.mubr.f32.gmra.mrb[0].mxu0 %v3270
    %v3338 = vpop.f32.mrb[0].mxu0
    %v3339 = vadd.f32 0.0, %v3338
    %v3340 = vpop.f32.mrb[0].mxu0
    %3341 = vdwg.mxu0
    %3342 = vrot.lane.b32.xlu0 %v2097, 64
    %v3343 = vpop.permute.xlu0 %3342
    %v3346 = vsel %vm235, %v2809, 0
    %3348 = vmatprep.subr.mxu0 0.0
    %3349 = vmatpush1.msra.mxu0 %v3343
    %3350 = vmatprep.subr.mxu0 0.0
    %3351 = vmatpush1.msra.mxu0 0.0
    %3352 = vmatprep.subr.mxu0 0.0
    %3353 = vmatpush1.msra.mxu0 0.0
    %3354 = vmatprep.subr.mxu0 0.0
    %3355 = vmatpush1.msra.mxu0 0.0
    %3356 = vmatprep.subr.mxu0 0.0
    %3357 = vmatpush1.msra.mxu0 0.0
    %3358 = vmatprep.subr.mxu0 0.0
    %3359 = vmatpush1.msra.mxu0 0.0
    %3360 = vmatprep.subr.mxu0 0.0
    %3361 = vmatpush1.msra.mxu0 0.0
    %3362 = vmatprep.subr.mxu0 0.0
    %3363 = vmatpush1.msra.mxu0 0.0
    %3364 = vmatprep.subr.mxu0 0.0
    %3365 = vmatpush1.msra.mxu0 0.0
    %3366 = vmatprep.subr.mxu0 0.0
    %3367 = vmatpush1.msra.mxu0 0.0
    %3368 = vmatprep.subr.mxu0 0.0
    %3369 = vmatpush1.msra.mxu0 0.0
    %3370 = vmatprep.subr.mxu0 0.0
    %3371 = vmatpush1.msra.mxu0 0.0
    %3372 = vmatprep.subr.mxu0 0.0
    %3373 = vmatpush1.msra.mxu0 0.0
    %3374 = vmatprep.subr.mxu0 0.0
    %3375 = vmatpush1.msra.mxu0 0.0
    %3376 = vmatprep.subr.mxu0 0.0
    %3377 = vmatpush1.msra.mxu0 0.0
    %3378 = vmatprep.subr.mxu0 0.0
    %3379 = vmatpush1.msra.mxu0 0.0
    %3380 = vmatprep.subr.mxu0 0.0
    %3381 = vmatpush1.msra.mxu0 0.0
    %3382 = vmatprep.subr.mxu0 0.0
    %3383 = vmatpush1.msra.mxu0 0.0
    %3384 = vmatprep.subr.mxu0 0.0
    %3385 = vmatpush1.msra.mxu0 0.0
    %3386 = vmatprep.subr.mxu0 0.0
    %3387 = vmatpush1.msra.mxu0 0.0
    %3388 = vmatprep.subr.mxu0 0.0
    %3389 = vmatpush1.msra.mxu0 0.0
    %3390 = vmatprep.subr.mxu0 0.0
    %3391 = vmatpush1.msra.mxu0 0.0
    %3392 = vmatprep.subr.mxu0 0.0
    %3393 = vmatpush1.msra.mxu0 0.0
    %3394 = vmatprep.subr.mxu0 0.0
    %3395 = vmatpush1.msra.mxu0 0.0
    %3396 = vmatprep.subr.mxu0 0.0
    %3397 = vmatpush1.msra.mxu0 0.0
    %3398 = vmatprep.subr.mxu0 0.0
    %3399 = vmatpush1.msra.mxu0 0.0
    %3400 = vmatprep.subr.mxu0 0.0
    %3401 = vmatpush1.msra.mxu0 0.0
    %3402 = vmatprep.subr.mxu0 0.0
    %3403 = vmatpush1.msra.mxu0 0.0
    %3404 = vmatprep.subr.mxu0 0.0
    %3405 = vmatpush1.msra.mxu0 0.0
    %3406 = vmatprep.subr.mxu0 0.0
    %3407 = vmatpush1.msra.mxu0 0.0
    %3408 = vmatprep.subr.mxu0 0.0
    %3409 = vmatpush1.msra.mxu0 0.0
    %3410 = vmatprep.subr.mxu0 0.0
    %3411 = vmatpush1.msra.mxu0 0.0
    %3412 = vmatprep.mubr.f32.mxu0 0.0
    %3413 = vmatmul.mubr.f32.gmra.mrb[0].mxu0 %v3346
    %v3414 = vpop.f32.mrb[0].mxu0
    %v3415 = vadd.f32 0.0, %v3414
    %v3416 = vpop.f32.mrb[0].mxu0
    %3417 = vdwg.mxu0
    %3420 = vrot.lane.b32.xlu0 %v3035, 8
    %v3421 = vpop.permute.xlu0 %3420
    %3422 = vrot.lane.b32.xlu0 %v3111, 8
    %v3423 = vpop.permute.xlu0 %3422
    %3428 = vrot.lane.b32.xlu0 %v3187, 16
    %v3429 = vpop.permute.xlu0 %3428
    %3430 = vrot.lane.b32.xlu0 %v3263, 16
    %v3431 = vpop.permute.xlu0 %3430
    %3436 = vrot.lane.b32.xlu0 %v3339, 24
    %v3437 = vpop.permute.xlu0 %3436
    %3438 = vrot.lane.b32.xlu0 %v3415, 24
    %v3439 = vpop.permute.xlu0 %3438
    %v3442 = vsel %vm235, %v2883, %v3421
    %v3443 = vsel %vm235, %v2959, %v3423
    %v3444 = vsel %vm1592, %v3442, %v3429
    %v3445 = vsel %vm1592, %v3443, %v3431
    %v3446 = vsel %vm1595, %v3444, %v3437
    %v3447 = vsel %vm1595, %v3445, %v3439
    %s3448 = scalar_lea.vmem %s7, 32
    %v3449 = vld [vmem:[%s3448] sm:$0xff]
    %v3450 = vld [vmem:[%s3448 + $0x8] sm:$0xff]
    %v3451 = vld [vmem:[%s3448 + $0x10] sm:$0xff]
    %v3452 = vld [vmem:[%s3448 + $0x18] sm:$0xff]
    %s3453 = scalar_lea.vmem %s8, 1
    %v3454 = vld [vmem:[%s3453] sm:$0x1]
    %v3456 = vlaneseq
    %v3457 = vshrl.u32 %v3456, 7
    %v3458 = vsub.s32 0, %v3457
    %v3459 = vrot.slane %v3454, %v3458
    %v3462 = vsel %vm77, %v3446, 0
    %v3465 = vsel %vm77, %v3447, 0
    %3467 = vmatprep.subr.mxu0 0.0
    %3468 = vmatpush1.msra.mxu0 %v3449
    %3469 = vmatprep.subr.mxu0 0.0
    %3470 = vmatpush1.msra.mxu0 %v3450
    %3471 = vmatprep.subr.mxu0 0.0
    %3472 = vmatpush1.msra.mxu0 %v3451
    %3473 = vmatprep.subr.mxu0 0.0
    %3474 = vmatpush1.msra.mxu0 %v3452
    %3475 = vmatprep.subr.mxu0 0.0
    %3476 = vmatpush1.msra.mxu0 0.0
    %3477 = vmatprep.subr.mxu0 0.0
    %3478 = vmatpush1.msra.mxu0 0.0
    %3479 = vmatprep.subr.mxu0 0.0
    %3480 = vmatpush1.msra.mxu0 0.0
    %3481 = vmatprep.subr.mxu0 0.0
    %3482 = vmatpush1.msra.mxu0 0.0
    %3483 = vmatprep.subr.mxu0 0.0
    %3484 = vmatpush1.msra.mxu0 0.0
    %3485 = vmatprep.subr.mxu0 0.0
    %3486 = vmatpush1.msra.mxu0 0.0
    %3487 = vmatprep.subr.mxu0 0.0
    %3488 = vmatpush1.msra.mxu0 0.0
    %3489 = vmatprep.subr.mxu0 0.0
    %3490 = vmatpush1.msra.mxu0 0.0
    %3491 = vmatprep.subr.mxu0 0.0
    %3492 = vmatpush1.msra.mxu0 0.0
    %3493 = vmatprep.subr.mxu0 0.0
    %3494 = vmatpush1.msra.mxu0 0.0
    %3495 = vmatprep.subr.mxu0 0.0
    %3496 = vmatpush1.msra.mxu0 0.0
    %3497 = vmatprep.subr.mxu0 0.0
    %3498 = vmatpush1.msra.mxu0 0.0
    %3499 = vmatprep.subr.mxu0 0.0
    %3500 = vmatpush1.msra.mxu0 0.0
    %3501 = vmatprep.subr.mxu0 0.0
    %3502 = vmatpush1.msra.mxu0 0.0
    %3503 = vmatprep.subr.mxu0 0.0
    %3504 = vmatpush1.msra.mxu0 0.0
    %3505 = vmatprep.subr.mxu0 0.0
    %3506 = vmatpush1.msra.mxu0 0.0
    %3507 = vmatprep.subr.mxu0 0.0
    %3508 = vmatpush1.msra.mxu0 0.0
    %3509 = vmatprep.subr.mxu0 0.0
    %3510 = vmatpush1.msra.mxu0 0.0
    %3511 = vmatprep.subr.mxu0 0.0
    %3512 = vmatpush1.msra.mxu0 0.0
    %3513 = vmatprep.subr.mxu0 0.0
    %3514 = vmatpush1.msra.mxu0 0.0
    %3515 = vmatprep.subr.mxu0 0.0
    %3516 = vmatpush1.msra.mxu0 0.0
    %3517 = vmatprep.subr.mxu0 0.0
    %3518 = vmatpush1.msra.mxu0 0.0
    %3519 = vmatprep.subr.mxu0 0.0
    %3520 = vmatpush1.msra.mxu0 0.0
    %3521 = vmatprep.subr.mxu0 0.0
    %3522 = vmatpush1.msra.mxu0 0.0
    %3523 = vmatprep.subr.mxu0 0.0
    %3524 = vmatpush1.msra.mxu0 0.0
    %3525 = vmatprep.subr.mxu0 0.0
    %3526 = vmatpush1.msra.mxu0 0.0
    %3527 = vmatprep.subr.mxu0 0.0
    %3528 = vmatpush1.msra.mxu0 0.0
    %3529 = vmatprep.subr.mxu0 0.0
    %3530 = vmatpush1.msra.mxu0 0.0
    %3531 = vmatprep.mubr.f32.mxu0 0.0
    %3532 = vmatmul.mubr.f32.gmra.mrb[0].mxu0 %v3462
    %v3533 = vpop.f32.mrb[0].mxu0
    %v3534 = vadd.f32 %v3459, %v3533
    %v3535 = vpop.f32.mrb[0].mxu0
    %3536 = vmatprep.mubr.f32.mxu0 0.0
    %3537 = vmatmul.mubr.f32.gmra.mrb[0].mxu0 %v3465
    %v3538 = vpop.f32.mrb[0].mxu0
    %v3539 = vadd.f32 %v3459, %v3538
    %v3540 = vpop.f32.mrb[0].mxu0
    %3541 = vdwg.mxu0
    %v3542 = vadd.f32 %v3534, %v1988
    %v3543 = vadd.f32 %v3539, %v1989
    %s3544 = scalar_lea.vmem %s9, 1
    %v3545 = vld [vmem:[%s3544] sm:$0x1]
    %s3546 = scalar_lea.vmem %s10, 1
    %v3547 = vld [vmem:[%s3546] sm:$0x1]
    %v3548 = vsel %vm77, %v3542, 0.0
    %3549 = vadd.xlane.f32.xlu0 %v3548
    %v3550 = vpop.xlane.xlu0 %3549
    %v3551 = vsel %vm77, %v3543, 0.0
    %3552 = vadd.xlane.f32.xlu0 %v3551
    %v3553 = vpop.xlane.xlu0 %3552
    %v3554 = vmul.f32 %v3550, %v84
    %v3555 = vmul.f32 %v3553, %v84
    %v3556 = vsub.f32 %v3542, %v3554
    %v3557 = vsub.f32 %v3543, %v3555
    %v3558 = vmul.f32 %v3556, %v3556
    %v3559 = vmul.f32 %v3557, %v3557
    %v3560 = vsel %vm77, %v3558, 0.0
    %3561 = vadd.xlane.f32.xlu0 %v3560
    %v3562 = vpop.xlane.xlu0 %3561
    %v3563 = vsel %vm77, %v3559, 0.0
    %3564 = vadd.xlane.f32.xlu0 %v3563
    %v3565 = vpop.xlane.xlu0 %3564
    %v3566 = vmul.f32 %v3562, %v84
    %v3567 = vmul.f32 %v3565, %v84
    %v3568 = vadd.f32 %v3566, 1e-12
    %v3569 = vadd.f32 %v3567, 1e-12
    %v3570 = vrsqrt.pop %v3568
    %v3571 = vrsqrt.pop %v3569
    %v3572 = vmul.f32 %v3556, %v3570
    %v3573 = vmul.f32 %v3557, %v3571
    %v3575 = vlaneseq
    %v3576 = vshrl.u32 %v3575, 7
    %v3577 = vsub.s32 0, %v3576
    %v3578 = vrot.slane %v3545, %v3577
    %v3580 = vmul.f32 %v3572, %v3578
    %v3581 = vmul.f32 %v3573, %v3578
    %v3583 = vlaneseq
    %v3584 = vshrl.u32 %v3583, 7
    %v3585 = vsub.s32 0, %v3584
    %v3586 = vrot.slane %v3547, %v3585
    %v3588 = vadd.f32 %v3580, %v3586
    %v3589 = vadd.f32 %v3581, %v3586
    %s3590 = scalar_lea.vmem %s11, 32
    %v3591 = vld [vmem:[%s3590] sm:$0xff]
    %v3592 = vld [vmem:[%s3590 + $0x8] sm:$0xff]
    %v3593 = vld [vmem:[%s3590 + $0x10] sm:$0xff]
    %v3594 = vld [vmem:[%s3590 + $0x18] sm:$0xff]
    %s3595 = scalar_lea.vmem %s12, 1
    %v3596 = vld [vmem:[%s3595] sm:$0x1]
    %v3598 = vlaneseq
    %v3599 = vshrl.u32 %v3598, 7
    %v3600 = vsub.s32 0, %v3599
    %v3601 = vrot.slane %v3596, %v3600
    %v3604 = vsel %vm77, %v3588, 0
    %v3607 = vsel %vm77, %v3589, 0
    %3609 = vmatprep.subr.mxu0 0.0
    %3610 = vmatpush1.msra.mxu0 %v3591
    %3611 = vmatprep.subr.mxu0 0.0
    %3612 = vmatpush1.msra.mxu0 %v3592
    %3613 = vmatprep.subr.mxu0 0.0
    %3614 = vmatpush1.msra.mxu0 %v3593
    %3615 = vmatprep.subr.mxu0 0.0
    %3616 = vmatpush1.msra.mxu0 %v3594
    %3617 = vmatprep.subr.mxu0 0.0
    %3618 = vmatpush1.msra.mxu0 0.0
    %3619 = vmatprep.subr.mxu0 0.0
    %3620 = vmatpush1.msra.mxu0 0.0
    %3621 = vmatprep.subr.mxu0 0.0
    %3622 = vmatpush1.msra.mxu0 0.0
    %3623 = vmatprep.subr.mxu0 0.0
    %3624 = vmatpush1.msra.mxu0 0.0
    %3625 = vmatprep.subr.mxu0 0.0
    %3626 = vmatpush1.msra.mxu0 0.0
    %3627 = vmatprep.subr.mxu0 0.0
    %3628 = vmatpush1.msra.mxu0 0.0
    %3629 = vmatprep.subr.mxu0 0.0
    %3630 = vmatpush1.msra.mxu0 0.0
    %3631 = vmatprep.subr.mxu0 0.0
    %3632 = vmatpush1.msra.mxu0 0.0
    %3633 = vmatprep.subr.mxu0 0.0
    %3634 = vmatpush1.msra.mxu0 0.0
    %3635 = vmatprep.subr.mxu0 0.0
    %3636 = vmatpush1.msra.mxu0 0.0
    %3637 = vmatprep.subr.mxu0 0.0
    %3638 = vmatpush1.msra.mxu0 0.0
    %3639 = vmatprep.subr.mxu0 0.0
    %3640 = vmatpush1.msra.mxu0 0.0
    %3641 = vmatprep.subr.mxu0 0.0
    %3642 = vmatpush1.msra.mxu0 0.0
    %3643 = vmatprep.subr.mxu0 0.0
    %3644 = vmatpush1.msra.mxu0 0.0
    %3645 = vmatprep.subr.mxu0 0.0
    %3646 = vmatpush1.msra.mxu0 0.0
    %3647 = vmatprep.subr.mxu0 0.0
    %3648 = vmatpush1.msra.mxu0 0.0
    %3649 = vmatprep.subr.mxu0 0.0
    %3650 = vmatpush1.msra.mxu0 0.0
    %3651 = vmatprep.subr.mxu0 0.0
    %3652 = vmatpush1.msra.mxu0 0.0
    %3653 = vmatprep.subr.mxu0 0.0
    %3654 = vmatpush1.msra.mxu0 0.0
    %3655 = vmatprep.subr.mxu0 0.0
    %3656 = vmatpush1.msra.mxu0 0.0
    %3657 = vmatprep.subr.mxu0 0.0
    %3658 = vmatpush1.msra.mxu0 0.0
    %3659 = vmatprep.subr.mxu0 0.0
    %3660 = vmatpush1.msra.mxu0 0.0
    %3661 = vmatprep.subr.mxu0 0.0
    %3662 = vmatpush1.msra.mxu0 0.0
    %3663 = vmatprep.subr.mxu0 0.0
    %3664 = vmatpush1.msra.mxu0 0.0
    %3665 = vmatprep.subr.mxu0 0.0
    %3666 = vmatpush1.msra.mxu0 0.0
    %3667 = vmatprep.subr.mxu0 0.0
    %3668 = vmatpush1.msra.mxu0 0.0
    %3669 = vmatprep.subr.mxu0 0.0
    %3670 = vmatpush1.msra.mxu0 0.0
    %3671 = vmatprep.subr.mxu0 0.0
    %3672 = vmatpush1.msra.mxu0 0.0
    %3673 = vmatprep.mubr.f32.mxu0 0.0
    %3674 = vmatmul.mubr.f32.gmra.mrb[0].mxu0 %v3604
    %v3675 = vpop.f32.mrb[0].mxu0
    %v3676 = vadd.f32 %v3601, %v3675
    %v3677 = vpop.f32.mrb[0].mxu0
    %3678 = vmatprep.mubr.f32.mxu0 0.0
    %3679 = vmatmul.mubr.f32.gmra.mrb[0].mxu0 %v3607
    %v3680 = vpop.f32.mrb[0].mxu0
    %v3681 = vadd.f32 %v3601, %v3680
    %v3682 = vpop.f32.mrb[0].mxu0
    %3683 = vdwg.mxu0
    %v3684 = vmul.f32 %v3676, %v3676
    %v3685 = vmul.f32 %v3681, %v3681
    %v3686 = vmul.f32 %v3676, %v3684
    %v3687 = vmul.f32 %v3681, %v3685
    %v3688 = vmul.f32 %v3686, 0.044715
    %v3689 = vmul.f32 %v3687, 0.044715
    %v3690 = vadd.f32 %v3676, %v3688
    %v3691 = vadd.f32 %v3681, %v3689
    %v3692 = vmul.f32 %v3690, 0.7978846
    %v3693 = vmul.f32 %v3691, 0.7978846
    %v3694 = vtanh.pop %v3692
    %v3695 = vtanh.pop %v3693
    %v3696 = vadd.f32 %v3694, 1.0
    %v3697 = vadd.f32 %v3695, 1.0
    %v3698 = vmul.f32 %v3696, 0.5
    %v3699 = vmul.f32 %v3697, 0.5
    %v3700 = vmul.f32 %v3676, %v3698
    %v3701 = vmul.f32 %v3681, %v3699
    %s3702 = scalar_lea.vmem %s13, 128
    %v3703 = vld [vmem:[%s3702] sm:$0xff]
    %v3704 = vld [vmem:[%s3702 + $0x8] sm:$0xff]
    %v3705 = vld [vmem:[%s3702 + $0x10] sm:$0xff]
    %v3706 = vld [vmem:[%s3702 + $0x18] sm:$0xff]
    %v3707 = vld [vmem:[%s3702 + $0x20] sm:$0xff]
    %v3708 = vld [vmem:[%s3702 + $0x28] sm:$0xff]
    %v3709 = vld [vmem:[%s3702 + $0x30] sm:$0xff]
    %v3710 = vld [vmem:[%s3702 + $0x38] sm:$0xff]
    %v3711 = vld [vmem:[%s3702 + $0x40] sm:$0xff]
    %v3712 = vld [vmem:[%s3702 + $0x48] sm:$0xff]
    %v3713 = vld [vmem:[%s3702 + $0x50] sm:$0xff]
    %v3714 = vld [vmem:[%s3702 + $0x58] sm:$0xff]
    %v3715 = vld [vmem:[%s3702 + $0x60] sm:$0xff]
    %v3716 = vld [vmem:[%s3702 + $0x68] sm:$0xff]
    %v3717 = vld [vmem:[%s3702 + $0x70] sm:$0xff]
    %v3718 = vld [vmem:[%s3702 + $0x78] sm:$0xff]
    %s3719 = scalar_lea.vmem %s14, 1
    %v3720 = vld [vmem:[%s3719] sm:$0x1]
    %v3722 = vlaneseq
    %v3723 = vshrl.u32 %v3722, 7
    %v3724 = vsub.s32 0, %v3723
    %v3725 = vrot.slane %v3720, %v3724
    %3727 = vmatprep.subr.mxu0 0.0
    %3728 = vmatpush1.msra.mxu0 %v3703
    %3729 = vmatprep.subr.mxu0 0.0
    %3730 = vmatpush1.msra.mxu0 %v3704
    %3731 = vmatprep.subr.mxu0 0.0
    %3732 = vmatpush1.msra.mxu0 %v3705
    %3733 = vmatprep.subr.mxu0 0.0
    %3734 = vmatpush1.msra.mxu0 %v3706
    %3735 = vmatprep.subr.mxu0 0.0
    %3736 = vmatpush1.msra.mxu0 %v3707
    %3737 = vmatprep.subr.mxu0 0.0
    %3738 = vmatpush1.msra.mxu0 %v3708
    %3739 = vmatprep.subr.mxu0 0.0
    %3740 = vmatpush1.msra.mxu0 %v3709
    %3741 = vmatprep.subr.mxu0 0.0
    %3742 = vmatpush1.msra.mxu0 %v3710
    %3743 = vmatprep.subr.mxu0 0.0
    %3744 = vmatpush1.msra.mxu0 %v3711
    %3745 = vmatprep.subr.mxu0 0.0
    %3746 = vmatpush1.msra.mxu0 %v3712
    %3747 = vmatprep.subr.mxu0 0.0
    %3748 = vmatpush1.msra.mxu0 %v3713
    %3749 = vmatprep.subr.mxu0 0.0
    %3750 = vmatpush1.msra.mxu0 %v3714
    %3751 = vmatprep.subr.mxu0 0.0
    %3752 = vmatpush1.msra.mxu0 %v3715
    %3753 = vmatprep.subr.mxu0 0.0
    %3754 = vmatpush1.msra.mxu0 %v3716
    %3755 = vmatprep.subr.mxu0 0.0
    %3756 = vmatpush1.msra.mxu0 %v3717
    %3757 = vmatprep.subr.mxu0 0.0
    %3758 = vmatpush1.msra.mxu0 %v3718
    %3759 = vmatprep.subr.mxu0 0.0
    %3760 = vmatpush1.msra.mxu0 0.0
    %3761 = vmatprep.subr.mxu0 0.0
    %3762 = vmatpush1.msra.mxu0 0.0
    %3763 = vmatprep.subr.mxu0 0.0
    %3764 = vmatpush1.msra.mxu0 0.0
    %3765 = vmatprep.subr.mxu0 0.0
    %3766 = vmatpush1.msra.mxu0 0.0
    %3767 = vmatprep.subr.mxu0 0.0
    %3768 = vmatpush1.msra.mxu0 0.0
    %3769 = vmatprep.subr.mxu0 0.0
    %3770 = vmatpush1.msra.mxu0 0.0
    %3771 = vmatprep.subr.mxu0 0.0
    %3772 = vmatpush1.msra.mxu0 0.0
    %3773 = vmatprep.subr.mxu0 0.0
    %3774 = vmatpush1.msra.mxu0 0.0
    %3775 = vmatprep.subr.mxu0 0.0
    %3776 = vmatpush1.msra.mxu0 0.0
    %3777 = vmatprep.subr.mxu0 0.0
    %3778 = vmatpush1.msra.mxu0 0.0
    %3779 = vmatprep.subr.mxu0 0.0
    %3780 = vmatpush1.msra.mxu0 0.0
    %3781 = vmatprep.subr.mxu0 0.0
    %3782 = vmatpush1.msra.mxu0 0.0
    %3783 = vmatprep.subr.mxu0 0.0
    %3784 = vmatpush1.msra.mxu0 0.0
    %3785 = vmatprep.subr.mxu0 0.0
    %3786 = vmatpush1.msra.mxu0 0.0
    %3787 = vmatprep.subr.mxu0 0.0
    %3788 = vmatpush1.msra.mxu0 0.0
    %3789 = vmatprep.subr.mxu0 0.0
    %3790 = vmatpush1.msra.mxu0 0.0
    %3791 = vmatprep.mubr.f32.mxu0 0.0
    %3792 = vmatmul.mubr.f32.gmra.mrb[0].mxu0 %v3700
    %v3793 = vpop.f32.mrb[0].mxu0
    %v3794 = vadd.f32 %v3725, %v3793
    %v3795 = vpop.f32.mrb[0].mxu0
    %3796 = vmatprep.mubr.f32.mxu0 0.0
    %3797 = vmatmul.mubr.f32.gmra.mrb[0].mxu0 %v3701
    %v3798 = vpop.f32.mrb[0].mxu0
    %v3799 = vadd.f32 %v3725, %v3798
    %v3800 = vpop.f32.mrb[0].mxu0
    %3801 = vdwg.mxu0
    %v3802 = vadd.f32 %v3794, %v3588
    %v3803 = vadd.f32 %v3799, %v3589
    %s3804 = scalar_lea.vmem %s15, 1
    %v3805 = vld [vmem:[%s3804] sm:$0x1]
    %s3806 = scalar_lea.vmem %s16, 1
    %v3807 = vld [vmem:[%s3806] sm:$0x1]
    %v3808 = vsel %vm77, %v3802, 0.0
    %3809 = vadd.xlane.f32.xlu0 %v3808
    %v3810 = vpop.xlane.xlu0 %3809
    %v3811 = vsel %vm77, %v3803, 0.0
    %3812 = vadd.xlane.f32.xlu0 %v3811
    %v3813 = vpop.xlane.xlu0 %3812
    %v3814 = vmul.f32 %v3810, %v84
    %v3815 = vmul.f32 %v3813, %v84
    %v3816 = vsub.f32 %v3802, %v3814
    %v3817 = vsub.f32 %v3803, %v3815
    %v3818 = vmul.f32 %v3816, %v3816
    %v3819 = vmul.f32 %v3817, %v3817
    %v3820 = vsel %vm77, %v3818, 0.0
    %3821 = vadd.xlane.f32.xlu0 %v3820
    %v3822 = vpop.xlane.xlu0 %3821
    %v3823 = vsel %vm77, %v3819, 0.0
    %3824 = vadd.xlane.f32.xlu0 %v3823
    %v3825 = vpop.xlane.xlu0 %3824
    %v3826 = vmul.f32 %v3822, %v84
    %v3827 = vmul.f32 %v3825, %v84
    %v3828 = vadd.f32 %v3826, 1e-12
    %v3829 = vadd.f32 %v3827, 1e-12
    %v3830 = vrsqrt.pop %v3828
    %v3831 = vrsqrt.pop %v3829
    %v3832 = vmul.f32 %v3816, %v3830
    %v3833 = vmul.f32 %v3817, %v3831
    %v3835 = vlaneseq
    %v3836 = vshrl.u32 %v3835, 7
    %v3837 = vsub.s32 0, %v3836
    %v3838 = vrot.slane %v3805, %v3837
    %v3840 = vmul.f32 %v3832, %v3838
    %v3841 = vmul.f32 %v3833, %v3838
    %v3843 = vlaneseq
    %v3844 = vshrl.u32 %v3843, 7
    %v3845 = vsub.s32 0, %v3844
    %v3846 = vrot.slane %v3807, %v3845
    %v3848 = vadd.f32 %v3840, %v3846
    %v3849 = vadd.f32 %v3841, %v3846
    %v3850 = vsel %vm77, %v3848, 0.0
    %v3851 = vrot.slane %v3850, 4
    %v3852 = vadd.f32 %v3850, %v3851
    %v3853 = vrot.slane %v3852, 2
    %v3854 = vadd.f32 %v3852, %v3853
    %v3855 = vrot.slane %v3854, 1
    %v3856 = vadd.f32 %v3854, %v3855
    %v3857 = vsel %vm77, %v3849, 0.0
    %v3858 = vrot.slane %v3857, 4
    %v3859 = vadd.f32 %v3857, %v3858
    %v3860 = vrot.slane %v3859, 2
    %v3861 = vadd.f32 %v3859, %v3860
    %v3862 = vrot.slane %v3861, 1
    %v3863 = vadd.f32 %v3861, %v3862
    %v3864 = vrcp.pop 8.0
    %v3865 = vmul.f32 %v3856, %v3864
    %v3866 = vmul.f32 %v3863, %v3864
    %v3867 = vld [vmem:[%s17] sm:$0xff]
    %v3868 = vld [vmem:[%s17 + $0x8] sm:$0xff]
    %v3869 = vld [vmem:[%s17 + $0x10] sm:$0xff]
    %v3870 = vld [vmem:[%s17 + $0x18] sm:$0xff]
    %v3871 = vld [vmem:[%s18] sm:$0x1]
    %v3873 = vlaneseq
    %v3874 = vshrl.u32 %v3873, 7
    %v3875 = vsub.s32 0, %v3874
    %v3876 = vrot.slane %v3871, %v3875
    %vm3880 = vcmask 1041409
    %v3881 = vsel %vm3880, %v3866, %v3865
    %v3882 = vsel %vm77, %v3881, 0
    %3884 = vmatprep.subr.mxu0 0.0
    %3885 = vmatpush1.msra.mxu0 %v3867
    %3886 = vmatprep.subr.mxu0 0.0
    %3887 = vmatpush1.msra.mxu0 %v3868
    %3888 = vmatprep.subr.mxu0 0.0
    %3889 = vmatpush1.msra.mxu0 %v3869
    %3890 = vmatprep.subr.mxu0 0.0
    %3891 = vmatpush1.msra.mxu0 %v3870
    %3892 = vmatprep.subr.mxu0 0.0
    %3893 = vmatpush1.msra.mxu0 0.0
    %3894 = vmatprep.subr.mxu0 0.0
    %3895 = vmatpush1.msra.mxu0 0.0
    %3896 = vmatprep.subr.mxu0 0.0
    %3897 = vmatpush1.msra.mxu0 0.0
    %3898 = vmatprep.subr.mxu0 0.0
    %3899 = vmatpush1.msra.mxu0 0.0
    %3900 = vmatprep.subr.mxu0 0.0
    %3901 = vmatpush1.msra.mxu0 0.0
    %3902 = vmatprep.subr.mxu0 0.0
    %3903 = vmatpush1.msra.mxu0 0.0
    %3904 = vmatprep.subr.mxu0 0.0
    %3905 = vmatpush1.msra.mxu0 0.0
    %3906 = vmatprep.subr.mxu0 0.0
    %3907 = vmatpush1.msra.mxu0 0.0
    %3908 = vmatprep.subr.mxu0 0.0
    %3909 = vmatpush1.msra.mxu0 0.0
    %3910 = vmatprep.subr.mxu0 0.0
    %3911 = vmatpush1.msra.mxu0 0.0
    %3912 = vmatprep.subr.mxu0 0.0
    %3913 = vmatpush1.msra.mxu0 0.0
    %3914 = vmatprep.subr.mxu0 0.0
    %3915 = vmatpush1.msra.mxu0 0.0
    %3916 = vmatprep.subr.mxu0 0.0
    %3917 = vmatpush1.msra.mxu0 0.0
    %3918 = vmatprep.subr.mxu0 0.0
    %3919 = vmatpush1.msra.mxu0 0.0
    %3920 = vmatprep.subr.mxu0 0.0
    %3921 = vmatpush1.msra.mxu0 0.0
    %3922 = vmatprep.subr.mxu0 0.0
    %3923 = vmatpush1.msra.mxu0 0.0
    %3924 = vmatprep.subr.mxu0 0.0
    %3925 = vmatpush1.msra.mxu0 0.0
    %3926 = vmatprep.subr.mxu0 0.0
    %3927 = vmatpush1.msra.mxu0 0.0
    %3928 = vmatprep.subr.mxu0 0.0
    %3929 = vmatpush1.msra.mxu0 0.0
    %3930 = vmatprep.subr.mxu0 0.0
    %3931 = vmatpush1.msra.mxu0 0.0
    %3932 = vmatprep.subr.mxu0 0.0
    %3933 = vmatpush1.msra.mxu0 0.0
    %3934 = vmatprep.subr.mxu0 0.0
    %3935 = vmatpush1.msra.mxu0 0.0
    %3936 = vmatprep.subr.mxu0 0.0
    %3937 = vmatpush1.msra.mxu0 0.0
    %3938 = vmatprep.subr.mxu0 0.0
    %3939 = vmatpush1.msra.mxu0 0.0
    %3940 = vmatprep.subr.mxu0 0.0
    %3941 = vmatpush1.msra.mxu0 0.0
    %3942 = vmatprep.subr.mxu0 0.0
    %3943 = vmatpush1.msra.mxu0 0.0
    %3944 = vmatprep.subr.mxu0 0.0
    %3945 = vmatpush1.msra.mxu0 0.0
    %3946 = vmatprep.subr.mxu0 0.0
    %3947 = vmatpush1.msra.mxu0 0.0
    %3948 = vmatprep.mubr.f32.mxu0 0.0
    %3949 = vmatmul.mubr.f32.gmra.mrb[0].mxu0 %v3882
    %v3950 = vpop.f32.mrb[0].mxu0
    %v3951 = vadd.f32 %v3876, %v3950
    %v3952 = vpop.f32.mrb[0].mxu0
    %3953 = vdwg.mxu0
    %v3954 = vmax.f32 %v3951, 0.0
    %v3955 = vld [vmem:[%s19] sm:$0xff]
    %v3956 = vld [vmem:[%s19 + $0x8] sm:$0xff]
    %v3957 = vld [vmem:[%s19 + $0x10] sm:$0xff]
    %v3958 = vld [vmem:[%s19 + $0x18] sm:$0xff]
    %v3959 = vld [vmem:[%s19 + $0x20] sm:$0xff]
    %v3960 = vld [vmem:[%s19 + $0x28] sm:$0xff]
    %v3961 = vld [vmem:[%s19 + $0x30] sm:$0xff]
    %v3962 = vld [vmem:[%s19 + $0x38] sm:$0xff]
    %v3963 = vld [vmem:[%s19 + $0x40] sm:$0xff]
    %v3964 = vld [vmem:[%s19 + $0x48] sm:$0xff]
    %v3965 = vld [vmem:[%s19 + $0x50] sm:$0xff]
    %v3966 = vld [vmem:[%s19 + $0x58] sm:$0xff]
    %v3967 = vld [vmem:[%s19 + $0x60] sm:$0xff]
    %v3968 = vld [vmem:[%s19 + $0x68] sm:$0xff]
    %v3969 = vld [vmem:[%s19 + $0x70] sm:$0xff]
    %v3970 = vld [vmem:[%s19 + $0x78] sm:$0xff]
    %v3971 = vld [vmem:[%s20] sm:$0x1]
    %v3973 = vlaneseq
    %v3974 = vshrl.u32 %v3973, 7
    %v3975 = vsub.s32 0, %v3974
    %v3976 = vrot.slane %v3971, %v3975
    %3978 = vmatprep.subr.mxu0 0.0
    %3979 = vmatpush1.msra.mxu0 %v3955
    %3980 = vmatprep.subr.mxu0 0.0
    %3981 = vmatpush1.msra.mxu0 %v3956
    %3982 = vmatprep.subr.mxu0 0.0
    %3983 = vmatpush1.msra.mxu0 %v3957
    %3984 = vmatprep.subr.mxu0 0.0
    %3985 = vmatpush1.msra.mxu0 %v3958
    %3986 = vmatprep.subr.mxu0 0.0
    %3987 = vmatpush1.msra.mxu0 %v3959
    %3988 = vmatprep.subr.mxu0 0.0
    %3989 = vmatpush1.msra.mxu0 %v3960
    %3990 = vmatprep.subr.mxu0 0.0
    %3991 = vmatpush1.msra.mxu0 %v3961
    %3992 = vmatprep.subr.mxu0 0.0
    %3993 = vmatpush1.msra.mxu0 %v3962
    %3994 = vmatprep.subr.mxu0 0.0
    %3995 = vmatpush1.msra.mxu0 %v3963
    %3996 = vmatprep.subr.mxu0 0.0
    %3997 = vmatpush1.msra.mxu0 %v3964
    %3998 = vmatprep.subr.mxu0 0.0
    %3999 = vmatpush1.msra.mxu0 %v3965
    %4000 = vmatprep.subr.mxu0 0.0
    %4001 = vmatpush1.msra.mxu0 %v3966
    %4002 = vmatprep.subr.mxu0 0.0
    %4003 = vmatpush1.msra.mxu0 %v3967
    %4004 = vmatprep.subr.mxu0 0.0
    %4005 = vmatpush1.msra.mxu0 %v3968
    %4006 = vmatprep.subr.mxu0 0.0
    %4007 = vmatpush1.msra.mxu0 %v3969
    %4008 = vmatprep.subr.mxu0 0.0
    %4009 = vmatpush1.msra.mxu0 %v3970
    %4010 = vmatprep.subr.mxu0 0.0
    %4011 = vmatpush1.msra.mxu0 0.0
    %4012 = vmatprep.subr.mxu0 0.0
    %4013 = vmatpush1.msra.mxu0 0.0
    %4014 = vmatprep.subr.mxu0 0.0
    %4015 = vmatpush1.msra.mxu0 0.0
    %4016 = vmatprep.subr.mxu0 0.0
    %4017 = vmatpush1.msra.mxu0 0.0
    %4018 = vmatprep.subr.mxu0 0.0
    %4019 = vmatpush1.msra.mxu0 0.0
    %4020 = vmatprep.subr.mxu0 0.0
    %4021 = vmatpush1.msra.mxu0 0.0
    %4022 = vmatprep.subr.mxu0 0.0
    %4023 = vmatpush1.msra.mxu0 0.0
    %4024 = vmatprep.subr.mxu0 0.0
    %4025 = vmatpush1.msra.mxu0 0.0
    %4026 = vmatprep.subr.mxu0 0.0
    %4027 = vmatpush1.msra.mxu0 0.0
    %4028 = vmatprep.subr.mxu0 0.0
    %4029 = vmatpush1.msra.mxu0 0.0
    %4030 = vmatprep.subr.mxu0 0.0
    %4031 = vmatpush1.msra.mxu0 0.0
    %4032 = vmatprep.subr.mxu0 0.0
    %4033 = vmatpush1.msra.mxu0 0.0
    %4034 = vmatprep.subr.mxu0 0.0
    %4035 = vmatpush1.msra.mxu0 0.0
    %4036 = vmatprep.subr.mxu0 0.0
    %4037 = vmatpush1.msra.mxu0 0.0
    %4038 = vmatprep.subr.mxu0 0.0
    %4039 = vmatpush1.msra.mxu0 0.0
    %4040 = vmatprep.subr.mxu0 0.0
    %4041 = vmatpush1.msra.mxu0 0.0
    %4042 = vmatprep.mubr.f32.mxu0 0.0
    %4043 = vmatmul.mubr.f32.gmra.mrb[0].mxu0 %v3954
    %v4044 = vpop.f32.mrb[0].mxu0
    %v4045 = vadd.f32 %v3976, %v4044
    %v4046 = vpop.f32.mrb[0].mxu0
    %4047 = vdwg.mxu0
    %v4048 = vmax.f32 %v4045, 0.0
    %4049 = vst [vmem:[#allocation2] sm:$0x3] %v4048
    // Predicated region
    $region86: #{bert_multilabel_cls_forward.1} parent=1 // pred_check
      _
    $region87: #{bert_multilabel_cls_forward.1} parent=1 // pred_check_branch
      %4051 = sbr.rel (0) target = $region89
    $region88: #{bert_multilabel_cls_forward.1} parent=1 // pred_region
      %s4053 = ssub.s32 32, 32
      %4054 = vsyncadd [#allocation3], %s4053
      %s4056 = sshll.u32 [#allocation2], 4
      %s4057 = int_to_ptr.vmem [resolvable:$true] %s4056
      %4059 = dma.vmem_to_hbm [thread:$0]  %s4057, 32, %s21, [#allocation3]
    $region89: #{bert_multilabel_cls_forward.1} parent=1 // pred_fallthru
      _
    // Predicated region
    $region90: #{bert_multilabel_cls_forward.1} parent=1 // pred_check
      _
    $region91: #{bert_multilabel_cls_forward.1} parent=1 // pred_check_branch
      %4061 = sbr.rel (0) target = $region93
    $region92: #{bert_multilabel_cls_forward.1} parent=1 // pred_region
      %4062 = dma.done [#allocation3], 32
    $region93: #{bert_multilabel_cls_forward.1} parent=1 // pred_fallthru
      _
    %4063 = vsyncpa [#allocation3], 1

</llo_original>
